<compile_context>
chip_gen: v7x
topology: tpu7x:2x2x1
jax: 0.10.0
libtpu: 0.0.40
codegen_flags: <defaults>
</compile_context>

<pallas_src>
import functools

import jax
import jax.numpy as jnp
from jax import lax
from jax.experimental import pallas as pl
from jax.experimental.pallas import tpu as pltpu

EPS = 1e-5
LANE = 128


def _pick_tile_rows(h_out, w_out, target_rows=512):
    """Largest row-tile TH dividing h_out whose flattened tile (TH*w_out) is
    lane-dense (multiple of 128) and <= target_rows; falls back to one tile."""
    # TODO(synk): tune target_rows (512-2048) per chip VMEM once measured on HW,
    # and tile along W as well for very wide images.
    if h_out * w_out <= target_rows:
        return h_out
    for th in range(h_out, 0, -1):
        if h_out % th:
            continue
        tb = th * w_out
        if tb <= target_rows and tb % 128 == 0:
            return th
    return h_out


# ---------------------------------------------------------------------------
# Kernel A: fused 3x3 conv (in-VMEM 9-tap im2col panel, one bf16 MXU matmul)
# + per-tile BN partial stats.  One grid step = one (image, row-tile).
# ---------------------------------------------------------------------------
def _conv_stats_kernel(x_ref, w_ref, y_ref, sum_ref, ssq_ref, *, stride, th, w_out):
    # x_ref:   (1, Hp, Wp, nin)      padded NHWC image (constant block index along
    #                                the row-tile axis -> DMA'd once per image)
    # w_ref:   (9*nin, noutp) bf16   (tap, cin)-major K, lane-padded out channels
    # y_ref:   (1, th*w_out, noutp)  conv output tile (lane dense, f32)
    # sum/ssq: (1, 1, 1, noutp)      per-tile BN partial statistics
    nin = x_ref.shape[-1]
    tb = th * w_out
    r = pl.program_id(1)
    row0 = pl.multiple_of(r * (th * stride), th * stride)
    in_rows = stride * (th - 1) + 3                  # padded input rows for this tile
    xr = x_ref[0, pl.ds(row0, in_rows), :, :]        # (in_rows, Wp, nin), VMEM-local

    # Build the 9-tap im2col panel in VMEM/vregs (no HBM blowup); column order is
    # (tap, cin), matching the K layout of w_ref.
    taps = []
    for ki in range(3):
        for kj in range(3):
            # TODO(synk): for stride=2 layers, pre-split columns into even/odd
            # phases (space-to-depth) in the wrapper to avoid strided XLU slices.
            win = lax.slice(
                xr,
                (ki, kj, 0),
                (ki + stride * (th - 1) + 1,
                 kj + stride * (w_out - 1) + 1,
                 nin),
                (stride, stride, 1) if stride > 1 else None)   # (th, w_out, nin)
            taps.append(win.reshape(tb, nin))
    panel = jnp.concatenate(taps, axis=-1).astype(jnp.bfloat16)  # (tb, 9*nin)

    # Single MXU matmul, f32 accumulator (K = 9*nin instead of nin).
    acc = jnp.dot(panel, w_ref[...], preferred_element_type=jnp.float32)

    y_ref[...] = acc[None]
    sum_ref[...] = jnp.sum(acc, axis=0, keepdims=True)[None, None]
    ssq_ref[...] = jnp.sum(acc * acc, axis=0, keepdims=True)[None, None]


# ---------------------------------------------------------------------------
# Kernel B: folded BN affine + ReLU, with the channel unpad + NCHW transpose
# fused in-kernel (idle XLU slots; removes the XLA output transpose pass).
# ---------------------------------------------------------------------------
def _bn_relu_nchw_kernel(y_ref, scale_ref, shift_ref, o_ref, *, nout):
    # y_ref: (1, tb, noutp); scale/shift: (1, noutp); o_ref: (1, nout, tb) NCHW tile
    z = jnp.maximum(y_ref[0] * scale_ref[...] + shift_ref[...], 0.0)   # (tb, noutp)
    zt = jnp.transpose(z)                                              # (noutp, tb)
    o_ref[...] = zt[:nout, :][None]                                    # drop lane pad


# ---------------------------------------------------------------------------
# Public wrapper: NCHW in, NCHW out (matches the PyTorch module).
# ---------------------------------------------------------------------------
@functools.partial(jax.jit, static_argnames=("stride",))
def conv_bn_relu(x, conv_w, conv_b, gamma, beta, *, stride=1):
    """x: (N, nin, H, W) f32 -> (N, nout, H_out, W_out) f32."""
    del conv_b  # exactly cancelled by training-mode BatchNorm mean subtraction
    N, nin, H, W = x.shape
    nout = conv_w.shape[0]
    h_out = (H + 2 - 3) // stride + 1
    w_out = (W + 2 - 3) // stride + 1
    hw = h_out * w_out
    noutp = pl.cdiv(nout, LANE) * LANE               # lane-dense output channels

    th = _pick_tile_rows(h_out, w_out)               # output rows per spatial tile
    tb = th * w_out                                  # flattened tile rows (lane-dense)
    n_row_tiles = h_out // th

    # Input layout plumbing: NCHW -> padded NHWC (single XLA copy).
    # TODO(synk): accept NHWC input end-to-end to remove this pass as well, or
    # manually DMA halo row-tiles (pl.ANY + make_async_copy) for huge images so
    # the whole padded image never has to sit in VMEM.
    x_pad = jnp.pad(jnp.transpose(x, (0, 2, 3, 1)), ((0, 0), (1, 1), (1, 1), (0, 0)))
    Hp, Wp = H + 2, W + 2

    # (nout, nin, 3, 3) OIHW -> (9*nin, noutp): (tap, cin)-major K, channel-padded,
    # bf16 for the MXU.
    w2 = jnp.transpose(conv_w, (2, 3, 1, 0)).reshape(9 * nin, nout)
    w2 = jnp.pad(w2, ((0, 0), (0, noutp - nout))).astype(jnp.bfloat16)

    # ---- VMEM budgets (double-buffered blocks + in-kernel temporaries) --------
    f32b = 4
    blk_x = Hp * Wp * nin * f32b
    blk_w = 9 * nin * noutp * 2
    blk_y = tb * noutp * f32b
    blk_stat = noutp * f32b
    blk_o = nout * tb * f32b
    est_a = 2 * (blk_x + blk_w + blk_y + 2 * blk_stat) + 3 * blk_y + tb * 9 * nin * (f32b + 2)
    est_b = 2 * (blk_y + 2 * blk_stat + blk_o) + 2 * blk_y
    vmem_a = int(min(max(est_a + (4 << 20), 16 << 20), 64 << 20))   # 64 MiB = v7x phys
    vmem_b = int(min(max(est_b + (4 << 20), 16 << 20), 64 << 20))

    # --- Kernel A: conv + fused partial BN stats, tiled over (image, row tile) ---
    y, sums, ssqs = pl.pallas_call(
        functools.partial(_conv_stats_kernel, stride=stride, th=th, w_out=w_out),
        out_shape=(jax.ShapeDtypeStruct((N, hw, noutp), jnp.float32),
                   jax.ShapeDtypeStruct((N, n_row_tiles, 1, noutp), jnp.float32),
                   jax.ShapeDtypeStruct((N, n_row_tiles, 1, noutp), jnp.float32)),
        grid_spec=pltpu.PrefetchScalarGridSpec(
            num_scalar_prefetch=0,
            grid=(N, n_row_tiles),
            in_specs=[
                pl.BlockSpec((1, Hp, Wp, nin), lambda n, r: (n, 0, 0, 0)),
                pl.BlockSpec((9 * nin, noutp), lambda n, r: (0, 0)),
            ],
            out_specs=[
                pl.BlockSpec((1, tb, noutp), lambda n, r: (n, r, 0)),
                pl.BlockSpec((1, 1, 1, noutp), lambda n, r: (n, r, 0, 0)),
                pl.BlockSpec((1, 1, 1, noutp), lambda n, r: (n, r, 0, 0)),
            ]),
        compiler_params=pltpu.CompilerParams(
            dimension_semantics=("parallel", "parallel"),
            vmem_limit_bytes=vmem_a),
    )(x_pad, w2)

    # --- Tiny cross-tile combine (plain JAX) -> batch mean / biased variance ----
    # TODO(synk): switch to a shifted / Welford-style combine if N*hw or the
    # activation magnitudes grow large (E[x^2]-mean^2 cancellation).
    count = float(N * hw)
    total = jnp.sum(sums, axis=(0, 1, 2))            # (noutp,)
    total_sq = jnp.sum(ssqs, axis=(0, 1, 2))
    mean = total / count
    var = jnp.maximum(total_sq / count - mean * mean, 0.0)
    gamma_p = jnp.pad(gamma, (0, noutp - nout))
    beta_p = jnp.pad(beta, (0, noutp - nout))
    scale = (gamma_p * lax.rsqrt(var + EPS)).reshape(1, noutp)
    shift = (beta_p - mean * gamma_p * lax.rsqrt(var + EPS)).reshape(1, noutp)

    # --- Kernel B: BN affine + ReLU, NCHW tiles written directly ---------------
    out = pl.pallas_call(
        functools.partial(_bn_relu_nchw_kernel, nout=nout),
        out_shape=jax.ShapeDtypeStruct((N, nout, hw), jnp.float32),
        grid_spec=pltpu.PrefetchScalarGridSpec(
            num_scalar_prefetch=0,
            grid=(N, n_row_tiles),
            in_specs=[
                pl.BlockSpec((1, tb, noutp), lambda n, r: (n, r, 0)),
                pl.BlockSpec((1, noutp), lambda n, r: (0, 0)),
                pl.BlockSpec((1, noutp), lambda n, r: (0, 0)),
            ],
            out_specs=pl.BlockSpec((1, nout, tb), lambda n, r: (n, 0, r))),
        compiler_params=pltpu.CompilerParams(
            dimension_semantics=("parallel", "parallel"),
            vmem_limit_bytes=vmem_b),
    )(y, scale, shift)

    # (N, nout, hw) -> (N, nout, h_out, w_out) is a free (metadata-only) reshape.
    return out.reshape(N, nout, h_out, w_out)


# ---------------------------------------------------------------------------
# Pure-JAX reference for verification.
# ---------------------------------------------------------------------------
def _reference(x, conv_w, conv_b, gamma, beta, stride, mxu_dtype=None):
    if mxu_dtype is not None:
        # Match the kernel's MXU operand rounding (bf16 operands, f32 accumulate).
        xc = x.astype(mxu_dtype).astype(jnp.float32)
        wc = conv_w.astype(mxu_dtype).astype(jnp.float32)
        prec = None
    else:
        xc, wc = x, conv_w
        prec = lax.Precision.HIGHEST
    y = lax.conv_general_dilated(
        xc, wc, window_strides=(stride, stride),
        padding=((1, 1), (1, 1)),
        dimension_numbers=("NCHW", "OIHW", "NCHW"),
        precision=prec,
    ) + conv_b[None, :, None, None]
    mean = jnp.mean(y, axis=(0, 2, 3), keepdims=True)
    var = jnp.mean((y - mean) ** 2, axis=(0, 2, 3), keepdims=True)
    yh = (y - mean) * lax.rsqrt(var + EPS)
    yh = yh * gamma[None, :, None, None] + beta[None, :, None, None]
    return jnp.maximum(yh, 0.0)


if __name__ == "__main__":
    nin, nout, stride = 4, 8, 1
    N, H, W = 2, 32, 32      # CIFAR-sized spatial dims -> exercises 2 row tiles/image

    key = jax.random.PRNGKey(0)
    k_x, k_w, k_b, k_g, k_be = jax.random.split(key, 5)

    x = jax.random.normal(k_x, (N, nin, H, W), dtype=jnp.float32)
    conv_w = jax.random.normal(k_w, (nout, nin, 3, 3), dtype=jnp.float32) * 0.1
    conv_b = jax.random.normal(k_b, (nout,), dtype=jnp.float32) * 0.1
    gamma = 1.0 + 0.1 * jax.random.normal(k_g, (nout,), dtype=jnp.float32)
    beta = 0.1 * jax.random.normal(k_be, (nout,), dtype=jnp.float32)

    out = conv_bn_relu(x, conv_w, conv_b, gamma, beta, stride=stride)
    out = jax.block_until_ready(out)
    assert out.shape == (N, nout, H, W)

    # Tight check vs. a reference that uses the same bf16 MXU operand rounding.
    ref_mxu = _reference(x, conv_w, conv_b, gamma, beta, stride, mxu_dtype=jnp.bfloat16)
    assert jnp.allclose(out, ref_mxu, atol=5e-3, rtol=5e-3), \
        f"max abs err (bf16-matched ref) = {jnp.max(jnp.abs(out - ref_mxu))}"

    # Loose check vs. the pure-f32 reference (tolerance reflects bf16 MXU operands).
    ref_f32 = _reference(x, conv_w, conv_b, gamma, beta, stride)
    assert jnp.allclose(out, ref_f32, atol=1e-1, rtol=1e-1), \
        f"max abs err (f32 ref) = {jnp.max(jnp.abs(out - ref_f32))}"

    print("KERNEL_OK")
</pallas_src>

<mosaic_0001>
module attributes {stable_mosaic.version = 11 : i64} {
  func.func @_conv_stats_kernel(%arg0: i32, %arg1: i32, %arg2: memref<1x34x34x4xf32, #tpu.memory_space<vmem>>, %arg3: memref<36x128xbf16, #tpu.memory_space<vmem>>, %arg4: memref<1x512x128xf32, #tpu.memory_space<vmem>>, %arg5: memref<1x1x1x128xf32, #tpu.memory_space<vmem>>, %arg6: memref<1x1x1x128xf32, #tpu.memory_space<vmem>>) attributes {dimension_semantics = [#tpu.dimension_semantics<parallel>, #tpu.dimension_semantics<parallel>], iteration_bounds = array<i64: 2, 2>, scalar_prefetch = 0 : i64, scratch_operands = 0 : i64, tpu.core_type = #tpu.core_type<tc>, window_params = [{transform_indices = @transform_0, window_bounds = array<i64: 1, 34, 34, 4>}, {pipeline_mode = #tpu.pipeline_mode<synchronous>, transform_indices = @transform_1, window_bounds = array<i64: 36, 128>}, {transform_indices = @transform_2, window_bounds = array<i64: 1, 512, 128>}, {transform_indices = @transform_3, window_bounds = array<i64: 1, 1, 1, 128>}, {transform_indices = @transform_4, window_bounds = array<i64: 1, 1, 1, 128>}]} {
    %c16_i32 = arith.constant 16 : i32
    %0 = arith.muli %arg1, %c16_i32 : i32
    %1 = tpu.assume_multiple %0, 16 : i32
    %c0 = arith.constant 0 : index
    %2 = arith.index_cast %1 : i32 to index
    %c0_0 = arith.constant 0 : index
    %c0_1 = arith.constant 0 : index
    %3 = vector.load %arg2[%c0, %2, %c0_0, %c0_1] : memref<1x34x34x4xf32, #tpu.memory_space<vmem>>, vector<1x18x34x4xf32>
    %4 = vector.shape_cast %3 : vector<1x18x34x4xf32> to vector<18x34x4xf32>
    %5 = vector.extract_strided_slice %4 {offsets = [0, 0, 0], sizes = [16, 32, 4], strides = [1, 1, 1]} : vector<18x34x4xf32> to vector<16x32x4xf32>
    %6 = vector.shape_cast %5 : vector<16x32x4xf32> to vector<512x4xf32>
    %7 = vector.extract_strided_slice %4 {offsets = [0, 1, 0], sizes = [16, 32, 4], strides = [1, 1, 1]} : vector<18x34x4xf32> to vector<16x32x4xf32>
    %8 = vector.shape_cast %7 : vector<16x32x4xf32> to vector<512x4xf32>
    %9 = vector.extract_strided_slice %4 {offsets = [0, 2, 0], sizes = [16, 32, 4], strides = [1, 1, 1]} : vector<18x34x4xf32> to vector<16x32x4xf32>
    %10 = vector.shape_cast %9 : vector<16x32x4xf32> to vector<512x4xf32>
    %11 = vector.extract_strided_slice %4 {offsets = [1, 0, 0], sizes = [16, 32, 4], strides = [1, 1, 1]} : vector<18x34x4xf32> to vector<16x32x4xf32>
    %12 = vector.shape_cast %11 : vector<16x32x4xf32> to vector<512x4xf32>
    %13 = vector.extract_strided_slice %4 {offsets = [1, 1, 0], sizes = [16, 32, 4], strides = [1, 1, 1]} : vector<18x34x4xf32> to vector<16x32x4xf32>
    %14 = vector.shape_cast %13 : vector<16x32x4xf32> to vector<512x4xf32>
    %15 = vector.extract_strided_slice %4 {offsets = [1, 2, 0], sizes = [16, 32, 4], strides = [1, 1, 1]} : vector<18x34x4xf32> to vector<16x32x4xf32>
    %16 = vector.shape_cast %15 : vector<16x32x4xf32> to vector<512x4xf32>
    %17 = vector.extract_strided_slice %4 {offsets = [2, 0, 0], sizes = [16, 32, 4], strides = [1, 1, 1]} : vector<18x34x4xf32> to vector<16x32x4xf32>
    %18 = vector.shape_cast %17 : vector<16x32x4xf32> to vector<512x4xf32>
    %19 = vector.extract_strided_slice %4 {offsets = [2, 1, 0], sizes = [16, 32, 4], strides = [1, 1, 1]} : vector<18x34x4xf32> to vector<16x32x4xf32>
    %20 = vector.shape_cast %19 : vector<16x32x4xf32> to vector<512x4xf32>
    %21 = vector.extract_strided_slice %4 {offsets = [2, 2, 0], sizes = [16, 32, 4], strides = [1, 1, 1]} : vector<18x34x4xf32> to vector<16x32x4xf32>
    %22 = vector.shape_cast %21 : vector<16x32x4xf32> to vector<512x4xf32>
    %23 = tpu.concatenate %6, %8, %10, %12, %14, %16, %18, %20, %22 in 1 : vector<512x4xf32>, vector<512x4xf32>, vector<512x4xf32>, vector<512x4xf32>, vector<512x4xf32>, vector<512x4xf32>, vector<512x4xf32>, vector<512x4xf32>, vector<512x4xf32> -> vector<512x36xf32>
    %24 = arith.truncf %23 : vector<512x36xf32> to vector<512x36xbf16>
    %c0_2 = arith.constant 0 : index
    %c0_3 = arith.constant 0 : index
    %25 = vector.load %arg3[%c0_2, %c0_3] : memref<36x128xbf16, #tpu.memory_space<vmem>>, vector<36x128xbf16>
    %cst = arith.constant dense<0.000000e+00> : vector<512x128xf32>
    %26 = tpu.matmul %24, %25, %cst {dimension_numbers = #tpu.dot_dimension_numbers<[1], [0], [0], [1], [0, 0, 1, 1], [], []>} : vector<512x36xbf16>, vector<36x128xbf16>, vector<512x128xf32> -> vector<512x128xf32>
    %27 = vector.shape_cast %26 : vector<512x128xf32> to vector<1x512x128xf32>
    %c0_4 = arith.constant 0 : index
    %c0_5 = arith.constant 0 : index
    %c0_6 = arith.constant 0 : index
    %28 = vector.load %arg4[%c0_4, %c0_5, %c0_6] : memref<1x512x128xf32, #tpu.memory_space<vmem>>, vector<1x512x128xf32>
    tpu.vector_store %arg4[%c0_4, %c0_5, %c0_6], %27 {strides = array<i32>} : memref<1x512x128xf32, #tpu.memory_space<vmem>>, vector<1x512x128xf32>,
    %cst_7 = arith.constant dense<0.000000e+00> : vector<128xf32>
    %29 = vector.multi_reduction <add>, %26, %cst_7 [0] : vector<512x128xf32> to vector<128xf32>
    %30 = vector.shape_cast %29 : vector<128xf32> to vector<1x128xf32>
    %31 = vector.shape_cast %30 : vector<1x128xf32> to vector<1x1x1x128xf32>
    %c0_8 = arith.constant 0 : index
    %c0_9 = arith.constant 0 : index
    %c0_10 = arith.constant 0 : index
    %c0_11 = arith.constant 0 : index
    %32 = vector.load %arg5[%c0_8, %c0_9, %c0_10, %c0_11] : memref<1x1x1x128xf32, #tpu.memory_space<vmem>>, vector<1x1x1x128xf32>
    tpu.vector_store %arg5[%c0_8, %c0_9, %c0_10, %c0_11], %31 {strides = array<i32>} : memref<1x1x1x128xf32, #tpu.memory_space<vmem>>, vector<1x1x1x128xf32>,
    %33 = arith.mulf %26, %26 : vector<512x128xf32>
    %cst_12 = arith.constant dense<0.000000e+00> : vector<128xf32>
    %34 = vector.multi_reduction <add>, %33, %cst_12 [0] : vector<512x128xf32> to vector<128xf32>
    %35 = vector.shape_cast %34 : vector<128xf32> to vector<1x128xf32>
    %36 = vector.shape_cast %35 : vector<1x128xf32> to vector<1x1x1x128xf32>
    %c0_13 = arith.constant 0 : index
    %c0_14 = arith.constant 0 : index
    %c0_15 = arith.constant 0 : index
    %c0_16 = arith.constant 0 : index
    %37 = vector.load %arg6[%c0_13, %c0_14, %c0_15, %c0_16] : memref<1x1x1x128xf32, #tpu.memory_space<vmem>>, vector<1x1x1x128xf32>
    tpu.vector_store %arg6[%c0_13, %c0_14, %c0_15, %c0_16], %36 {strides = array<i32>} : memref<1x1x1x128xf32, #tpu.memory_space<vmem>>, vector<1x1x1x128xf32>,
    return
  }
  func.func @transform_0(%arg0: i32, %arg1: i32) -> (i32, i32, i32, i32) {
    %c0_i32 = arith.constant 0 : i32
    %c0_i32_0 = arith.constant 0 : i32
    %c0_i32_1 = arith.constant 0 : i32
    %c0_i32_2 = arith.constant 0 : i32
    return %arg0, %c0_i32, %c0_i32_0, %c0_i32_1 : i32, i32, i32, i32
  }
  func.func @transform_1(%arg0: i32, %arg1: i32) -> (i32, i32) {
    %c0_i32 = arith.constant 0 : i32
    %c0_i32_0 = arith.constant 0 : i32
    %c0_i32_1 = arith.constant 0 : i32
    return %c0_i32, %c0_i32_0 : i32, i32
  }
  func.func @transform_2(%arg0: i32, %arg1: i32) -> (i32, i32, i32) {
    %c0_i32 = arith.constant 0 : i32
    %c0_i32_0 = arith.constant 0 : i32
    return %arg0, %arg1, %c0_i32 : i32, i32, i32
  }
  func.func @transform_3(%arg0: i32, %arg1: i32) -> (i32, i32, i32, i32) {
    %c0_i32 = arith.constant 0 : i32
    %c0_i32_0 = arith.constant 0 : i32
    %c0_i32_1 = arith.constant 0 : i32
    return %arg0, %arg1, %c0_i32, %c0_i32_0 : i32, i32, i32, i32
  }
  func.func @transform_4(%arg0: i32, %arg1: i32) -> (i32, i32, i32, i32) {
    %c0_i32 = arith.constant 0 : i32
    %c0_i32_0 = arith.constant 0 : i32
    %c0_i32_1 = arith.constant 0 : i32
    return %arg0, %arg1, %c0_i32, %c0_i32_0 : i32, i32, i32, i32
  }
}

module attributes {stable_mosaic.version = 11 : i64} {
  func.func @_bn_relu_nchw_kernel(%arg0: i32, %arg1: i32, %arg2: memref<1x512x128xf32, #tpu.memory_space<vmem>>, %arg3: memref<1x128xf32, #tpu.memory_space<vmem>>, %arg4: memref<1x128xf32, #tpu.memory_space<vmem>>, %arg5: memref<1x8x512xf32, #tpu.memory_space<vmem>>) attributes {dimension_semantics = [#tpu.dimension_semantics<parallel>, #tpu.dimension_semantics<parallel>], iteration_bounds = array<i64: 2, 2>, scalar_prefetch = 0 : i64, scratch_operands = 0 : i64, tpu.core_type = #tpu.core_type<tc>, window_params = [{transform_indices = @transform_0, window_bounds = array<i64: 1, 512, 128>}, {pipeline_mode = #tpu.pipeline_mode<synchronous>, transform_indices = @transform_1, window_bounds = array<i64: 1, 128>}, {pipeline_mode = #tpu.pipeline_mode<synchronous>, transform_indices = @transform_2, window_bounds = array<i64: 1, 128>}, {transform_indices = @transform_3, window_bounds = array<i64: 1, 8, 512>}]} {
    %c0 = arith.constant 0 : index
    %c0_0 = arith.constant 0 : index
    %c0_1 = arith.constant 0 : index
    %0 = vector.load %arg2[%c0, %c0_0, %c0_1] : memref<1x512x128xf32, #tpu.memory_space<vmem>>, vector<1x512x128xf32>
    %1 = vector.shape_cast %0 : vector<1x512x128xf32> to vector<512x128xf32>
    %c0_2 = arith.constant 0 : index
    %c0_3 = arith.constant 0 : index
    %2 = vector.load %arg3[%c0_2, %c0_3] : memref<1x128xf32, #tpu.memory_space<vmem>>, vector<1x128xf32>
    %3 = vector.broadcast %2 : vector<1x128xf32> to vector<512x128xf32>
    %4 = arith.mulf %1, %3 : vector<512x128xf32>
    %c0_4 = arith.constant 0 : index
    %c0_5 = arith.constant 0 : index
    %5 = vector.load %arg4[%c0_4, %c0_5] : memref<1x128xf32, #tpu.memory_space<vmem>>, vector<1x128xf32>
    %6 = vector.broadcast %5 : vector<1x128xf32> to vector<512x128xf32>
    %7 = arith.addf %4, %6 : vector<512x128xf32>
    %cst = arith.constant 0.000000e+00 : f32
    %8 = vector.broadcast %cst : f32 to vector<512x128xf32>
    %9 = arith.maximumf %7, %8 : vector<512x128xf32>
    %10 = tpu.transpose %9, [1, 0] : vector<512x128xf32> -> vector<128x512xf32>
    %11 = vector.extract_strided_slice %10 {offsets = [0, 0], sizes = [8, 512], strides = [1, 1]} : vector<128x512xf32> to vector<8x512xf32>
    %12 = vector.shape_cast %11 : vector<8x512xf32> to vector<1x8x512xf32>
    %c0_6 = arith.constant 0 : index
    %c0_7 = arith.constant 0 : index
    %c0_8 = arith.constant 0 : index
    %13 = vector.load %arg5[%c0_6, %c0_7, %c0_8] : memref<1x8x512xf32, #tpu.memory_space<vmem>>, vector<1x8x512xf32>
    tpu.vector_store %arg5[%c0_6, %c0_7, %c0_8], %12 {strides = array<i32>} : memref<1x8x512xf32, #tpu.memory_space<vmem>>, vector<1x8x512xf32>,
    return
  }
  func.func @transform_0(%arg0: i32, %arg1: i32) -> (i32, i32, i32) {
    %c0_i32 = arith.constant 0 : i32
    %c0_i32_0 = arith.constant 0 : i32
    return %arg0, %arg1, %c0_i32 : i32, i32, i32
  }
  func.func @transform_1(%arg0: i32, %arg1: i32) -> (i32, i32) {
    %c0_i32 = arith.constant 0 : i32
    %c0_i32_0 = arith.constant 0 : i32
    %c0_i32_1 = arith.constant 0 : i32
    return %c0_i32, %c0_i32_0 : i32, i32
  }
  func.func @transform_2(%arg0: i32, %arg1: i32) -> (i32, i32) {
    %c0_i32 = arith.constant 0 : i32
    %c0_i32_0 = arith.constant 0 : i32
    %c0_i32_1 = arith.constant 0 : i32
    return %c0_i32, %c0_i32_0 : i32, i32
  }
  func.func @transform_3(%arg0: i32, %arg1: i32) -> (i32, i32, i32) {
    %c0_i32 = arith.constant 0 : i32
    %c0_i32_0 = arith.constant 0 : i32
    return %arg0, %c0_i32, %arg1 : i32, i32, i32
  }
}

</mosaic_0001>

<llo_original>
// kernel: conv_bn_relu.3
$region0: #{conv_bn_relu.3}
  #allocation0 [shape = 'u32[]', space=smem, size = 0x4, offset = 0x4, fixed_abs, tag = 'smem constant byte address 0x4 - core index']
  #allocation1 [shape = 'u32[144,128]{1,0:T(1,128)}', space=vmem, size = 0x12000, scoped, tag = 'internal scratch']
  %s0 = inlined_call_operand.vmem [shape: f32[2,1024,128], index: 0, kind: input, shape index: {}]
  %s1 = inlined_call_operand.vmem [shape: f32[1,128], index: 1, kind: input, shape index: {}]
  %s2 = inlined_call_operand.vmem [shape: f32[1,128], index: 2, kind: input, shape index: {}]
  %s3 = inlined_call_operand.vmem [shape: f32[2,8,1024], index: 3, kind: output, shape index: {}]
  %s4 = sld [smem:[#allocation0]]
  $region45: #{conv_bn_relu.3} parent=0
    _
  %s6 = ssub.s32 1, %s4
  %s7 = scalar_select 0, %s6, %s4
  loop: start=0, step=1, limit=6
  $region2: #{conv_bn_relu.3} parent=0 // loop_pre_header
    _
  $region3: #{conv_bn_relu.3} parent=0 // loop_header
    %s9 = sphi 0, %s13
    %p10 = scmp.ge.s32.totalorder %s9, 6
    %s16 = sphi 0, %s28
    %s17 = sphi 0, %s24
    %s18 = sphi 0, %s16
    %s19 = sphi 0, %s17
    %s20 = sphi 0, %s18
    %s21 = sphi 0, %s19
    %s33 = sphi 0, %s35
    %s36 = sphi 0, %s33
    %s37 = sphi 0, %s36
    %s53 = sphi 0, %s37
    %s57 = sphi 0, %s57
    %s59 = sphi 0, %s57
    %s60 = sphi 0, %s59
    %s74 = sphi 0, %s60
    %s78 = sphi 0, %s78
    %s80 = sphi 0, %s78
    %s81 = sphi 0, %s80
    %s95 = sphi 0, %s81
    %s103 = sphi 0, %s105
    %s106 = sphi 0, %s103
    %s107 = sphi 0, %s106
    %s123 = sphi 0, %s107
  $region4: #{conv_bn_relu.3} parent=0 // loop_header_branch
    %12 = sbr.rel (%p10) target = $region8
  $region5: #{conv_bn_relu.3} parent=0 // loop_body
    %s14 = ssub.s32 %s9, 1
    %s15 = ssub.s32 %s9, 2
    %s22 = sadd.s32 1, %s17
    %p23 = scmp.ge.s32.totalorder %s22, 2
    %s24 = scalar_select %p23, 0, %s22
    %s25 = sadd.s32 1, %s16
    %s26 = scalar_select %p23, %s25, %s16
    %p27 = scmp.ge.s32.totalorder %s26, 2
    %s28 = scalar_select %p27, 0, %s26
    %s29 = ssub.s32 %s16, %s28
    %s30 = ssub.s32 %s17, %s24
    %s31 = sor.u32 %s29, %s30
    %p32 = scmp.eq.s32.totalorder %s31, 0
    %s34 = sadd.s32 %s33, 1
    %s35 = scalar_select %p32, %s33, %s34
    %p38 = pneg %p32
    %p39 = scmp.eq.s32.totalorder %s9, 3
    %p40 = por %p38, %p39
    %p41 = scmp.ne.s32.totalorder %s33, %s36
    %p42 = scmp.eq.s32.totalorder %s9, 0
    %p43 = por %p41, %p42
    %p44 = scmp.ne.s32.totalorder %s33, %s36
    %p45 = scmp.eq.s32.totalorder %s14, 3
    %p46 = por %p44, %p45
    %p47 = scmp.ne.s32.totalorder %s36, %s37
    %p48 = scmp.eq.s32.totalorder %s14, 0
    %p49 = por %p47, %p48
    %p50 = scmp.ne.s32.totalorder %s36, %s37
    %p51 = scmp.eq.s32.totalorder %s15, 3
    %p52 = por %p50, %p51
    %p54 = scmp.ne.s32.totalorder %s37, %s53
    %p55 = scmp.eq.s32.totalorder %s15, 0
    %p56 = por %p54, %p55
    %s58 = sadd.s32 %s57, 1
    %p61 = scmp.eq.s32.totalorder %s9, 3
    %p62 = scmp.ne.s32.totalorder %s57, %s59
    %p63 = scmp.eq.s32.totalorder %s9, 0
    %p64 = por %p62, %p63
    %p65 = scmp.ne.s32.totalorder %s57, %s59
    %p66 = scmp.eq.s32.totalorder %s14, 3
    %p67 = por %p65, %p66
    %p68 = scmp.ne.s32.totalorder %s59, %s60
    %p69 = scmp.eq.s32.totalorder %s14, 0
    %p70 = por %p68, %p69
    %p71 = scmp.ne.s32.totalorder %s59, %s60
    %p72 = scmp.eq.s32.totalorder %s15, 3
    %p73 = por %p71, %p72
    %p75 = scmp.ne.s32.totalorder %s60, %s74
    %p76 = scmp.eq.s32.totalorder %s15, 0
    %p77 = por %p75, %p76
    %s79 = sadd.s32 %s78, 1
    %p82 = scmp.eq.s32.totalorder %s9, 3
    %p83 = scmp.ne.s32.totalorder %s78, %s80
    %p84 = scmp.eq.s32.totalorder %s9, 0
    %p85 = por %p83, %p84
    %p86 = scmp.ne.s32.totalorder %s78, %s80
    %p87 = scmp.eq.s32.totalorder %s14, 3
    %p88 = por %p86, %p87
    %p89 = scmp.ne.s32.totalorder %s80, %s81
    %p90 = scmp.eq.s32.totalorder %s14, 0
    %p91 = por %p89, %p90
    %p92 = scmp.ne.s32.totalorder %s80, %s81
    %p93 = scmp.eq.s32.totalorder %s15, 3
    %p94 = por %p92, %p93
    %p96 = scmp.ne.s32.totalorder %s81, %s95
    %p97 = scmp.eq.s32.totalorder %s15, 0
    %p98 = por %p96, %p97
    %s99 = ssub.s32 %s16, %s28
    %s100 = ssub.s32 %s17, %s24
    %s101 = sor.u32 %s99, %s100
    %p102 = scmp.eq.s32.totalorder %s101, 0
    %s104 = sadd.s32 %s103, 1
    %s105 = scalar_select %p102, %s103, %s104
    %p108 = pneg %p102
    %p109 = scmp.eq.s32.totalorder %s9, 3
    %p110 = por %p108, %p109
    %p111 = scmp.ne.s32.totalorder %s103, %s106
    %p112 = scmp.eq.s32.totalorder %s9, 0
    %p113 = por %p111, %p112
    %p114 = scmp.ne.s32.totalorder %s103, %s106
    %p115 = scmp.eq.s32.totalorder %s14, 3
    %p116 = por %p114, %p115
    %p117 = scmp.ne.s32.totalorder %s106, %s107
    %p118 = scmp.eq.s32.totalorder %s14, 0
    %p119 = por %p117, %p118
    %p120 = scmp.ne.s32.totalorder %s106, %s107
    %p121 = scmp.eq.s32.totalorder %s15, 3
    %p122 = por %p120, %p121
    %p124 = scmp.ne.s32.totalorder %s107, %s123
    %p125 = scmp.eq.s32.totalorder %s15, 0
    %p126 = por %p124, %p125
    %p127 = scmp.le.s32.totalorder 1, %s9
    %p128 = scmp.lt.s32.totalorder %s9, 5
    %p129 = pnand %p127, %p128
    %p130 = pneg %p129
    // Predicated region
    $region9: #{conv_bn_relu.3} parent=5 // pred_check
      _
    $region10: #{conv_bn_relu.3} parent=5 // pred_check_branch
      %132 = sbr.rel (%p129) target = $region12
    $region11: #{conv_bn_relu.3} parent=5 // pred_region
      %s133 = ssub.s32 %s9, 1
      // Predicated region
      $region13: #{conv_bn_relu.3} parent=11 // pred_check
        %p134 = pneg %p70
      $region14: #{conv_bn_relu.3} parent=11 // pred_check_branch
        %136 = sbr.rel (%p134) target = $region16
      $region15: #{conv_bn_relu.3} parent=11 // pred_region
        _
      $region16: #{conv_bn_relu.3} parent=11 // pred_fallthru
        _
      // Predicated region
      $region17: #{conv_bn_relu.3} parent=11 // pred_check
        %p137 = pneg %p91
      $region18: #{conv_bn_relu.3} parent=11 // pred_check_branch
        %139 = sbr.rel (%p137) target = $region20
      $region19: #{conv_bn_relu.3} parent=11 // pred_region
        _
      $region20: #{conv_bn_relu.3} parent=11 // pred_fallthru
        _
    $region12: #{conv_bn_relu.3} parent=5 // pred_fallthru
      _
    %p140 = scmp.lt.s32.totalorder %s9, 4
    // Predicated region
    $region21: #{conv_bn_relu.3} parent=5 // pred_check
      %p141 = pneg %p140
    $region22: #{conv_bn_relu.3} parent=5 // pred_check_branch
      %143 = sbr.rel (%p141) target = $region24
    $region23: #{conv_bn_relu.3} parent=5 // pred_region
      // Predicated region
      $region25: #{conv_bn_relu.3} parent=23 // pred_check
        %p144 = pneg %p43
      $region26: #{conv_bn_relu.3} parent=23 // pred_check_branch
        %146 = sbr.rel (%p144) target = $region28
      $region27: #{conv_bn_relu.3} parent=23 // pred_region
        %s147 = smul.u32 64, %s17
        %p148 = scmp.lt.s32.totalorder %s16, 1
        %s149 = scalar_select %p148, %s16, 1
        %p150 = scmp.lt.s32.totalorder %s147, 127
        %s151 = scalar_select %p150, %s147, 127
        %s152 = smul.addr %s149, 128
        %s153 = sadd.s32 %s151, %s152
        %s154 = smul.addr %s153, 8
        %s155 = scalar_lea.vmem %s0, %s154
        %s156 = smul.u32 64, %s17
      $region28: #{conv_bn_relu.3} parent=23 // pred_fallthru
        _
    $region24: #{conv_bn_relu.3} parent=5 // pred_fallthru
      _
    %p157 = scmp.le.s32.totalorder 1, %s9
    %p158 = scmp.lt.s32.totalorder %s9, 5
    %p159 = pnand %p157, %p158
    %p160 = pneg %p159
    // Predicated region
    $region29: #{conv_bn_relu.3} parent=5 // pred_check
      _
    $region30: #{conv_bn_relu.3} parent=5 // pred_check_branch
      %162 = sbr.rel (%p159) target = $region32
    $region31: #{conv_bn_relu.3} parent=5 // pred_region
      %s163 = ssub.s32 %s9, 1
      %s164 = smul.u32 64, %s19
      %p165 = scmp.lt.s32.totalorder %s18, 1
      %s166 = scalar_select %p165, %s18, 1
      %p167 = scmp.lt.s32.totalorder %s164, 127
      %s168 = scalar_select %p167, %s164, 127
      %s169 = smul.addr %s166, 128
      %s170 = sadd.s32 %s168, %s169
      %s171 = smul.addr %s170, 8
      %s172 = scalar_lea.vmem %s0, %s171
      %p173 = pneg %p49
      %p174 = pneg %p46
      %p175 = pneg %p70
      %p176 = pneg %p67
      %p177 = pneg %p91
      %p178 = pneg %p88
      %p179 = pneg %p119
      %p180 = pneg %p116
      %s181 = smul.u32 4, %s19
      %p182 = scmp.lt.s32.totalorder %s18, 1
      %s183 = scalar_select %p182, %s18, 1
      %p184 = scmp.lt.s32.totalorder %s181, 7
      %s185 = scalar_select %p184, %s181, 7
      %s186 = smul.addr %s183, 8
      %s187 = sadd.s32 %s185, %s186
      %s188 = smul.addr %s187, 8
      %s189 = scalar_lea.vmem %s3, %s188
      %s190 = smul.u32 64, %s19
      %p191 = scmp.lt.s32.totalorder %s18, 1
      %s192 = scalar_select %p191, %s18, 1
      %p193 = scmp.lt.s32.totalorder %s190, 127
      %s194 = scalar_select %p193, %s190, 127
      %s195 = smul.addr %s192, 128
      %s196 = sadd.s32 %s194, %s195
      %s197 = smul.addr %s196, 8
      %s198 = scalar_lea.vmem %s0, %s197
      %s199 = smul.u32 64, %s19
      %s200 = smul.u32 4, %s19
      %p201 = scmp.lt.s32.totalorder %s18, 1
      %s202 = scalar_select %p201, %s18, 1
      %p203 = scmp.lt.s32.totalorder %s200, 7
      %s204 = scalar_select %p203, %s200, 7
      %s205 = smul.addr %s202, 8
      %s206 = sadd.s32 %s204, %s205
      %s207 = smul.addr %s206, 8
      %s208 = scalar_lea.vmem %s3, %s207
      %s209 = smul.u32 4, %s19
      %v210 = vld [vmem:[%s198] sm:$0xff]
      %v211 = vld [vmem:[%s198 + $0x8] sm:$0xff]
      %v212 = vld [vmem:[%s198 + $0x10] sm:$0xff]
      %v213 = vld [vmem:[%s198 + $0x18] sm:$0xff]
      %v214 = vld [vmem:[%s198 + $0x20] sm:$0xff]
      %v215 = vld [vmem:[%s198 + $0x28] sm:$0xff]
      %v216 = vld [vmem:[%s198 + $0x30] sm:$0xff]
      %v217 = vld [vmem:[%s198 + $0x38] sm:$0xff]
      %v218 = vld [vmem:[%s198 + $0x40] sm:$0xff]
      %v219 = vld [vmem:[%s198 + $0x48] sm:$0xff]
      %v220 = vld [vmem:[%s198 + $0x50] sm:$0xff]
      %v221 = vld [vmem:[%s198 + $0x58] sm:$0xff]
      %v222 = vld [vmem:[%s198 + $0x60] sm:$0xff]
      %v223 = vld [vmem:[%s198 + $0x68] sm:$0xff]
      %v224 = vld [vmem:[%s198 + $0x70] sm:$0xff]
      %v225 = vld [vmem:[%s198 + $0x78] sm:$0xff]
      %v226 = vld [vmem:[%s198 + $0x80] sm:$0xff]
      %v227 = vld [vmem:[%s198 + $0x88] sm:$0xff]
      %v228 = vld [vmem:[%s198 + $0x90] sm:$0xff]
      %v229 = vld [vmem:[%s198 + $0x98] sm:$0xff]
      %v230 = vld [vmem:[%s198 + $0xa0] sm:$0xff]
      %v231 = vld [vmem:[%s198 + $0xa8] sm:$0xff]
      %v232 = vld [vmem:[%s198 + $0xb0] sm:$0xff]
      %v233 = vld [vmem:[%s198 + $0xb8] sm:$0xff]
      %v234 = vld [vmem:[%s198 + $0xc0] sm:$0xff]
      %v235 = vld [vmem:[%s198 + $0xc8] sm:$0xff]
      %v236 = vld [vmem:[%s198 + $0xd0] sm:$0xff]
      %v237 = vld [vmem:[%s198 + $0xd8] sm:$0xff]
      %v238 = vld [vmem:[%s198 + $0xe0] sm:$0xff]
      %v239 = vld [vmem:[%s198 + $0xe8] sm:$0xff]
      %v240 = vld [vmem:[%s198 + $0xf0] sm:$0xff]
      %v241 = vld [vmem:[%s198 + $0xf8] sm:$0xff]
      %v242 = vld [vmem:[%s198 + $0x100] sm:$0xff]
      %v243 = vld [vmem:[%s198 + $0x108] sm:$0xff]
      %v244 = vld [vmem:[%s198 + $0x110] sm:$0xff]
      %v245 = vld [vmem:[%s198 + $0x118] sm:$0xff]
      %v246 = vld [vmem:[%s198 + $0x120] sm:$0xff]
      %v247 = vld [vmem:[%s198 + $0x128] sm:$0xff]
      %v248 = vld [vmem:[%s198 + $0x130] sm:$0xff]
      %v249 = vld [vmem:[%s198 + $0x138] sm:$0xff]
      %v250 = vld [vmem:[%s198 + $0x140] sm:$0xff]
      %v251 = vld [vmem:[%s198 + $0x148] sm:$0xff]
      %v252 = vld [vmem:[%s198 + $0x150] sm:$0xff]
      %v253 = vld [vmem:[%s198 + $0x158] sm:$0xff]
      %v254 = vld [vmem:[%s198 + $0x160] sm:$0xff]
      %v255 = vld [vmem:[%s198 + $0x168] sm:$0xff]
      %v256 = vld [vmem:[%s198 + $0x170] sm:$0xff]
      %v257 = vld [vmem:[%s198 + $0x178] sm:$0xff]
      %v258 = vld [vmem:[%s198 + $0x180] sm:$0xff]
      %v259 = vld [vmem:[%s198 + $0x188] sm:$0xff]
      %v260 = vld [vmem:[%s198 + $0x190] sm:$0xff]
      %v261 = vld [vmem:[%s198 + $0x198] sm:$0xff]
      %v262 = vld [vmem:[%s198 + $0x1a0] sm:$0xff]
      %v263 = vld [vmem:[%s198 + $0x1a8] sm:$0xff]
      %v264 = vld [vmem:[%s198 + $0x1b0] sm:$0xff]
      %v265 = vld [vmem:[%s198 + $0x1b8] sm:$0xff]
      %v266 = vld [vmem:[%s198 + $0x1c0] sm:$0xff]
      %v267 = vld [vmem:[%s198 + $0x1c8] sm:$0xff]
      %v268 = vld [vmem:[%s198 + $0x1d0] sm:$0xff]
      %v269 = vld [vmem:[%s198 + $0x1d8] sm:$0xff]
      %v270 = vld [vmem:[%s198 + $0x1e0] sm:$0xff]
      %v271 = vld [vmem:[%s198 + $0x1e8] sm:$0xff]
      %v272 = vld [vmem:[%s198 + $0x1f0] sm:$0xff]
      %v273 = vld [vmem:[%s198 + $0x1f8] sm:$0xff]
      %v274 = vld [vmem:[%s1] sm:$0x1]
      %v276 = vlaneseq
      %v277 = vshrl.u32 %v276, 7
      %v278 = vsub.s32 0, %v277
      %v279 = vrot.slane %v274, %v278
      %v281 = vmul.f32 %v210, %v279
      %v282 = vmul.f32 %v211, %v279
      %v283 = vmul.f32 %v212, %v279
      %v284 = vmul.f32 %v213, %v279
      %v285 = vmul.f32 %v214, %v279
      %v286 = vmul.f32 %v215, %v279
      %v287 = vmul.f32 %v216, %v279
      %v288 = vmul.f32 %v217, %v279
      %v289 = vmul.f32 %v218, %v279
      %v290 = vmul.f32 %v219, %v279
      %v291 = vmul.f32 %v220, %v279
      %v292 = vmul.f32 %v221, %v279
      %v293 = vmul.f32 %v222, %v279
      %v294 = vmul.f32 %v223, %v279
      %v295 = vmul.f32 %v224, %v279
      %v296 = vmul.f32 %v225, %v279
      %v297 = vmul.f32 %v226, %v279
      %v298 = vmul.f32 %v227, %v279
      %v299 = vmul.f32 %v228, %v279
      %v300 = vmul.f32 %v229, %v279
      %v301 = vmul.f32 %v230, %v279
      %v302 = vmul.f32 %v231, %v279
      %v303 = vmul.f32 %v232, %v279
      %v304 = vmul.f32 %v233, %v279
      %v305 = vmul.f32 %v234, %v279
      %v306 = vmul.f32 %v235, %v279
      %v307 = vmul.f32 %v236, %v279
      %v308 = vmul.f32 %v237, %v279
      %v309 = vmul.f32 %v238, %v279
      %v310 = vmul.f32 %v239, %v279
      %v311 = vmul.f32 %v240, %v279
      %v312 = vmul.f32 %v241, %v279
      %v313 = vmul.f32 %v242, %v279
      %v314 = vmul.f32 %v243, %v279
      %v315 = vmul.f32 %v244, %v279
      %v316 = vmul.f32 %v245, %v279
      %v317 = vmul.f32 %v246, %v279
      %v318 = vmul.f32 %v247, %v279
      %v319 = vmul.f32 %v248, %v279
      %v320 = vmul.f32 %v249, %v279
      %v321 = vmul.f32 %v250, %v279
      %v322 = vmul.f32 %v251, %v279
      %v323 = vmul.f32 %v252, %v279
      %v324 = vmul.f32 %v253, %v279
      %v325 = vmul.f32 %v254, %v279
      %v326 = vmul.f32 %v255, %v279
      %v327 = vmul.f32 %v256, %v279
      %v328 = vmul.f32 %v257, %v279
      %v329 = vmul.f32 %v258, %v279
      %v330 = vmul.f32 %v259, %v279
      %v331 = vmul.f32 %v260, %v279
      %v332 = vmul.f32 %v261, %v279
      %v333 = vmul.f32 %v262, %v279
      %v334 = vmul.f32 %v263, %v279
      %v335 = vmul.f32 %v264, %v279
      %v336 = vmul.f32 %v265, %v279
      %v337 = vmul.f32 %v266, %v279
      %v338 = vmul.f32 %v267, %v279
      %v339 = vmul.f32 %v268, %v279
      %v340 = vmul.f32 %v269, %v279
      %v341 = vmul.f32 %v270, %v279
      %v342 = vmul.f32 %v271, %v279
      %v343 = vmul.f32 %v272, %v279
      %v344 = vmul.f32 %v273, %v279
      %v345 = vld [vmem:[%s2] sm:$0x1]
      %v347 = vlaneseq
      %v348 = vshrl.u32 %v347, 7
      %v349 = vsub.s32 0, %v348
      %v350 = vrot.slane %v345, %v349
      %v352 = vadd.f32 %v281, %v350
      %v353 = vadd.f32 %v282, %v350
      %v354 = vadd.f32 %v283, %v350
      %v355 = vadd.f32 %v284, %v350
      %v356 = vadd.f32 %v285, %v350
      %v357 = vadd.f32 %v286, %v350
      %v358 = vadd.f32 %v287, %v350
      %v359 = vadd.f32 %v288, %v350
      %v360 = vadd.f32 %v289, %v350
      %v361 = vadd.f32 %v290, %v350
      %v362 = vadd.f32 %v291, %v350
      %v363 = vadd.f32 %v292, %v350
      %v364 = vadd.f32 %v293, %v350
      %v365 = vadd.f32 %v294, %v350
      %v366 = vadd.f32 %v295, %v350
      %v367 = vadd.f32 %v296, %v350
      %v368 = vadd.f32 %v297, %v350
      %v369 = vadd.f32 %v298, %v350
      %v370 = vadd.f32 %v299, %v350
      %v371 = vadd.f32 %v300, %v350
      %v372 = vadd.f32 %v301, %v350
      %v373 = vadd.f32 %v302, %v350
      %v374 = vadd.f32 %v303, %v350
      %v375 = vadd.f32 %v304, %v350
      %v376 = vadd.f32 %v305, %v350
      %v377 = vadd.f32 %v306, %v350
      %v378 = vadd.f32 %v307, %v350
      %v379 = vadd.f32 %v308, %v350
      %v380 = vadd.f32 %v309, %v350
      %v381 = vadd.f32 %v310, %v350
      %v382 = vadd.f32 %v311, %v350
      %v383 = vadd.f32 %v312, %v350
      %v384 = vadd.f32 %v313, %v350
      %v385 = vadd.f32 %v314, %v350
      %v386 = vadd.f32 %v315, %v350
      %v387 = vadd.f32 %v316, %v350
      %v388 = vadd.f32 %v317, %v350
      %v389 = vadd.f32 %v318, %v350
      %v390 = vadd.f32 %v319, %v350
      %v391 = vadd.f32 %v320, %v350
      %v392 = vadd.f32 %v321, %v350
      %v393 = vadd.f32 %v322, %v350
      %v394 = vadd.f32 %v323, %v350
      %v395 = vadd.f32 %v324, %v350
      %v396 = vadd.f32 %v325, %v350
      %v397 = vadd.f32 %v326, %v350
      %v398 = vadd.f32 %v327, %v350
      %v399 = vadd.f32 %v328, %v350
      %v400 = vadd.f32 %v329, %v350
      %v401 = vadd.f32 %v330, %v350
      %v402 = vadd.f32 %v331, %v350
      %v403 = vadd.f32 %v332, %v350
      %v404 = vadd.f32 %v333, %v350
      %v405 = vadd.f32 %v334, %v350
      %v406 = vadd.f32 %v335, %v350
      %v407 = vadd.f32 %v336, %v350
      %v408 = vadd.f32 %v337, %v350
      %v409 = vadd.f32 %v338, %v350
      %v410 = vadd.f32 %v339, %v350
      %v411 = vadd.f32 %v340, %v350
      %v412 = vadd.f32 %v341, %v350
      %v413 = vadd.f32 %v342, %v350
      %v414 = vadd.f32 %v343, %v350
      %v415 = vadd.f32 %v344, %v350
      %v416 = vmax.f32 %v352, 0.0
      %v417 = vmax.f32 %v353, 0.0
      %v418 = vmax.f32 %v354, 0.0
      %v419 = vmax.f32 %v355, 0.0
      %v420 = vmax.f32 %v356, 0.0
      %v421 = vmax.f32 %v357, 0.0
      %v422 = vmax.f32 %v358, 0.0
      %v423 = vmax.f32 %v359, 0.0
      %v424 = vmax.f32 %v360, 0.0
      %v425 = vmax.f32 %v361, 0.0
      %v426 = vmax.f32 %v362, 0.0
      %v427 = vmax.f32 %v363, 0.0
      %v428 = vmax.f32 %v364, 0.0
      %v429 = vmax.f32 %v365, 0.0
      %v430 = vmax.f32 %v366, 0.0
      %v431 = vmax.f32 %v367, 0.0
      %v432 = vmax.f32 %v368, 0.0
      %v433 = vmax.f32 %v369, 0.0
      %v434 = vmax.f32 %v370, 0.0
      %v435 = vmax.f32 %v371, 0.0
      %v436 = vmax.f32 %v372, 0.0
      %v437 = vmax.f32 %v373, 0.0
      %v438 = vmax.f32 %v374, 0.0
      %v439 = vmax.f32 %v375, 0.0
      %v440 = vmax.f32 %v376, 0.0
      %v441 = vmax.f32 %v377, 0.0
      %v442 = vmax.f32 %v378, 0.0
      %v443 = vmax.f32 %v379, 0.0
      %v444 = vmax.f32 %v380, 0.0
      %v445 = vmax.f32 %v381, 0.0
      %v446 = vmax.f32 %v382, 0.0
      %v447 = vmax.f32 %v383, 0.0
      %v448 = vmax.f32 %v384, 0.0
      %v449 = vmax.f32 %v385, 0.0
      %v450 = vmax.f32 %v386, 0.0
      %v451 = vmax.f32 %v387, 0.0
      %v452 = vmax.f32 %v388, 0.0
      %v453 = vmax.f32 %v389, 0.0
      %v454 = vmax.f32 %v390, 0.0
      %v455 = vmax.f32 %v391, 0.0
      %v456 = vmax.f32 %v392, 0.0
      %v457 = vmax.f32 %v393, 0.0
      %v458 = vmax.f32 %v394, 0.0
      %v459 = vmax.f32 %v395, 0.0
      %v460 = vmax.f32 %v396, 0.0
      %v461 = vmax.f32 %v397, 0.0
      %v462 = vmax.f32 %v398, 0.0
      %v463 = vmax.f32 %v399, 0.0
      %v464 = vmax.f32 %v400, 0.0
      %v465 = vmax.f32 %v401, 0.0
      %v466 = vmax.f32 %v402, 0.0
      %v467 = vmax.f32 %v403, 0.0
      %v468 = vmax.f32 %v404, 0.0
      %v469 = vmax.f32 %v405, 0.0
      %v470 = vmax.f32 %v406, 0.0
      %v471 = vmax.f32 %v407, 0.0
      %v472 = vmax.f32 %v408, 0.0
      %v473 = vmax.f32 %v409, 0.0
      %v474 = vmax.f32 %v410, 0.0
      %v475 = vmax.f32 %v411, 0.0
      %v476 = vmax.f32 %v412, 0.0
      %v477 = vmax.f32 %v413, 0.0
      %v478 = vmax.f32 %v414, 0.0
      %v479 = vmax.f32 %v415, 0.0
      %480 = vxpose.xlu0.b32.start [1/16] %v416, 128
      %481 = vxpose.xlu0.b32.cont [2/16] %v417, 128
      %482 = vxpose.xlu0.b32.cont [3/16] %v418, 128
      %483 = vxpose.xlu0.b32.cont [4/16] %v419, 128
      %484 = vxpose.xlu0.b32.cont [5/16] %v420, 128
      %485 = vxpose.xlu0.b32.cont [6/16] %v421, 128
      %486 = vxpose.xlu0.b32.cont [7/16] %v422, 128
      %487 = vxpose.xlu0.b32.cont [8/16] %v423, 128
      %488 = vxpose.xlu0.b32.cont [9/16] %v424, 128
      %489 = vxpose.xlu0.b32.cont [10/16] %v425, 128
      %490 = vxpose.xlu0.b32.cont [11/16] %v426, 128
      %491 = vxpose.xlu0.b32.cont [12/16] %v427, 128
      %492 = vxpose.xlu0.b32.cont [13/16] %v428, 128
      %493 = vxpose.xlu0.b32.cont [14/16] %v429, 128
      %494 = vxpose.xlu0.b32.cont [15/16] %v430, 128
      %495 = vxpose.xlu0.b32.end [16/16] %v431, 128
      %v496 = vpop.trf.xlu0
      %v497 = vpop.trf.xlu0
      %v498 = vpop.trf.xlu0
      %v499 = vpop.trf.xlu0
      %v500 = vpop.trf.xlu0
      %v501 = vpop.trf.xlu0
      %v502 = vpop.trf.xlu0
      %v503 = vpop.trf.xlu0
      %v504 = vpop.trf.xlu0
      %v505 = vpop.trf.xlu0
      %v506 = vpop.trf.xlu0
      %v507 = vpop.trf.xlu0
      %v508 = vpop.trf.xlu0
      %v509 = vpop.trf.xlu0
      %v510 = vpop.trf.xlu0
      %v511 = vpop.trf.xlu0
      %512 = vxpose.xlu0.b32.start [1/16] %v432, 128
      %513 = vxpose.xlu0.b32.cont [2/16] %v433, 128
      %514 = vxpose.xlu0.b32.cont [3/16] %v434, 128
      %515 = vxpose.xlu0.b32.cont [4/16] %v435, 128
      %516 = vxpose.xlu0.b32.cont [5/16] %v436, 128
      %517 = vxpose.xlu0.b32.cont [6/16] %v437, 128
      %518 = vxpose.xlu0.b32.cont [7/16] %v438, 128
      %519 = vxpose.xlu0.b32.cont [8/16] %v439, 128
      %520 = vxpose.xlu0.b32.cont [9/16] %v440, 128
      %521 = vxpose.xlu0.b32.cont [10/16] %v441, 128
      %522 = vxpose.xlu0.b32.cont [11/16] %v442, 128
      %523 = vxpose.xlu0.b32.cont [12/16] %v443, 128
      %524 = vxpose.xlu0.b32.cont [13/16] %v444, 128
      %525 = vxpose.xlu0.b32.cont [14/16] %v445, 128
      %526 = vxpose.xlu0.b32.cont [15/16] %v446, 128
      %527 = vxpose.xlu0.b32.end [16/16] %v447, 128
      %v528 = vpop.trf.xlu0
      %v529 = vpop.trf.xlu0
      %v530 = vpop.trf.xlu0
      %v531 = vpop.trf.xlu0
      %v532 = vpop.trf.xlu0
      %v533 = vpop.trf.xlu0
      %v534 = vpop.trf.xlu0
      %v535 = vpop.trf.xlu0
      %v536 = vpop.trf.xlu0
      %v537 = vpop.trf.xlu0
      %v538 = vpop.trf.xlu0
      %v539 = vpop.trf.xlu0
      %v540 = vpop.trf.xlu0
      %v541 = vpop.trf.xlu0
      %v542 = vpop.trf.xlu0
      %v543 = vpop.trf.xlu0
      %544 = vxpose.xlu0.b32.start [1/16] %v448, 128
      %545 = vxpose.xlu0.b32.cont [2/16] %v449, 128
      %546 = vxpose.xlu0.b32.cont [3/16] %v450, 128
      %547 = vxpose.xlu0.b32.cont [4/16] %v451, 128
      %548 = vxpose.xlu0.b32.cont [5/16] %v452, 128
      %549 = vxpose.xlu0.b32.cont [6/16] %v453, 128
      %550 = vxpose.xlu0.b32.cont [7/16] %v454, 128
      %551 = vxpose.xlu0.b32.cont [8/16] %v455, 128
      %552 = vxpose.xlu0.b32.cont [9/16] %v456, 128
      %553 = vxpose.xlu0.b32.cont [10/16] %v457, 128
      %554 = vxpose.xlu0.b32.cont [11/16] %v458, 128
      %555 = vxpose.xlu0.b32.cont [12/16] %v459, 128
      %556 = vxpose.xlu0.b32.cont [13/16] %v460, 128
      %557 = vxpose.xlu0.b32.cont [14/16] %v461, 128
      %558 = vxpose.xlu0.b32.cont [15/16] %v462, 128
      %559 = vxpose.xlu0.b32.end [16/16] %v463, 128
      %v560 = vpop.trf.xlu0
      %v561 = vpop.trf.xlu0
      %v562 = vpop.trf.xlu0
      %v563 = vpop.trf.xlu0
      %v564 = vpop.trf.xlu0
      %v565 = vpop.trf.xlu0
      %v566 = vpop.trf.xlu0
      %v567 = vpop.trf.xlu0
      %v568 = vpop.trf.xlu0
      %v569 = vpop.trf.xlu0
      %v570 = vpop.trf.xlu0
      %v571 = vpop.trf.xlu0
      %v572 = vpop.trf.xlu0
      %v573 = vpop.trf.xlu0
      %v574 = vpop.trf.xlu0
      %v575 = vpop.trf.xlu0
      %576 = vxpose.xlu0.b32.start [1/16] %v464, 128
      %577 = vxpose.xlu0.b32.cont [2/16] %v465, 128
      %578 = vxpose.xlu0.b32.cont [3/16] %v466, 128
      %579 = vxpose.xlu0.b32.cont [4/16] %v467, 128
      %580 = vxpose.xlu0.b32.cont [5/16] %v468, 128
      %581 = vxpose.xlu0.b32.cont [6/16] %v469, 128
      %582 = vxpose.xlu0.b32.cont [7/16] %v470, 128
      %583 = vxpose.xlu0.b32.cont [8/16] %v471, 128
      %584 = vxpose.xlu0.b32.cont [9/16] %v472, 128
      %585 = vxpose.xlu0.b32.cont [10/16] %v473, 128
      %586 = vxpose.xlu0.b32.cont [11/16] %v474, 128
      %587 = vxpose.xlu0.b32.cont [12/16] %v475, 128
      %588 = vxpose.xlu0.b32.cont [13/16] %v476, 128
      %589 = vxpose.xlu0.b32.cont [14/16] %v477, 128
      %590 = vxpose.xlu0.b32.cont [15/16] %v478, 128
      %591 = vxpose.xlu0.b32.end [16/16] %v479, 128
      %v592 = vpop.trf.xlu0
      %v593 = vpop.trf.xlu0
      %v594 = vpop.trf.xlu0
      %v595 = vpop.trf.xlu0
      %v596 = vpop.trf.xlu0
      %v597 = vpop.trf.xlu0
      %v598 = vpop.trf.xlu0
      %v599 = vpop.trf.xlu0
      %v600 = vpop.trf.xlu0
      %v601 = vpop.trf.xlu0
      %v602 = vpop.trf.xlu0
      %v603 = vpop.trf.xlu0
      %v604 = vpop.trf.xlu0
      %v605 = vpop.trf.xlu0
      %v606 = vpop.trf.xlu0
      %v607 = vpop.trf.xlu0
      %608 = vst [vmem:[%s208] sm:$0xff] %v496
      %609 = vst [vmem:[%s208 + $0x8] sm:$0xff] %v528
      %610 = vst [vmem:[%s208 + $0x10] sm:$0xff] %v560
      %611 = vst [vmem:[%s208 + $0x18] sm:$0xff] %v592
      %s612 = smul.u32 4, %s19
      %p613 = scmp.lt.s32.totalorder %s18, 1
      %s614 = scalar_select %p613, %s18, 1
      %p615 = scmp.lt.s32.totalorder %s612, 7
      %s616 = scalar_select %p615, %s612, 7
      %s617 = smul.addr %s614, 8
      %s618 = sadd.s32 %s616, %s617
      %s619 = smul.addr %s618, 8
      %s620 = scalar_lea.vmem %s3, %s619
      // Predicated region
      $region33: #{conv_bn_relu.3} parent=31 // pred_check
        %p621 = pneg %p116
      $region34: #{conv_bn_relu.3} parent=31 // pred_check_branch
        %623 = sbr.rel (%p621) target = $region36
      $region35: #{conv_bn_relu.3} parent=31 // pred_region
        %s624 = smul.u32 4, %s19
      $region36: #{conv_bn_relu.3} parent=31 // pred_fallthru
        _
    $region32: #{conv_bn_relu.3} parent=5 // pred_fallthru
      _
    %p625 = scmp.le.s32.totalorder 2, %s9
    // Predicated region
    $region37: #{conv_bn_relu.3} parent=5 // pred_check
      %p626 = pneg %p625
    $region38: #{conv_bn_relu.3} parent=5 // pred_check_branch
      %628 = sbr.rel (%p626) target = $region40
    $region39: #{conv_bn_relu.3} parent=5 // pred_region
      %s629 = ssub.s32 %s9, 2
      // Predicated region
      $region41: #{conv_bn_relu.3} parent=39 // pred_check
        %p630 = pneg %p122
      $region42: #{conv_bn_relu.3} parent=39 // pred_check_branch
        %632 = sbr.rel (%p630) target = $region44
      $region43: #{conv_bn_relu.3} parent=39 // pred_region
        %s633 = smul.u32 4, %s21
        %p634 = scmp.lt.s32.totalorder %s20, 1
        %s635 = scalar_select %p634, %s20, 1
        %p636 = scmp.lt.s32.totalorder %s633, 7
        %s637 = scalar_select %p636, %s633, 7
        %s638 = smul.addr %s635, 8
        %s639 = sadd.s32 %s637, %s638
        %s640 = smul.addr %s639, 8
        %s641 = scalar_lea.vmem %s3, %s640
      $region44: #{conv_bn_relu.3} parent=39 // pred_fallthru
        _
    $region40: #{conv_bn_relu.3} parent=5 // pred_fallthru
      _
  $region6: #{conv_bn_relu.3} parent=0 // loop_footer
    %s13 = sadd.s32 1, %s9
  $region7: #{conv_bn_relu.3} parent=0 // loop_footer_branch
    %8 = sbr.rel target = $region3
  $region8: #{conv_bn_relu.3} parent=0 // loop_exit
    _

// kernel: conv_bn_relu.2
$region0: #{conv_bn_relu.2}
  #allocation0 [shape = 'u32[]', space=smem, size = 0x4, offset = 0x4, fixed_abs, tag = 'smem constant byte address 0x4 - core index']
  #allocation1 [shape = 'u32[144,128]{1,0:T(1,128)}', space=vmem, size = 0x12000, scoped, tag = 'internal scratch']
  %s0 = inlined_call_operand.vmem [shape: f32[2,34,34,4], index: 0, kind: input, shape index: {}]
  %s1 = inlined_call_operand.vmem [shape: bf16[36,128], index: 1, kind: input, shape index: {}]
  %s2 = inlined_call_operand.vmem [shape: f32[2,1024,128], index: 2, kind: output, shape index: {0}]
  %s3 = inlined_call_operand.vmem [shape: f32[2,2,1,128], index: 3, kind: output, shape index: {1}]
  %s4 = inlined_call_operand.vmem [shape: f32[2,2,1,128], index: 4, kind: output, shape index: {2}]
  %5 = xla_tuple %s2, %s3, %s4
  %s6 = sld [smem:[#allocation0]]
  $region57: #{conv_bn_relu.2} parent=0
    _
  %s8 = ssub.s32 1, %s6
  %s9 = scalar_select 0, %s8, %s6
  loop: start=0, step=1, limit=6
  $region2: #{conv_bn_relu.2} parent=0 // loop_pre_header
    _
  $region3: #{conv_bn_relu.2} parent=0 // loop_header
    %s11 = sphi 0, %s15
    %p12 = scmp.ge.s32.totalorder %s11, 6
    %s18 = sphi 0, %s30
    %s19 = sphi 0, %s26
    %s20 = sphi 0, %s18
    %s21 = sphi 0, %s19
    %s22 = sphi 0, %s20
    %s23 = sphi 0, %s21
    %s33 = sphi 0, %s35
    %s36 = sphi 0, %s33
    %s37 = sphi 0, %s36
    %s53 = sphi 0, %s37
    %s57 = sphi 0, %s57
    %s59 = sphi 0, %s57
    %s60 = sphi 0, %s59
    %s74 = sphi 0, %s60
    %s82 = sphi 0, %s84
    %s85 = sphi 0, %s82
    %s86 = sphi 0, %s85
    %s102 = sphi 0, %s86
    %s110 = sphi 0, %s112
    %s113 = sphi 0, %s110
    %s114 = sphi 0, %s113
    %s130 = sphi 0, %s114
    %s138 = sphi 0, %s140
    %s141 = sphi 0, %s138
    %s142 = sphi 0, %s141
    %s158 = sphi 0, %s142
  $region4: #{conv_bn_relu.2} parent=0 // loop_header_branch
    %14 = sbr.rel (%p12) target = $region8
  $region5: #{conv_bn_relu.2} parent=0 // loop_body
    %s16 = ssub.s32 %s11, 1
    %s17 = ssub.s32 %s11, 2
    %s24 = sadd.s32 1, %s19
    %p25 = scmp.ge.s32.totalorder %s24, 2
    %s26 = scalar_select %p25, 0, %s24
    %s27 = sadd.s32 1, %s18
    %s28 = scalar_select %p25, %s27, %s18
    %p29 = scmp.ge.s32.totalorder %s28, 2
    %s30 = scalar_select %p29, 0, %s28
    %s31 = ssub.s32 %s18, %s30
    %p32 = scmp.eq.s32.totalorder %s31, 0
    %s34 = sadd.s32 %s33, 1
    %s35 = scalar_select %p32, %s33, %s34
    %p38 = pneg %p32
    %p39 = scmp.eq.s32.totalorder %s11, 3
    %p40 = por %p38, %p39
    %p41 = scmp.ne.s32.totalorder %s33, %s36
    %p42 = scmp.eq.s32.totalorder %s11, 0
    %p43 = por %p41, %p42
    %p44 = scmp.ne.s32.totalorder %s33, %s36
    %p45 = scmp.eq.s32.totalorder %s16, 3
    %p46 = por %p44, %p45
    %p47 = scmp.ne.s32.totalorder %s36, %s37
    %p48 = scmp.eq.s32.totalorder %s16, 0
    %p49 = por %p47, %p48
    %p50 = scmp.ne.s32.totalorder %s36, %s37
    %p51 = scmp.eq.s32.totalorder %s17, 3
    %p52 = por %p50, %p51
    %p54 = scmp.ne.s32.totalorder %s37, %s53
    %p55 = scmp.eq.s32.totalorder %s17, 0
    %p56 = por %p54, %p55
    %s58 = sadd.s32 %s57, 1
    %p61 = scmp.eq.s32.totalorder %s11, 3
    %p62 = scmp.ne.s32.totalorder %s57, %s59
    %p63 = scmp.eq.s32.totalorder %s11, 0
    %p64 = por %p62, %p63
    %p65 = scmp.ne.s32.totalorder %s57, %s59
    %p66 = scmp.eq.s32.totalorder %s16, 3
    %p67 = por %p65, %p66
    %p68 = scmp.ne.s32.totalorder %s59, %s60
    %p69 = scmp.eq.s32.totalorder %s16, 0
    %p70 = por %p68, %p69
    %p71 = scmp.ne.s32.totalorder %s59, %s60
    %p72 = scmp.eq.s32.totalorder %s17, 3
    %p73 = por %p71, %p72
    %p75 = scmp.ne.s32.totalorder %s60, %s74
    %p76 = scmp.eq.s32.totalorder %s17, 0
    %p77 = por %p75, %p76
    %s78 = ssub.s32 %s18, %s30
    %s79 = ssub.s32 %s19, %s26
    %s80 = sor.u32 %s78, %s79
    %p81 = scmp.eq.s32.totalorder %s80, 0
    %s83 = sadd.s32 %s82, 1
    %s84 = scalar_select %p81, %s82, %s83
    %p87 = pneg %p81
    %p88 = scmp.eq.s32.totalorder %s11, 3
    %p89 = por %p87, %p88
    %p90 = scmp.ne.s32.totalorder %s82, %s85
    %p91 = scmp.eq.s32.totalorder %s11, 0
    %p92 = por %p90, %p91
    %p93 = scmp.ne.s32.totalorder %s82, %s85
    %p94 = scmp.eq.s32.totalorder %s16, 3
    %p95 = por %p93, %p94
    %p96 = scmp.ne.s32.totalorder %s85, %s86
    %p97 = scmp.eq.s32.totalorder %s16, 0
    %p98 = por %p96, %p97
    %p99 = scmp.ne.s32.totalorder %s85, %s86
    %p100 = scmp.eq.s32.totalorder %s17, 3
    %p101 = por %p99, %p100
    %p103 = scmp.ne.s32.totalorder %s86, %s102
    %p104 = scmp.eq.s32.totalorder %s17, 0
    %p105 = por %p103, %p104
    %s106 = ssub.s32 %s18, %s30
    %s107 = ssub.s32 %s19, %s26
    %s108 = sor.u32 %s106, %s107
    %p109 = scmp.eq.s32.totalorder %s108, 0
    %s111 = sadd.s32 %s110, 1
    %s112 = scalar_select %p109, %s110, %s111
    %p115 = pneg %p109
    %p116 = scmp.eq.s32.totalorder %s11, 3
    %p117 = por %p115, %p116
    %p118 = scmp.ne.s32.totalorder %s110, %s113
    %p119 = scmp.eq.s32.totalorder %s11, 0
    %p120 = por %p118, %p119
    %p121 = scmp.ne.s32.totalorder %s110, %s113
    %p122 = scmp.eq.s32.totalorder %s16, 3
    %p123 = por %p121, %p122
    %p124 = scmp.ne.s32.totalorder %s113, %s114
    %p125 = scmp.eq.s32.totalorder %s16, 0
    %p126 = por %p124, %p125
    %p127 = scmp.ne.s32.totalorder %s113, %s114
    %p128 = scmp.eq.s32.totalorder %s17, 3
    %p129 = por %p127, %p128
    %p131 = scmp.ne.s32.totalorder %s114, %s130
    %p132 = scmp.eq.s32.totalorder %s17, 0
    %p133 = por %p131, %p132
    %s134 = ssub.s32 %s18, %s30
    %s135 = ssub.s32 %s19, %s26
    %s136 = sor.u32 %s134, %s135
    %p137 = scmp.eq.s32.totalorder %s136, 0
    %s139 = sadd.s32 %s138, 1
    %s140 = scalar_select %p137, %s138, %s139
    %p143 = pneg %p137
    %p144 = scmp.eq.s32.totalorder %s11, 3
    %p145 = por %p143, %p144
    %p146 = scmp.ne.s32.totalorder %s138, %s141
    %p147 = scmp.eq.s32.totalorder %s11, 0
    %p148 = por %p146, %p147
    %p149 = scmp.ne.s32.totalorder %s138, %s141
    %p150 = scmp.eq.s32.totalorder %s16, 3
    %p151 = por %p149, %p150
    %p152 = scmp.ne.s32.totalorder %s141, %s142
    %p153 = scmp.eq.s32.totalorder %s16, 0
    %p154 = por %p152, %p153
    %p155 = scmp.ne.s32.totalorder %s141, %s142
    %p156 = scmp.eq.s32.totalorder %s17, 3
    %p157 = por %p155, %p156
    %p159 = scmp.ne.s32.totalorder %s142, %s158
    %p160 = scmp.eq.s32.totalorder %s17, 0
    %p161 = por %p159, %p160
    %p162 = scmp.le.s32.totalorder 1, %s11
    %p163 = scmp.lt.s32.totalorder %s11, 5
    %p164 = pnand %p162, %p163
    %p165 = pneg %p164
    // Predicated region
    $region9: #{conv_bn_relu.2} parent=5 // pred_check
      _
    $region10: #{conv_bn_relu.2} parent=5 // pred_check_branch
      %167 = sbr.rel (%p164) target = $region12
    $region11: #{conv_bn_relu.2} parent=5 // pred_region
      %s168 = ssub.s32 %s11, 1
      // Predicated region
      $region13: #{conv_bn_relu.2} parent=11 // pred_check
        %p169 = pneg %p70
      $region14: #{conv_bn_relu.2} parent=11 // pred_check_branch
        %171 = sbr.rel (%p169) target = $region16
      $region15: #{conv_bn_relu.2} parent=11 // pred_region
        _
      $region16: #{conv_bn_relu.2} parent=11 // pred_fallthru
        _
    $region12: #{conv_bn_relu.2} parent=5 // pred_fallthru
      _
    %p172 = scmp.lt.s32.totalorder %s11, 4
    // Predicated region
    $region17: #{conv_bn_relu.2} parent=5 // pred_check
      %p173 = pneg %p172
    $region18: #{conv_bn_relu.2} parent=5 // pred_check_branch
      %175 = sbr.rel (%p173) target = $region20
    $region19: #{conv_bn_relu.2} parent=5 // pred_region
      // Predicated region
      $region21: #{conv_bn_relu.2} parent=19 // pred_check
        %p176 = pneg %p43
      $region22: #{conv_bn_relu.2} parent=19 // pred_check_branch
        %178 = sbr.rel (%p176) target = $region24
      $region23: #{conv_bn_relu.2} parent=19 // pred_region
        %p179 = scmp.lt.s32.totalorder %s18, 1
        %s180 = scalar_select %p179, %s18, 1
        %s181 = smul.addr %s180, 170
        %s182 = smul.addr %s181, 8
        %s183 = scalar_lea.vmem %s0, %s182
      $region24: #{conv_bn_relu.2} parent=19 // pred_fallthru
        _
    $region20: #{conv_bn_relu.2} parent=5 // pred_fallthru
      _
    %p184 = scmp.le.s32.totalorder 1, %s11
    %p185 = scmp.lt.s32.totalorder %s11, 5
    %p186 = pnand %p184, %p185
    %p187 = pneg %p186
    // Predicated region
    $region25: #{conv_bn_relu.2} parent=5 // pred_check
      _
    $region26: #{conv_bn_relu.2} parent=5 // pred_check_branch
      %189 = sbr.rel (%p186) target = $region28
    $region27: #{conv_bn_relu.2} parent=5 // pred_region
      %s190 = ssub.s32 %s11, 1
      %p191 = scmp.lt.s32.totalorder %s20, 1
      %s192 = scalar_select %p191, %s20, 1
      %s193 = smul.addr %s192, 170
      %s194 = smul.addr %s193, 8
      %s195 = scalar_lea.vmem %s0, %s194
      %p196 = pneg %p49
      %p197 = pneg %p46
      %p198 = pneg %p70
      %p199 = pneg %p67
      %p200 = pneg %p98
      %p201 = pneg %p95
      %s202 = smul.u32 64, %s21
      %p203 = scmp.lt.s32.totalorder %s20, 1
      %s204 = scalar_select %p203, %s20, 1
      %p205 = scmp.lt.s32.totalorder %s202, 127
      %s206 = scalar_select %p205, %s202, 127
      %s207 = smul.addr %s204, 128
      %s208 = sadd.s32 %s206, %s207
      %s209 = smul.addr %s208, 8
      %s210 = scalar_lea.vmem %s2, %s209
      %p211 = pneg %p126
      %p212 = pneg %p123
      %p213 = scmp.lt.s32.totalorder %s20, 1
      %s214 = scalar_select %p213, %s20, 1
      %p215 = scmp.lt.s32.totalorder %s21, 1
      %s216 = scalar_select %p215, %s21, 1
      %s217 = smul.addr %s214, 2
      %s218 = sadd.s32 %s216, %s217
      %s219 = scalar_lea.vmem %s3, %s218
      %p220 = pneg %p154
      %p221 = pneg %p151
      %p222 = scmp.lt.s32.totalorder %s20, 1
      %s223 = scalar_select %p222, %s20, 1
      %p224 = scmp.lt.s32.totalorder %s21, 1
      %s225 = scalar_select %p224, %s21, 1
      %s226 = smul.addr %s223, 2
      %s227 = sadd.s32 %s225, %s226
      %s228 = scalar_lea.vmem %s4, %s227
      %p229 = scmp.lt.s32.totalorder %s20, 1
      %s230 = scalar_select %p229, %s20, 1
      %s231 = smul.addr %s230, 170
      %s232 = smul.addr %s231, 8
      %s233 = scalar_lea.vmem %s0, %s232
      %s234 = smul.u32 64, %s21
      %p235 = scmp.lt.s32.totalorder %s20, 1
      %s236 = scalar_select %p235, %s20, 1
      %p237 = scmp.lt.s32.totalorder %s234, 127
      %s238 = scalar_select %p237, %s234, 127
      %s239 = smul.addr %s236, 128
      %s240 = sadd.s32 %s238, %s239
      %s241 = smul.addr %s240, 8
      %s242 = scalar_lea.vmem %s2, %s241
      %s243 = smul.u32 64, %s21
      %p244 = scmp.lt.s32.totalorder %s20, 1
      %s245 = scalar_select %p244, %s20, 1
      %p246 = scmp.lt.s32.totalorder %s21, 1
      %s247 = scalar_select %p246, %s21, 1
      %s248 = smul.addr %s245, 2
      %s249 = sadd.s32 %s247, %s248
      %s250 = scalar_lea.vmem %s3, %s249
      %p251 = scmp.lt.s32.totalorder %s20, 1
      %s252 = scalar_select %p251, %s20, 1
      %p253 = scmp.lt.s32.totalorder %s21, 1
      %s254 = scalar_select %p253, %s21, 1
      %s255 = smul.addr %s252, 2
      %s256 = sadd.s32 %s254, %s255
      %s257 = scalar_lea.vmem %s4, %s256
      %s259 = smul.u32 %s21, 16
      %s260 = smul.u32 %s259, 40
      %s261 = scalar_lea.vmem %s233, %s260
      %v262 = vld [vmem:[%s261] sm:$0xff]
      %v263 = vld [vmem:[%s261 + $0x8] sm:$0xff]
      %v264 = vld [vmem:[%s261 + $0x10] sm:$0xff]
      %v265 = vld [vmem:[%s261 + $0x18] sm:$0xff]
      %v266 = vld [vmem:[%s261 + $0x20] sm:$0x3]
      %v267 = vld [vmem:[%s261 + $0x28] sm:$0xff]
      %v268 = vld [vmem:[%s261 + $0x30] sm:$0xff]
      %v269 = vld [vmem:[%s261 + $0x38] sm:$0xff]
      %v270 = vld [vmem:[%s261 + $0x40] sm:$0xff]
      %v271 = vld [vmem:[%s261 + $0x48] sm:$0x3]
      %v272 = vld [vmem:[%s261 + $0x50] sm:$0xff]
      %v273 = vld [vmem:[%s261 + $0x58] sm:$0xff]
      %v274 = vld [vmem:[%s261 + $0x60] sm:$0xff]
      %v275 = vld [vmem:[%s261 + $0x68] sm:$0xff]
      %v276 = vld [vmem:[%s261 + $0x70] sm:$0x3]
      %v277 = vld [vmem:[%s261 + $0x78] sm:$0xff]
      %v278 = vld [vmem:[%s261 + $0x80] sm:$0xff]
      %v279 = vld [vmem:[%s261 + $0x88] sm:$0xff]
      %v280 = vld [vmem:[%s261 + $0x90] sm:$0xff]
      %v281 = vld [vmem:[%s261 + $0x98] sm:$0x3]
      %v282 = vld [vmem:[%s261 + $0xa0] sm:$0xff]
      %v283 = vld [vmem:[%s261 + $0xa8] sm:$0xff]
      %v284 = vld [vmem:[%s261 + $0xb0] sm:$0xff]
      %v285 = vld [vmem:[%s261 + $0xb8] sm:$0xff]
      %v286 = vld [vmem:[%s261 + $0xc0] sm:$0x3]
      %v287 = vld [vmem:[%s261 + $0xc8] sm:$0xff]
      %v288 = vld [vmem:[%s261 + $0xd0] sm:$0xff]
      %v289 = vld [vmem:[%s261 + $0xd8] sm:$0xff]
      %v290 = vld [vmem:[%s261 + $0xe0] sm:$0xff]
      %v291 = vld [vmem:[%s261 + $0xe8] sm:$0x3]
      %v292 = vld [vmem:[%s261 + $0xf0] sm:$0xff]
      %v293 = vld [vmem:[%s261 + $0xf8] sm:$0xff]
      %v294 = vld [vmem:[%s261 + $0x100] sm:$0xff]
      %v295 = vld [vmem:[%s261 + $0x108] sm:$0xff]
      %v296 = vld [vmem:[%s261 + $0x110] sm:$0x3]
      %v297 = vld [vmem:[%s261 + $0x118] sm:$0xff]
      %v298 = vld [vmem:[%s261 + $0x120] sm:$0xff]
      %v299 = vld [vmem:[%s261 + $0x128] sm:$0xff]
      %v300 = vld [vmem:[%s261 + $0x130] sm:$0xff]
      %v301 = vld [vmem:[%s261 + $0x138] sm:$0x3]
      %v302 = vld [vmem:[%s261 + $0x140] sm:$0xff]
      %v303 = vld [vmem:[%s261 + $0x148] sm:$0xff]
      %v304 = vld [vmem:[%s261 + $0x150] sm:$0xff]
      %v305 = vld [vmem:[%s261 + $0x158] sm:$0xff]
      %v306 = vld [vmem:[%s261 + $0x160] sm:$0x3]
      %v307 = vld [vmem:[%s261 + $0x168] sm:$0xff]
      %v308 = vld [vmem:[%s261 + $0x170] sm:$0xff]
      %v309 = vld [vmem:[%s261 + $0x178] sm:$0xff]
      %v310 = vld [vmem:[%s261 + $0x180] sm:$0xff]
      %v311 = vld [vmem:[%s261 + $0x188] sm:$0x3]
      %v312 = vld [vmem:[%s261 + $0x190] sm:$0xff]
      %v313 = vld [vmem:[%s261 + $0x198] sm:$0xff]
      %v314 = vld [vmem:[%s261 + $0x1a0] sm:$0xff]
      %v315 = vld [vmem:[%s261 + $0x1a8] sm:$0xff]
      %v316 = vld [vmem:[%s261 + $0x1b0] sm:$0x3]
      %v317 = vld [vmem:[%s261 + $0x1b8] sm:$0xff]
      %v318 = vld [vmem:[%s261 + $0x1c0] sm:$0xff]
      %v319 = vld [vmem:[%s261 + $0x1c8] sm:$0xff]
      %v320 = vld [vmem:[%s261 + $0x1d0] sm:$0xff]
      %v321 = vld [vmem:[%s261 + $0x1d8] sm:$0x3]
      %v322 = vld [vmem:[%s261 + $0x1e0] sm:$0xff]
      %v323 = vld [vmem:[%s261 + $0x1e8] sm:$0xff]
      %v324 = vld [vmem:[%s261 + $0x1f0] sm:$0xff]
      %v325 = vld [vmem:[%s261 + $0x1f8] sm:$0xff]
      %v326 = vld [vmem:[%s261 + $0x200] sm:$0x3]
      %v327 = vld [vmem:[%s261 + $0x208] sm:$0xff]
      %v328 = vld [vmem:[%s261 + $0x210] sm:$0xff]
      %v329 = vld [vmem:[%s261 + $0x218] sm:$0xff]
      %v330 = vld [vmem:[%s261 + $0x220] sm:$0xff]
      %v331 = vld [vmem:[%s261 + $0x228] sm:$0x3]
      %v332 = vld [vmem:[%s261 + $0x230] sm:$0xff]
      %v333 = vld [vmem:[%s261 + $0x238] sm:$0xff]
      %v334 = vld [vmem:[%s261 + $0x240] sm:$0xff]
      %v335 = vld [vmem:[%s261 + $0x248] sm:$0xff]
      %v336 = vld [vmem:[%s261 + $0x250] sm:$0x3]
      %v337 = vld [vmem:[%s261 + $0x258] sm:$0xff]
      %v338 = vld [vmem:[%s261 + $0x260] sm:$0xff]
      %v339 = vld [vmem:[%s261 + $0x268] sm:$0xff]
      %v340 = vld [vmem:[%s261 + $0x270] sm:$0xff]
      %v341 = vld [vmem:[%s261 + $0x278] sm:$0x3]
      %v342 = vld [vmem:[%s261 + $0x280] sm:$0xff]
      %v343 = vld [vmem:[%s261 + $0x288] sm:$0xff]
      %v344 = vld [vmem:[%s261 + $0x290] sm:$0xff]
      %v345 = vld [vmem:[%s261 + $0x298] sm:$0xff]
      %v346 = vld [vmem:[%s261 + $0x2a0] sm:$0x3]
      %v347 = vld [vmem:[%s261 + $0x2a8] sm:$0xff]
      %v348 = vld [vmem:[%s261 + $0x2b0] sm:$0xff]
      %v349 = vld [vmem:[%s261 + $0x2b8] sm:$0xff]
      %v350 = vld [vmem:[%s261 + $0x2c0] sm:$0xff]
      %v351 = vld [vmem:[%s261 + $0x2c8] sm:$0x3]
      %vm432 = vcmask 1046528
      %v433 = vrot.slane %v262, 1
      %v434 = vrot.slane %v263, 1
      %v435 = vsel %vm432, %v433, %v434
      %v436 = vrot.slane %v264, 1
      %v437 = vsel %vm432, %v434, %v436
      %v438 = vrot.slane %v265, 1
      %v439 = vsel %vm432, %v436, %v438
      %v440 = vrot.slane %v266, 1
      %v441 = vsel %vm432, %v438, %v440
      %v442 = vrot.slane %v267, 1
      %v443 = vrot.slane %v268, 1
      %v444 = vsel %vm432, %v442, %v443
      %v445 = vrot.slane %v269, 1
      %v446 = vsel %vm432, %v443, %v445
      %v447 = vrot.slane %v270, 1
      %v448 = vsel %vm432, %v445, %v447
      %v449 = vrot.slane %v271, 1
      %v450 = vsel %vm432, %v447, %v449
      %v451 = vrot.slane %v272, 1
      %v452 = vrot.slane %v273, 1
      %v453 = vsel %vm432, %v451, %v452
      %v454 = vrot.slane %v274, 1
      %v455 = vsel %vm432, %v452, %v454
      %v456 = vrot.slane %v275, 1
      %v457 = vsel %vm432, %v454, %v456
      %v458 = vrot.slane %v276, 1
      %v459 = vsel %vm432, %v456, %v458
      %v460 = vrot.slane %v277, 1
      %v461 = vrot.slane %v278, 1
      %v462 = vsel %vm432, %v460, %v461
      %v463 = vrot.slane %v279, 1
      %v464 = vsel %vm432, %v461, %v463
      %v465 = vrot.slane %v280, 1
      %v466 = vsel %vm432, %v463, %v465
      %v467 = vrot.slane %v281, 1
      %v468 = vsel %vm432, %v465, %v467
      %v469 = vrot.slane %v282, 1
      %v470 = vrot.slane %v283, 1
      %v471 = vsel %vm432, %v469, %v470
      %v472 = vrot.slane %v284, 1
      %v473 = vsel %vm432, %v470, %v472
      %v474 = vrot.slane %v285, 1
      %v475 = vsel %vm432, %v472, %v474
      %v476 = vrot.slane %v286, 1
      %v477 = vsel %vm432, %v474, %v476
      %v478 = vrot.slane %v287, 1
      %v479 = vrot.slane %v288, 1
      %v480 = vsel %vm432, %v478, %v479
      %v481 = vrot.slane %v289, 1
      %v482 = vsel %vm432, %v479, %v481
      %v483 = vrot.slane %v290, 1
      %v484 = vsel %vm432, %v481, %v483
      %v485 = vrot.slane %v291, 1
      %v486 = vsel %vm432, %v483, %v485
      %v487 = vrot.slane %v292, 1
      %v488 = vrot.slane %v293, 1
      %v489 = vsel %vm432, %v487, %v488
      %v490 = vrot.slane %v294, 1
      %v491 = vsel %vm432, %v488, %v490
      %v492 = vrot.slane %v295, 1
      %v493 = vsel %vm432, %v490, %v492
      %v494 = vrot.slane %v296, 1
      %v495 = vsel %vm432, %v492, %v494
      %v496 = vrot.slane %v297, 1
      %v497 = vrot.slane %v298, 1
      %v498 = vsel %vm432, %v496, %v497
      %v499 = vrot.slane %v299, 1
      %v500 = vsel %vm432, %v497, %v499
      %v501 = vrot.slane %v300, 1
      %v502 = vsel %vm432, %v499, %v501
      %v503 = vrot.slane %v301, 1
      %v504 = vsel %vm432, %v501, %v503
      %v505 = vrot.slane %v302, 1
      %v506 = vrot.slane %v303, 1
      %v507 = vsel %vm432, %v505, %v506
      %v508 = vrot.slane %v304, 1
      %v509 = vsel %vm432, %v506, %v508
      %v510 = vrot.slane %v305, 1
      %v511 = vsel %vm432, %v508, %v510
      %v512 = vrot.slane %v306, 1
      %v513 = vsel %vm432, %v510, %v512
      %v514 = vrot.slane %v307, 1
      %v515 = vrot.slane %v308, 1
      %v516 = vsel %vm432, %v514, %v515
      %v517 = vrot.slane %v309, 1
      %v518 = vsel %vm432, %v515, %v517
      %v519 = vrot.slane %v310, 1
      %v520 = vsel %vm432, %v517, %v519
      %v521 = vrot.slane %v311, 1
      %v522 = vsel %vm432, %v519, %v521
      %v523 = vrot.slane %v312, 1
      %v524 = vrot.slane %v313, 1
      %v525 = vsel %vm432, %v523, %v524
      %v526 = vrot.slane %v314, 1
      %v527 = vsel %vm432, %v524, %v526
      %v528 = vrot.slane %v315, 1
      %v529 = vsel %vm432, %v526, %v528
      %v530 = vrot.slane %v316, 1
      %v531 = vsel %vm432, %v528, %v530
      %v532 = vrot.slane %v317, 1
      %v533 = vrot.slane %v318, 1
      %v534 = vsel %vm432, %v532, %v533
      %v535 = vrot.slane %v319, 1
      %v536 = vsel %vm432, %v533, %v535
      %v537 = vrot.slane %v320, 1
      %v538 = vsel %vm432, %v535, %v537
      %v539 = vrot.slane %v321, 1
      %v540 = vsel %vm432, %v537, %v539
      %v541 = vrot.slane %v322, 1
      %v542 = vrot.slane %v323, 1
      %v543 = vsel %vm432, %v541, %v542
      %v544 = vrot.slane %v324, 1
      %v545 = vsel %vm432, %v542, %v544
      %v546 = vrot.slane %v325, 1
      %v547 = vsel %vm432, %v544, %v546
      %v548 = vrot.slane %v326, 1
      %v549 = vsel %vm432, %v546, %v548
      %v550 = vrot.slane %v327, 1
      %v551 = vrot.slane %v328, 1
      %v552 = vsel %vm432, %v550, %v551
      %v553 = vrot.slane %v329, 1
      %v554 = vsel %vm432, %v551, %v553
      %v555 = vrot.slane %v330, 1
      %v556 = vsel %vm432, %v553, %v555
      %v557 = vrot.slane %v331, 1
      %v558 = vsel %vm432, %v555, %v557
      %v559 = vrot.slane %v332, 1
      %v560 = vrot.slane %v333, 1
      %v561 = vsel %vm432, %v559, %v560
      %v562 = vrot.slane %v334, 1
      %v563 = vsel %vm432, %v560, %v562
      %v564 = vrot.slane %v335, 1
      %v565 = vsel %vm432, %v562, %v564
      %v566 = vrot.slane %v336, 1
      %v567 = vsel %vm432, %v564, %v566
      %v568 = vrot.slane %v337, 1
      %v569 = vrot.slane %v338, 1
      %v570 = vsel %vm432, %v568, %v569
      %v571 = vrot.slane %v339, 1
      %v572 = vsel %vm432, %v569, %v571
      %v573 = vrot.slane %v340, 1
      %v574 = vsel %vm432, %v571, %v573
      %v575 = vrot.slane %v341, 1
      %v576 = vsel %vm432, %v573, %v575
      %vm577 = vcmask 1045504
      %v578 = vrot.slane %v262, 2
      %v579 = vrot.slane %v263, 2
      %v580 = vsel %vm577, %v578, %v579
      %v581 = vrot.slane %v264, 2
      %v582 = vsel %vm577, %v579, %v581
      %v583 = vrot.slane %v265, 2
      %v584 = vsel %vm577, %v581, %v583
      %v585 = vrot.slane %v266, 2
      %v586 = vsel %vm577, %v583, %v585
      %v587 = vrot.slane %v267, 2
      %v588 = vrot.slane %v268, 2
      %v589 = vsel %vm577, %v587, %v588
      %v590 = vrot.slane %v269, 2
      %v591 = vsel %vm577, %v588, %v590
      %v592 = vrot.slane %v270, 2
      %v593 = vsel %vm577, %v590, %v592
      %v594 = vrot.slane %v271, 2
      %v595 = vsel %vm577, %v592, %v594
      %v596 = vrot.slane %v272, 2
      %v597 = vrot.slane %v273, 2
      %v598 = vsel %vm577, %v596, %v597
      %v599 = vrot.slane %v274, 2
      %v600 = vsel %vm577, %v597, %v599
      %v601 = vrot.slane %v275, 2
      %v602 = vsel %vm577, %v599, %v601
      %v603 = vrot.slane %v276, 2
      %v604 = vsel %vm577, %v601, %v603
      %v605 = vrot.slane %v277, 2
      %v606 = vrot.slane %v278, 2
      %v607 = vsel %vm577, %v605, %v606
      %v608 = vrot.slane %v279, 2
      %v609 = vsel %vm577, %v606, %v608
      %v610 = vrot.slane %v280, 2
      %v611 = vsel %vm577, %v608, %v610
      %v612 = vrot.slane %v281, 2
      %v613 = vsel %vm577, %v610, %v612
      %v614 = vrot.slane %v282, 2
      %v615 = vrot.slane %v283, 2
      %v616 = vsel %vm577, %v614, %v615
      %v617 = vrot.slane %v284, 2
      %v618 = vsel %vm577, %v615, %v617
      %v619 = vrot.slane %v285, 2
      %v620 = vsel %vm577, %v617, %v619
      %v621 = vrot.slane %v286, 2
      %v622 = vsel %vm577, %v619, %v621
      %v623 = vrot.slane %v287, 2
      %v624 = vrot.slane %v288, 2
      %v625 = vsel %vm577, %v623, %v624
      %v626 = vrot.slane %v289, 2
      %v627 = vsel %vm577, %v624, %v626
      %v628 = vrot.slane %v290, 2
      %v629 = vsel %vm577, %v626, %v628
      %v630 = vrot.slane %v291, 2
      %v631 = vsel %vm577, %v628, %v630
      %v632 = vrot.slane %v292, 2
      %v633 = vrot.slane %v293, 2
      %v634 = vsel %vm577, %v632, %v633
      %v635 = vrot.slane %v294, 2
      %v636 = vsel %vm577, %v633, %v635
      %v637 = vrot.slane %v295, 2
      %v638 = vsel %vm577, %v635, %v637
      %v639 = vrot.slane %v296, 2
      %v640 = vsel %vm577, %v637, %v639
      %v641 = vrot.slane %v297, 2
      %v642 = vrot.slane %v298, 2
      %v643 = vsel %vm577, %v641, %v642
      %v644 = vrot.slane %v299, 2
      %v645 = vsel %vm577, %v642, %v644
      %v646 = vrot.slane %v300, 2
      %v647 = vsel %vm577, %v644, %v646
      %v648 = vrot.slane %v301, 2
      %v649 = vsel %vm577, %v646, %v648
      %v650 = vrot.slane %v302, 2
      %v651 = vrot.slane %v303, 2
      %v652 = vsel %vm577, %v650, %v651
      %v653 = vrot.slane %v304, 2
      %v654 = vsel %vm577, %v651, %v653
      %v655 = vrot.slane %v305, 2
      %v656 = vsel %vm577, %v653, %v655
      %v657 = vrot.slane %v306, 2
      %v658 = vsel %vm577, %v655, %v657
      %v659 = vrot.slane %v307, 2
      %v660 = vrot.slane %v308, 2
      %v661 = vsel %vm577, %v659, %v660
      %v662 = vrot.slane %v309, 2
      %v663 = vsel %vm577, %v660, %v662
      %v664 = vrot.slane %v310, 2
      %v665 = vsel %vm577, %v662, %v664
      %v666 = vrot.slane %v311, 2
      %v667 = vsel %vm577, %v664, %v666
      %v668 = vrot.slane %v312, 2
      %v669 = vrot.slane %v313, 2
      %v670 = vsel %vm577, %v668, %v669
      %v671 = vrot.slane %v314, 2
      %v672 = vsel %vm577, %v669, %v671
      %v673 = vrot.slane %v315, 2
      %v674 = vsel %vm577, %v671, %v673
      %v675 = vrot.slane %v316, 2
      %v676 = vsel %vm577, %v673, %v675
      %v677 = vrot.slane %v317, 2
      %v678 = vrot.slane %v318, 2
      %v679 = vsel %vm577, %v677, %v678
      %v680 = vrot.slane %v319, 2
      %v681 = vsel %vm577, %v678, %v680
      %v682 = vrot.slane %v320, 2
      %v683 = vsel %vm577, %v680, %v682
      %v684 = vrot.slane %v321, 2
      %v685 = vsel %vm577, %v682, %v684
      %v686 = vrot.slane %v322, 2
      %v687 = vrot.slane %v323, 2
      %v688 = vsel %vm577, %v686, %v687
      %v689 = vrot.slane %v324, 2
      %v690 = vsel %vm577, %v687, %v689
      %v691 = vrot.slane %v325, 2
      %v692 = vsel %vm577, %v689, %v691
      %v693 = vrot.slane %v326, 2
      %v694 = vsel %vm577, %v691, %v693
      %v695 = vrot.slane %v327, 2
      %v696 = vrot.slane %v328, 2
      %v697 = vsel %vm577, %v695, %v696
      %v698 = vrot.slane %v329, 2
      %v699 = vsel %vm577, %v696, %v698
      %v700 = vrot.slane %v330, 2
      %v701 = vsel %vm577, %v698, %v700
      %v702 = vrot.slane %v331, 2
      %v703 = vsel %vm577, %v700, %v702
      %v704 = vrot.slane %v332, 2
      %v705 = vrot.slane %v333, 2
      %v706 = vsel %vm577, %v704, %v705
      %v707 = vrot.slane %v334, 2
      %v708 = vsel %vm577, %v705, %v707
      %v709 = vrot.slane %v335, 2
      %v710 = vsel %vm577, %v707, %v709
      %v711 = vrot.slane %v336, 2
      %v712 = vsel %vm577, %v709, %v711
      %v713 = vrot.slane %v337, 2
      %v714 = vrot.slane %v338, 2
      %v715 = vsel %vm577, %v713, %v714
      %v716 = vrot.slane %v339, 2
      %v717 = vsel %vm577, %v714, %v716
      %v718 = vrot.slane %v340, 2
      %v719 = vsel %vm577, %v716, %v718
      %v720 = vrot.slane %v341, 2
      %v721 = vsel %vm577, %v718, %v720
      %v727 = vrot.slane %v342, 1
      %v728 = vrot.slane %v343, 1
      %v729 = vsel %vm432, %v727, %v728
      %v730 = vrot.slane %v344, 1
      %v731 = vsel %vm432, %v728, %v730
      %v732 = vrot.slane %v345, 1
      %v733 = vsel %vm432, %v730, %v732
      %v734 = vrot.slane %v346, 1
      %v735 = vsel %vm432, %v732, %v734
      %v736 = vrot.slane %v342, 2
      %v737 = vrot.slane %v343, 2
      %v738 = vsel %vm577, %v736, %v737
      %v739 = vrot.slane %v344, 2
      %v740 = vsel %vm577, %v737, %v739
      %v741 = vrot.slane %v345, 2
      %v742 = vsel %vm577, %v739, %v741
      %v743 = vrot.slane %v346, 2
      %v744 = vsel %vm577, %v741, %v743
      %v750 = vrot.slane %v347, 1
      %v751 = vrot.slane %v348, 1
      %v752 = vsel %vm432, %v750, %v751
      %v753 = vrot.slane %v349, 1
      %v754 = vsel %vm432, %v751, %v753
      %v755 = vrot.slane %v350, 1
      %v756 = vsel %vm432, %v753, %v755
      %v757 = vrot.slane %v351, 1
      %v758 = vsel %vm432, %v755, %v757
      %v759 = vrot.slane %v347, 2
      %v760 = vrot.slane %v348, 2
      %v761 = vsel %vm577, %v759, %v760
      %v762 = vrot.slane %v349, 2
      %v763 = vsel %vm577, %v760, %v762
      %v764 = vrot.slane %v350, 2
      %v765 = vsel %vm577, %v762, %v764
      %v766 = vrot.slane %v351, 2
      %v767 = vsel %vm577, %v764, %v766
      %768 = vrot.lane.b32.xlu0 %v435, 4
      %v769 = vpop.permute.xlu0 %768
      %770 = vrot.lane.b32.xlu0 %v437, 4
      %v771 = vpop.permute.xlu0 %770
      %772 = vrot.lane.b32.xlu0 %v439, 4
      %v773 = vpop.permute.xlu0 %772
      %774 = vrot.lane.b32.xlu0 %v441, 4
      %v775 = vpop.permute.xlu0 %774
      %776 = vrot.lane.b32.xlu0 %v444, 4
      %v777 = vpop.permute.xlu0 %776
      %778 = vrot.lane.b32.xlu0 %v446, 4
      %v779 = vpop.permute.xlu0 %778
      %780 = vrot.lane.b32.xlu0 %v448, 4
      %v781 = vpop.permute.xlu0 %780
      %782 = vrot.lane.b32.xlu0 %v450, 4
      %v783 = vpop.permute.xlu0 %782
      %784 = vrot.lane.b32.xlu0 %v453, 4
      %v785 = vpop.permute.xlu0 %784
      %786 = vrot.lane.b32.xlu0 %v455, 4
      %v787 = vpop.permute.xlu0 %786
      %788 = vrot.lane.b32.xlu0 %v457, 4
      %v789 = vpop.permute.xlu0 %788
      %790 = vrot.lane.b32.xlu0 %v459, 4
      %v791 = vpop.permute.xlu0 %790
      %792 = vrot.lane.b32.xlu0 %v462, 4
      %v793 = vpop.permute.xlu0 %792
      %794 = vrot.lane.b32.xlu0 %v464, 4
      %v795 = vpop.permute.xlu0 %794
      %796 = vrot.lane.b32.xlu0 %v466, 4
      %v797 = vpop.permute.xlu0 %796
      %798 = vrot.lane.b32.xlu0 %v468, 4
      %v799 = vpop.permute.xlu0 %798
      %800 = vrot.lane.b32.xlu0 %v471, 4
      %v801 = vpop.permute.xlu0 %800
      %802 = vrot.lane.b32.xlu0 %v473, 4
      %v803 = vpop.permute.xlu0 %802
      %804 = vrot.lane.b32.xlu0 %v475, 4
      %v805 = vpop.permute.xlu0 %804
      %806 = vrot.lane.b32.xlu0 %v477, 4
      %v807 = vpop.permute.xlu0 %806
      %808 = vrot.lane.b32.xlu0 %v480, 4
      %v809 = vpop.permute.xlu0 %808
      %810 = vrot.lane.b32.xlu0 %v482, 4
      %v811 = vpop.permute.xlu0 %810
      %812 = vrot.lane.b32.xlu0 %v484, 4
      %v813 = vpop.permute.xlu0 %812
      %814 = vrot.lane.b32.xlu0 %v486, 4
      %v815 = vpop.permute.xlu0 %814
      %816 = vrot.lane.b32.xlu0 %v489, 4
      %v817 = vpop.permute.xlu0 %816
      %818 = vrot.lane.b32.xlu0 %v491, 4
      %v819 = vpop.permute.xlu0 %818
      %820 = vrot.lane.b32.xlu0 %v493, 4
      %v821 = vpop.permute.xlu0 %820
      %822 = vrot.lane.b32.xlu0 %v495, 4
      %v823 = vpop.permute.xlu0 %822
      %824 = vrot.lane.b32.xlu0 %v498, 4
      %v825 = vpop.permute.xlu0 %824
      %826 = vrot.lane.b32.xlu0 %v500, 4
      %v827 = vpop.permute.xlu0 %826
      %828 = vrot.lane.b32.xlu0 %v502, 4
      %v829 = vpop.permute.xlu0 %828
      %830 = vrot.lane.b32.xlu0 %v504, 4
      %v831 = vpop.permute.xlu0 %830
      %832 = vrot.lane.b32.xlu0 %v507, 4
      %v833 = vpop.permute.xlu0 %832
      %834 = vrot.lane.b32.xlu0 %v509, 4
      %v835 = vpop.permute.xlu0 %834
      %836 = vrot.lane.b32.xlu0 %v511, 4
      %v837 = vpop.permute.xlu0 %836
      %838 = vrot.lane.b32.xlu0 %v513, 4
      %v839 = vpop.permute.xlu0 %838
      %840 = vrot.lane.b32.xlu0 %v516, 4
      %v841 = vpop.permute.xlu0 %840
      %842 = vrot.lane.b32.xlu0 %v518, 4
      %v843 = vpop.permute.xlu0 %842
      %844 = vrot.lane.b32.xlu0 %v520, 4
      %v845 = vpop.permute.xlu0 %844
      %846 = vrot.lane.b32.xlu0 %v522, 4
      %v847 = vpop.permute.xlu0 %846
      %848 = vrot.lane.b32.xlu0 %v525, 4
      %v849 = vpop.permute.xlu0 %848
      %850 = vrot.lane.b32.xlu0 %v527, 4
      %v851 = vpop.permute.xlu0 %850
      %852 = vrot.lane.b32.xlu0 %v529, 4
      %v853 = vpop.permute.xlu0 %852
      %854 = vrot.lane.b32.xlu0 %v531, 4
      %v855 = vpop.permute.xlu0 %854
      %856 = vrot.lane.b32.xlu0 %v534, 4
      %v857 = vpop.permute.xlu0 %856
      %858 = vrot.lane.b32.xlu0 %v536, 4
      %v859 = vpop.permute.xlu0 %858
      %860 = vrot.lane.b32.xlu0 %v538, 4
      %v861 = vpop.permute.xlu0 %860
      %862 = vrot.lane.b32.xlu0 %v540, 4
      %v863 = vpop.permute.xlu0 %862
      %864 = vrot.lane.b32.xlu0 %v543, 4
      %v865 = vpop.permute.xlu0 %864
      %866 = vrot.lane.b32.xlu0 %v545, 4
      %v867 = vpop.permute.xlu0 %866
      %868 = vrot.lane.b32.xlu0 %v547, 4
      %v869 = vpop.permute.xlu0 %868
      %870 = vrot.lane.b32.xlu0 %v549, 4
      %v871 = vpop.permute.xlu0 %870
      %872 = vrot.lane.b32.xlu0 %v552, 4
      %v873 = vpop.permute.xlu0 %872
      %874 = vrot.lane.b32.xlu0 %v554, 4
      %v875 = vpop.permute.xlu0 %874
      %876 = vrot.lane.b32.xlu0 %v556, 4
      %v877 = vpop.permute.xlu0 %876
      %878 = vrot.lane.b32.xlu0 %v558, 4
      %v879 = vpop.permute.xlu0 %878
      %880 = vrot.lane.b32.xlu0 %v561, 4
      %v881 = vpop.permute.xlu0 %880
      %882 = vrot.lane.b32.xlu0 %v563, 4
      %v883 = vpop.permute.xlu0 %882
      %884 = vrot.lane.b32.xlu0 %v565, 4
      %v885 = vpop.permute.xlu0 %884
      %886 = vrot.lane.b32.xlu0 %v567, 4
      %v887 = vpop.permute.xlu0 %886
      %888 = vrot.lane.b32.xlu0 %v570, 4
      %v889 = vpop.permute.xlu0 %888
      %890 = vrot.lane.b32.xlu0 %v572, 4
      %v891 = vpop.permute.xlu0 %890
      %892 = vrot.lane.b32.xlu0 %v574, 4
      %v893 = vpop.permute.xlu0 %892
      %894 = vrot.lane.b32.xlu0 %v576, 4
      %v895 = vpop.permute.xlu0 %894
      %960 = vrot.lane.b32.xlu0 %v580, 8
      %v961 = vpop.permute.xlu0 %960
      %962 = vrot.lane.b32.xlu0 %v582, 8
      %v963 = vpop.permute.xlu0 %962
      %964 = vrot.lane.b32.xlu0 %v584, 8
      %v965 = vpop.permute.xlu0 %964
      %966 = vrot.lane.b32.xlu0 %v586, 8
      %v967 = vpop.permute.xlu0 %966
      %968 = vrot.lane.b32.xlu0 %v589, 8
      %v969 = vpop.permute.xlu0 %968
      %970 = vrot.lane.b32.xlu0 %v591, 8
      %v971 = vpop.permute.xlu0 %970
      %972 = vrot.lane.b32.xlu0 %v593, 8
      %v973 = vpop.permute.xlu0 %972
      %974 = vrot.lane.b32.xlu0 %v595, 8
      %v975 = vpop.permute.xlu0 %974
      %976 = vrot.lane.b32.xlu0 %v598, 8
      %v977 = vpop.permute.xlu0 %976
      %978 = vrot.lane.b32.xlu0 %v600, 8
      %v979 = vpop.permute.xlu0 %978
      %980 = vrot.lane.b32.xlu0 %v602, 8
      %v981 = vpop.permute.xlu0 %980
      %982 = vrot.lane.b32.xlu0 %v604, 8
      %v983 = vpop.permute.xlu0 %982
      %984 = vrot.lane.b32.xlu0 %v607, 8
      %v985 = vpop.permute.xlu0 %984
      %986 = vrot.lane.b32.xlu0 %v609, 8
      %v987 = vpop.permute.xlu0 %986
      %988 = vrot.lane.b32.xlu0 %v611, 8
      %v989 = vpop.permute.xlu0 %988
      %990 = vrot.lane.b32.xlu0 %v613, 8
      %v991 = vpop.permute.xlu0 %990
      %992 = vrot.lane.b32.xlu0 %v616, 8
      %v993 = vpop.permute.xlu0 %992
      %994 = vrot.lane.b32.xlu0 %v618, 8
      %v995 = vpop.permute.xlu0 %994
      %996 = vrot.lane.b32.xlu0 %v620, 8
      %v997 = vpop.permute.xlu0 %996
      %998 = vrot.lane.b32.xlu0 %v622, 8
      %v999 = vpop.permute.xlu0 %998
      %1000 = vrot.lane.b32.xlu0 %v625, 8
      %v1001 = vpop.permute.xlu0 %1000
      %1002 = vrot.lane.b32.xlu0 %v627, 8
      %v1003 = vpop.permute.xlu0 %1002
      %1004 = vrot.lane.b32.xlu0 %v629, 8
      %v1005 = vpop.permute.xlu0 %1004
      %1006 = vrot.lane.b32.xlu0 %v631, 8
      %v1007 = vpop.permute.xlu0 %1006
      %1008 = vrot.lane.b32.xlu0 %v634, 8
      %v1009 = vpop.permute.xlu0 %1008
      %1010 = vrot.lane.b32.xlu0 %v636, 8
      %v1011 = vpop.permute.xlu0 %1010
      %1012 = vrot.lane.b32.xlu0 %v638, 8
      %v1013 = vpop.permute.xlu0 %1012
      %1014 = vrot.lane.b32.xlu0 %v640, 8
      %v1015 = vpop.permute.xlu0 %1014
      %1016 = vrot.lane.b32.xlu0 %v643, 8
      %v1017 = vpop.permute.xlu0 %1016
      %1018 = vrot.lane.b32.xlu0 %v645, 8
      %v1019 = vpop.permute.xlu0 %1018
      %1020 = vrot.lane.b32.xlu0 %v647, 8
      %v1021 = vpop.permute.xlu0 %1020
      %1022 = vrot.lane.b32.xlu0 %v649, 8
      %v1023 = vpop.permute.xlu0 %1022
      %1024 = vrot.lane.b32.xlu0 %v652, 8
      %v1025 = vpop.permute.xlu0 %1024
      %1026 = vrot.lane.b32.xlu0 %v654, 8
      %v1027 = vpop.permute.xlu0 %1026
      %1028 = vrot.lane.b32.xlu0 %v656, 8
      %v1029 = vpop.permute.xlu0 %1028
      %1030 = vrot.lane.b32.xlu0 %v658, 8
      %v1031 = vpop.permute.xlu0 %1030
      %1032 = vrot.lane.b32.xlu0 %v661, 8
      %v1033 = vpop.permute.xlu0 %1032
      %1034 = vrot.lane.b32.xlu0 %v663, 8
      %v1035 = vpop.permute.xlu0 %1034
      %1036 = vrot.lane.b32.xlu0 %v665, 8
      %v1037 = vpop.permute.xlu0 %1036
      %1038 = vrot.lane.b32.xlu0 %v667, 8
      %v1039 = vpop.permute.xlu0 %1038
      %1040 = vrot.lane.b32.xlu0 %v670, 8
      %v1041 = vpop.permute.xlu0 %1040
      %1042 = vrot.lane.b32.xlu0 %v672, 8
      %v1043 = vpop.permute.xlu0 %1042
      %1044 = vrot.lane.b32.xlu0 %v674, 8
      %v1045 = vpop.permute.xlu0 %1044
      %1046 = vrot.lane.b32.xlu0 %v676, 8
      %v1047 = vpop.permute.xlu0 %1046
      %1048 = vrot.lane.b32.xlu0 %v679, 8
      %v1049 = vpop.permute.xlu0 %1048
      %1050 = vrot.lane.b32.xlu0 %v681, 8
      %v1051 = vpop.permute.xlu0 %1050
      %1052 = vrot.lane.b32.xlu0 %v683, 8
      %v1053 = vpop.permute.xlu0 %1052
      %1054 = vrot.lane.b32.xlu0 %v685, 8
      %v1055 = vpop.permute.xlu0 %1054
      %1056 = vrot.lane.b32.xlu0 %v688, 8
      %v1057 = vpop.permute.xlu0 %1056
      %1058 = vrot.lane.b32.xlu0 %v690, 8
      %v1059 = vpop.permute.xlu0 %1058
      %1060 = vrot.lane.b32.xlu0 %v692, 8
      %v1061 = vpop.permute.xlu0 %1060
      %1062 = vrot.lane.b32.xlu0 %v694, 8
      %v1063 = vpop.permute.xlu0 %1062
      %1064 = vrot.lane.b32.xlu0 %v697, 8
      %v1065 = vpop.permute.xlu0 %1064
      %1066 = vrot.lane.b32.xlu0 %v699, 8
      %v1067 = vpop.permute.xlu0 %1066
      %1068 = vrot.lane.b32.xlu0 %v701, 8
      %v1069 = vpop.permute.xlu0 %1068
      %1070 = vrot.lane.b32.xlu0 %v703, 8
      %v1071 = vpop.permute.xlu0 %1070
      %1072 = vrot.lane.b32.xlu0 %v706, 8
      %v1073 = vpop.permute.xlu0 %1072
      %1074 = vrot.lane.b32.xlu0 %v708, 8
      %v1075 = vpop.permute.xlu0 %1074
      %1076 = vrot.lane.b32.xlu0 %v710, 8
      %v1077 = vpop.permute.xlu0 %1076
      %1078 = vrot.lane.b32.xlu0 %v712, 8
      %v1079 = vpop.permute.xlu0 %1078
      %1080 = vrot.lane.b32.xlu0 %v715, 8
      %v1081 = vpop.permute.xlu0 %1080
      %1082 = vrot.lane.b32.xlu0 %v717, 8
      %v1083 = vpop.permute.xlu0 %1082
      %1084 = vrot.lane.b32.xlu0 %v719, 8
      %v1085 = vpop.permute.xlu0 %1084
      %1086 = vrot.lane.b32.xlu0 %v721, 8
      %v1087 = vpop.permute.xlu0 %1086
      %1152 = vrot.lane.b32.xlu0 %v267, 12
      %v1153 = vpop.permute.xlu0 %1152
      %1154 = vrot.lane.b32.xlu0 %v268, 12
      %v1155 = vpop.permute.xlu0 %1154
      %1156 = vrot.lane.b32.xlu0 %v269, 12
      %v1157 = vpop.permute.xlu0 %1156
      %1158 = vrot.lane.b32.xlu0 %v270, 12
      %v1159 = vpop.permute.xlu0 %1158
      %1160 = vrot.lane.b32.xlu0 %v272, 12
      %v1161 = vpop.permute.xlu0 %1160
      %1162 = vrot.lane.b32.xlu0 %v273, 12
      %v1163 = vpop.permute.xlu0 %1162
      %1164 = vrot.lane.b32.xlu0 %v274, 12
      %v1165 = vpop.permute.xlu0 %1164
      %1166 = vrot.lane.b32.xlu0 %v275, 12
      %v1167 = vpop.permute.xlu0 %1166
      %1168 = vrot.lane.b32.xlu0 %v277, 12
      %v1169 = vpop.permute.xlu0 %1168
      %1170 = vrot.lane.b32.xlu0 %v278, 12
      %v1171 = vpop.permute.xlu0 %1170
      %1172 = vrot.lane.b32.xlu0 %v279, 12
      %v1173 = vpop.permute.xlu0 %1172
      %1174 = vrot.lane.b32.xlu0 %v280, 12
      %v1175 = vpop.permute.xlu0 %1174
      %1176 = vrot.lane.b32.xlu0 %v282, 12
      %v1177 = vpop.permute.xlu0 %1176
      %1178 = vrot.lane.b32.xlu0 %v283, 12
      %v1179 = vpop.permute.xlu0 %1178
      %1180 = vrot.lane.b32.xlu0 %v284, 12
      %v1181 = vpop.permute.xlu0 %1180
      %1182 = vrot.lane.b32.xlu0 %v285, 12
      %v1183 = vpop.permute.xlu0 %1182
      %1184 = vrot.lane.b32.xlu0 %v287, 12
      %v1185 = vpop.permute.xlu0 %1184
      %1186 = vrot.lane.b32.xlu0 %v288, 12
      %v1187 = vpop.permute.xlu0 %1186
      %1188 = vrot.lane.b32.xlu0 %v289, 12
      %v1189 = vpop.permute.xlu0 %1188
      %1190 = vrot.lane.b32.xlu0 %v290, 12
      %v1191 = vpop.permute.xlu0 %1190
      %1192 = vrot.lane.b32.xlu0 %v292, 12
      %v1193 = vpop.permute.xlu0 %1192
      %1194 = vrot.lane.b32.xlu0 %v293, 12
      %v1195 = vpop.permute.xlu0 %1194
      %1196 = vrot.lane.b32.xlu0 %v294, 12
      %v1197 = vpop.permute.xlu0 %1196
      %1198 = vrot.lane.b32.xlu0 %v295, 12
      %v1199 = vpop.permute.xlu0 %1198
      %1200 = vrot.lane.b32.xlu0 %v297, 12
      %v1201 = vpop.permute.xlu0 %1200
      %1202 = vrot.lane.b32.xlu0 %v298, 12
      %v1203 = vpop.permute.xlu0 %1202
      %1204 = vrot.lane.b32.xlu0 %v299, 12
      %v1205 = vpop.permute.xlu0 %1204
      %1206 = vrot.lane.b32.xlu0 %v300, 12
      %v1207 = vpop.permute.xlu0 %1206
      %1208 = vrot.lane.b32.xlu0 %v302, 12
      %v1209 = vpop.permute.xlu0 %1208
      %1210 = vrot.lane.b32.xlu0 %v303, 12
      %v1211 = vpop.permute.xlu0 %1210
      %1212 = vrot.lane.b32.xlu0 %v304, 12
      %v1213 = vpop.permute.xlu0 %1212
      %1214 = vrot.lane.b32.xlu0 %v305, 12
      %v1215 = vpop.permute.xlu0 %1214
      %1216 = vrot.lane.b32.xlu0 %v307, 12
      %v1217 = vpop.permute.xlu0 %1216
      %1218 = vrot.lane.b32.xlu0 %v308, 12
      %v1219 = vpop.permute.xlu0 %1218
      %1220 = vrot.lane.b32.xlu0 %v309, 12
      %v1221 = vpop.permute.xlu0 %1220
      %1222 = vrot.lane.b32.xlu0 %v310, 12
      %v1223 = vpop.permute.xlu0 %1222
      %1224 = vrot.lane.b32.xlu0 %v312, 12
      %v1225 = vpop.permute.xlu0 %1224
      %1226 = vrot.lane.b32.xlu0 %v313, 12
      %v1227 = vpop.permute.xlu0 %1226
      %1228 = vrot.lane.b32.xlu0 %v314, 12
      %v1229 = vpop.permute.xlu0 %1228
      %1230 = vrot.lane.b32.xlu0 %v315, 12
      %v1231 = vpop.permute.xlu0 %1230
      %1232 = vrot.lane.b32.xlu0 %v317, 12
      %v1233 = vpop.permute.xlu0 %1232
      %1234 = vrot.lane.b32.xlu0 %v318, 12
      %v1235 = vpop.permute.xlu0 %1234
      %1236 = vrot.lane.b32.xlu0 %v319, 12
      %v1237 = vpop.permute.xlu0 %1236
      %1238 = vrot.lane.b32.xlu0 %v320, 12
      %v1239 = vpop.permute.xlu0 %1238
      %1240 = vrot.lane.b32.xlu0 %v322, 12
      %v1241 = vpop.permute.xlu0 %1240
      %1242 = vrot.lane.b32.xlu0 %v323, 12
      %v1243 = vpop.permute.xlu0 %1242
      %1244 = vrot.lane.b32.xlu0 %v324, 12
      %v1245 = vpop.permute.xlu0 %1244
      %1246 = vrot.lane.b32.xlu0 %v325, 12
      %v1247 = vpop.permute.xlu0 %1246
      %1248 = vrot.lane.b32.xlu0 %v327, 12
      %v1249 = vpop.permute.xlu0 %1248
      %1250 = vrot.lane.b32.xlu0 %v328, 12
      %v1251 = vpop.permute.xlu0 %1250
      %1252 = vrot.lane.b32.xlu0 %v329, 12
      %v1253 = vpop.permute.xlu0 %1252
      %1254 = vrot.lane.b32.xlu0 %v330, 12
      %v1255 = vpop.permute.xlu0 %1254
      %1256 = vrot.lane.b32.xlu0 %v332, 12
      %v1257 = vpop.permute.xlu0 %1256
      %1258 = vrot.lane.b32.xlu0 %v333, 12
      %v1259 = vpop.permute.xlu0 %1258
      %1260 = vrot.lane.b32.xlu0 %v334, 12
      %v1261 = vpop.permute.xlu0 %1260
      %1262 = vrot.lane.b32.xlu0 %v335, 12
      %v1263 = vpop.permute.xlu0 %1262
      %1264 = vrot.lane.b32.xlu0 %v337, 12
      %v1265 = vpop.permute.xlu0 %1264
      %1266 = vrot.lane.b32.xlu0 %v338, 12
      %v1267 = vpop.permute.xlu0 %1266
      %1268 = vrot.lane.b32.xlu0 %v339, 12
      %v1269 = vpop.permute.xlu0 %1268
      %1270 = vrot.lane.b32.xlu0 %v340, 12
      %v1271 = vpop.permute.xlu0 %1270
      %1272 = vrot.lane.b32.xlu0 %v342, 12
      %v1273 = vpop.permute.xlu0 %1272
      %1274 = vrot.lane.b32.xlu0 %v343, 12
      %v1275 = vpop.permute.xlu0 %1274
      %1276 = vrot.lane.b32.xlu0 %v344, 12
      %v1277 = vpop.permute.xlu0 %1276
      %1278 = vrot.lane.b32.xlu0 %v345, 12
      %v1279 = vpop.permute.xlu0 %1278
      %1344 = vrot.lane.b32.xlu0 %v444, 16
      %v1345 = vpop.permute.xlu0 %1344
      %1346 = vrot.lane.b32.xlu0 %v446, 16
      %v1347 = vpop.permute.xlu0 %1346
      %1348 = vrot.lane.b32.xlu0 %v448, 16
      %v1349 = vpop.permute.xlu0 %1348
      %1350 = vrot.lane.b32.xlu0 %v450, 16
      %v1351 = vpop.permute.xlu0 %1350
      %1352 = vrot.lane.b32.xlu0 %v453, 16
      %v1353 = vpop.permute.xlu0 %1352
      %1354 = vrot.lane.b32.xlu0 %v455, 16
      %v1355 = vpop.permute.xlu0 %1354
      %1356 = vrot.lane.b32.xlu0 %v457, 16
      %v1357 = vpop.permute.xlu0 %1356
      %1358 = vrot.lane.b32.xlu0 %v459, 16
      %v1359 = vpop.permute.xlu0 %1358
      %1360 = vrot.lane.b32.xlu0 %v462, 16
      %v1361 = vpop.permute.xlu0 %1360
      %1362 = vrot.lane.b32.xlu0 %v464, 16
      %v1363 = vpop.permute.xlu0 %1362
      %1364 = vrot.lane.b32.xlu0 %v466, 16
      %v1365 = vpop.permute.xlu0 %1364
      %1366 = vrot.lane.b32.xlu0 %v468, 16
      %v1367 = vpop.permute.xlu0 %1366
      %1368 = vrot.lane.b32.xlu0 %v471, 16
      %v1369 = vpop.permute.xlu0 %1368
      %1370 = vrot.lane.b32.xlu0 %v473, 16
      %v1371 = vpop.permute.xlu0 %1370
      %1372 = vrot.lane.b32.xlu0 %v475, 16
      %v1373 = vpop.permute.xlu0 %1372
      %1374 = vrot.lane.b32.xlu0 %v477, 16
      %v1375 = vpop.permute.xlu0 %1374
      %1376 = vrot.lane.b32.xlu0 %v480, 16
      %v1377 = vpop.permute.xlu0 %1376
      %1378 = vrot.lane.b32.xlu0 %v482, 16
      %v1379 = vpop.permute.xlu0 %1378
      %1380 = vrot.lane.b32.xlu0 %v484, 16
      %v1381 = vpop.permute.xlu0 %1380
      %1382 = vrot.lane.b32.xlu0 %v486, 16
      %v1383 = vpop.permute.xlu0 %1382
      %1384 = vrot.lane.b32.xlu0 %v489, 16
      %v1385 = vpop.permute.xlu0 %1384
      %1386 = vrot.lane.b32.xlu0 %v491, 16
      %v1387 = vpop.permute.xlu0 %1386
      %1388 = vrot.lane.b32.xlu0 %v493, 16
      %v1389 = vpop.permute.xlu0 %1388
      %1390 = vrot.lane.b32.xlu0 %v495, 16
      %v1391 = vpop.permute.xlu0 %1390
      %1392 = vrot.lane.b32.xlu0 %v498, 16
      %v1393 = vpop.permute.xlu0 %1392
      %1394 = vrot.lane.b32.xlu0 %v500, 16
      %v1395 = vpop.permute.xlu0 %1394
      %1396 = vrot.lane.b32.xlu0 %v502, 16
      %v1397 = vpop.permute.xlu0 %1396
      %1398 = vrot.lane.b32.xlu0 %v504, 16
      %v1399 = vpop.permute.xlu0 %1398
      %1400 = vrot.lane.b32.xlu0 %v507, 16
      %v1401 = vpop.permute.xlu0 %1400
      %1402 = vrot.lane.b32.xlu0 %v509, 16
      %v1403 = vpop.permute.xlu0 %1402
      %1404 = vrot.lane.b32.xlu0 %v511, 16
      %v1405 = vpop.permute.xlu0 %1404
      %1406 = vrot.lane.b32.xlu0 %v513, 16
      %v1407 = vpop.permute.xlu0 %1406
      %1408 = vrot.lane.b32.xlu0 %v516, 16
      %v1409 = vpop.permute.xlu0 %1408
      %1410 = vrot.lane.b32.xlu0 %v518, 16
      %v1411 = vpop.permute.xlu0 %1410
      %1412 = vrot.lane.b32.xlu0 %v520, 16
      %v1413 = vpop.permute.xlu0 %1412
      %1414 = vrot.lane.b32.xlu0 %v522, 16
      %v1415 = vpop.permute.xlu0 %1414
      %1416 = vrot.lane.b32.xlu0 %v525, 16
      %v1417 = vpop.permute.xlu0 %1416
      %1418 = vrot.lane.b32.xlu0 %v527, 16
      %v1419 = vpop.permute.xlu0 %1418
      %1420 = vrot.lane.b32.xlu0 %v529, 16
      %v1421 = vpop.permute.xlu0 %1420
      %1422 = vrot.lane.b32.xlu0 %v531, 16
      %v1423 = vpop.permute.xlu0 %1422
      %1424 = vrot.lane.b32.xlu0 %v534, 16
      %v1425 = vpop.permute.xlu0 %1424
      %1426 = vrot.lane.b32.xlu0 %v536, 16
      %v1427 = vpop.permute.xlu0 %1426
      %1428 = vrot.lane.b32.xlu0 %v538, 16
      %v1429 = vpop.permute.xlu0 %1428
      %1430 = vrot.lane.b32.xlu0 %v540, 16
      %v1431 = vpop.permute.xlu0 %1430
      %1432 = vrot.lane.b32.xlu0 %v543, 16
      %v1433 = vpop.permute.xlu0 %1432
      %1434 = vrot.lane.b32.xlu0 %v545, 16
      %v1435 = vpop.permute.xlu0 %1434
      %1436 = vrot.lane.b32.xlu0 %v547, 16
      %v1437 = vpop.permute.xlu0 %1436
      %1438 = vrot.lane.b32.xlu0 %v549, 16
      %v1439 = vpop.permute.xlu0 %1438
      %1440 = vrot.lane.b32.xlu0 %v552, 16
      %v1441 = vpop.permute.xlu0 %1440
      %1442 = vrot.lane.b32.xlu0 %v554, 16
      %v1443 = vpop.permute.xlu0 %1442
      %1444 = vrot.lane.b32.xlu0 %v556, 16
      %v1445 = vpop.permute.xlu0 %1444
      %1446 = vrot.lane.b32.xlu0 %v558, 16
      %v1447 = vpop.permute.xlu0 %1446
      %1448 = vrot.lane.b32.xlu0 %v561, 16
      %v1449 = vpop.permute.xlu0 %1448
      %1450 = vrot.lane.b32.xlu0 %v563, 16
      %v1451 = vpop.permute.xlu0 %1450
      %1452 = vrot.lane.b32.xlu0 %v565, 16
      %v1453 = vpop.permute.xlu0 %1452
      %1454 = vrot.lane.b32.xlu0 %v567, 16
      %v1455 = vpop.permute.xlu0 %1454
      %1456 = vrot.lane.b32.xlu0 %v570, 16
      %v1457 = vpop.permute.xlu0 %1456
      %1458 = vrot.lane.b32.xlu0 %v572, 16
      %v1459 = vpop.permute.xlu0 %1458
      %1460 = vrot.lane.b32.xlu0 %v574, 16
      %v1461 = vpop.permute.xlu0 %1460
      %1462 = vrot.lane.b32.xlu0 %v576, 16
      %v1463 = vpop.permute.xlu0 %1462
      %1464 = vrot.lane.b32.xlu0 %v729, 16
      %v1465 = vpop.permute.xlu0 %1464
      %1466 = vrot.lane.b32.xlu0 %v731, 16
      %v1467 = vpop.permute.xlu0 %1466
      %1468 = vrot.lane.b32.xlu0 %v733, 16
      %v1469 = vpop.permute.xlu0 %1468
      %1470 = vrot.lane.b32.xlu0 %v735, 16
      %v1471 = vpop.permute.xlu0 %1470
      %1536 = vrot.lane.b32.xlu0 %v589, 20
      %v1537 = vpop.permute.xlu0 %1536
      %1538 = vrot.lane.b32.xlu0 %v591, 20
      %v1539 = vpop.permute.xlu0 %1538
      %1540 = vrot.lane.b32.xlu0 %v593, 20
      %v1541 = vpop.permute.xlu0 %1540
      %1542 = vrot.lane.b32.xlu0 %v595, 20
      %v1543 = vpop.permute.xlu0 %1542
      %1544 = vrot.lane.b32.xlu0 %v598, 20
      %v1545 = vpop.permute.xlu0 %1544
      %1546 = vrot.lane.b32.xlu0 %v600, 20
      %v1547 = vpop.permute.xlu0 %1546
      %1548 = vrot.lane.b32.xlu0 %v602, 20
      %v1549 = vpop.permute.xlu0 %1548
      %1550 = vrot.lane.b32.xlu0 %v604, 20
      %v1551 = vpop.permute.xlu0 %1550
      %1552 = vrot.lane.b32.xlu0 %v607, 20
      %v1553 = vpop.permute.xlu0 %1552
      %1554 = vrot.lane.b32.xlu0 %v609, 20
      %v1555 = vpop.permute.xlu0 %1554
      %1556 = vrot.lane.b32.xlu0 %v611, 20
      %v1557 = vpop.permute.xlu0 %1556
      %1558 = vrot.lane.b32.xlu0 %v613, 20
      %v1559 = vpop.permute.xlu0 %1558
      %1560 = vrot.lane.b32.xlu0 %v616, 20
      %v1561 = vpop.permute.xlu0 %1560
      %1562 = vrot.lane.b32.xlu0 %v618, 20
      %v1563 = vpop.permute.xlu0 %1562
      %1564 = vrot.lane.b32.xlu0 %v620, 20
      %v1565 = vpop.permute.xlu0 %1564
      %1566 = vrot.lane.b32.xlu0 %v622, 20
      %v1567 = vpop.permute.xlu0 %1566
      %1568 = vrot.lane.b32.xlu0 %v625, 20
      %v1569 = vpop.permute.xlu0 %1568
      %1570 = vrot.lane.b32.xlu0 %v627, 20
      %v1571 = vpop.permute.xlu0 %1570
      %1572 = vrot.lane.b32.xlu0 %v629, 20
      %v1573 = vpop.permute.xlu0 %1572
      %1574 = vrot.lane.b32.xlu0 %v631, 20
      %v1575 = vpop.permute.xlu0 %1574
      %1576 = vrot.lane.b32.xlu0 %v634, 20
      %v1577 = vpop.permute.xlu0 %1576
      %1578 = vrot.lane.b32.xlu0 %v636, 20
      %v1579 = vpop.permute.xlu0 %1578
      %1580 = vrot.lane.b32.xlu0 %v638, 20
      %v1581 = vpop.permute.xlu0 %1580
      %1582 = vrot.lane.b32.xlu0 %v640, 20
      %v1583 = vpop.permute.xlu0 %1582
      %1584 = vrot.lane.b32.xlu0 %v643, 20
      %v1585 = vpop.permute.xlu0 %1584
      %1586 = vrot.lane.b32.xlu0 %v645, 20
      %v1587 = vpop.permute.xlu0 %1586
      %1588 = vrot.lane.b32.xlu0 %v647, 20
      %v1589 = vpop.permute.xlu0 %1588
      %1590 = vrot.lane.b32.xlu0 %v649, 20
      %v1591 = vpop.permute.xlu0 %1590
      %1592 = vrot.lane.b32.xlu0 %v652, 20
      %v1593 = vpop.permute.xlu0 %1592
      %1594 = vrot.lane.b32.xlu0 %v654, 20
      %v1595 = vpop.permute.xlu0 %1594
      %1596 = vrot.lane.b32.xlu0 %v656, 20
      %v1597 = vpop.permute.xlu0 %1596
      %1598 = vrot.lane.b32.xlu0 %v658, 20
      %v1599 = vpop.permute.xlu0 %1598
      %1600 = vrot.lane.b32.xlu0 %v661, 20
      %v1601 = vpop.permute.xlu0 %1600
      %1602 = vrot.lane.b32.xlu0 %v663, 20
      %v1603 = vpop.permute.xlu0 %1602
      %1604 = vrot.lane.b32.xlu0 %v665, 20
      %v1605 = vpop.permute.xlu0 %1604
      %1606 = vrot.lane.b32.xlu0 %v667, 20
      %v1607 = vpop.permute.xlu0 %1606
      %1608 = vrot.lane.b32.xlu0 %v670, 20
      %v1609 = vpop.permute.xlu0 %1608
      %1610 = vrot.lane.b32.xlu0 %v672, 20
      %v1611 = vpop.permute.xlu0 %1610
      %1612 = vrot.lane.b32.xlu0 %v674, 20
      %v1613 = vpop.permute.xlu0 %1612
      %1614 = vrot.lane.b32.xlu0 %v676, 20
      %v1615 = vpop.permute.xlu0 %1614
      %1616 = vrot.lane.b32.xlu0 %v679, 20
      %v1617 = vpop.permute.xlu0 %1616
      %1618 = vrot.lane.b32.xlu0 %v681, 20
      %v1619 = vpop.permute.xlu0 %1618
      %1620 = vrot.lane.b32.xlu0 %v683, 20
      %v1621 = vpop.permute.xlu0 %1620
      %1622 = vrot.lane.b32.xlu0 %v685, 20
      %v1623 = vpop.permute.xlu0 %1622
      %1624 = vrot.lane.b32.xlu0 %v688, 20
      %v1625 = vpop.permute.xlu0 %1624
      %1626 = vrot.lane.b32.xlu0 %v690, 20
      %v1627 = vpop.permute.xlu0 %1626
      %1628 = vrot.lane.b32.xlu0 %v692, 20
      %v1629 = vpop.permute.xlu0 %1628
      %1630 = vrot.lane.b32.xlu0 %v694, 20
      %v1631 = vpop.permute.xlu0 %1630
      %1632 = vrot.lane.b32.xlu0 %v697, 20
      %v1633 = vpop.permute.xlu0 %1632
      %1634 = vrot.lane.b32.xlu0 %v699, 20
      %v1635 = vpop.permute.xlu0 %1634
      %1636 = vrot.lane.b32.xlu0 %v701, 20
      %v1637 = vpop.permute.xlu0 %1636
      %1638 = vrot.lane.b32.xlu0 %v703, 20
      %v1639 = vpop.permute.xlu0 %1638
      %1640 = vrot.lane.b32.xlu0 %v706, 20
      %v1641 = vpop.permute.xlu0 %1640
      %1642 = vrot.lane.b32.xlu0 %v708, 20
      %v1643 = vpop.permute.xlu0 %1642
      %1644 = vrot.lane.b32.xlu0 %v710, 20
      %v1645 = vpop.permute.xlu0 %1644
      %1646 = vrot.lane.b32.xlu0 %v712, 20
      %v1647 = vpop.permute.xlu0 %1646
      %1648 = vrot.lane.b32.xlu0 %v715, 20
      %v1649 = vpop.permute.xlu0 %1648
      %1650 = vrot.lane.b32.xlu0 %v717, 20
      %v1651 = vpop.permute.xlu0 %1650
      %1652 = vrot.lane.b32.xlu0 %v719, 20
      %v1653 = vpop.permute.xlu0 %1652
      %1654 = vrot.lane.b32.xlu0 %v721, 20
      %v1655 = vpop.permute.xlu0 %1654
      %1656 = vrot.lane.b32.xlu0 %v738, 20
      %v1657 = vpop.permute.xlu0 %1656
      %1658 = vrot.lane.b32.xlu0 %v740, 20
      %v1659 = vpop.permute.xlu0 %1658
      %1660 = vrot.lane.b32.xlu0 %v742, 20
      %v1661 = vpop.permute.xlu0 %1660
      %1662 = vrot.lane.b32.xlu0 %v744, 20
      %v1663 = vpop.permute.xlu0 %1662
      %1728 = vrot.lane.b32.xlu0 %v272, 24
      %v1729 = vpop.permute.xlu0 %1728
      %1730 = vrot.lane.b32.xlu0 %v273, 24
      %v1731 = vpop.permute.xlu0 %1730
      %1732 = vrot.lane.b32.xlu0 %v274, 24
      %v1733 = vpop.permute.xlu0 %1732
      %1734 = vrot.lane.b32.xlu0 %v275, 24
      %v1735 = vpop.permute.xlu0 %1734
      %1736 = vrot.lane.b32.xlu0 %v277, 24
      %v1737 = vpop.permute.xlu0 %1736
      %1738 = vrot.lane.b32.xlu0 %v278, 24
      %v1739 = vpop.permute.xlu0 %1738
      %1740 = vrot.lane.b32.xlu0 %v279, 24
      %v1741 = vpop.permute.xlu0 %1740
      %1742 = vrot.lane.b32.xlu0 %v280, 24
      %v1743 = vpop.permute.xlu0 %1742
      %1744 = vrot.lane.b32.xlu0 %v282, 24
      %v1745 = vpop.permute.xlu0 %1744
      %1746 = vrot.lane.b32.xlu0 %v283, 24
      %v1747 = vpop.permute.xlu0 %1746
      %1748 = vrot.lane.b32.xlu0 %v284, 24
      %v1749 = vpop.permute.xlu0 %1748
      %1750 = vrot.lane.b32.xlu0 %v285, 24
      %v1751 = vpop.permute.xlu0 %1750
      %1752 = vrot.lane.b32.xlu0 %v287, 24
      %v1753 = vpop.permute.xlu0 %1752
      %1754 = vrot.lane.b32.xlu0 %v288, 24
      %v1755 = vpop.permute.xlu0 %1754
      %1756 = vrot.lane.b32.xlu0 %v289, 24
      %v1757 = vpop.permute.xlu0 %1756
      %1758 = vrot.lane.b32.xlu0 %v290, 24
      %v1759 = vpop.permute.xlu0 %1758
      %1760 = vrot.lane.b32.xlu0 %v292, 24
      %v1761 = vpop.permute.xlu0 %1760
      %1762 = vrot.lane.b32.xlu0 %v293, 24
      %v1763 = vpop.permute.xlu0 %1762
      %1764 = vrot.lane.b32.xlu0 %v294, 24
      %v1765 = vpop.permute.xlu0 %1764
      %1766 = vrot.lane.b32.xlu0 %v295, 24
      %v1767 = vpop.permute.xlu0 %1766
      %1768 = vrot.lane.b32.xlu0 %v297, 24
      %v1769 = vpop.permute.xlu0 %1768
      %1770 = vrot.lane.b32.xlu0 %v298, 24
      %v1771 = vpop.permute.xlu0 %1770
      %1772 = vrot.lane.b32.xlu0 %v299, 24
      %v1773 = vpop.permute.xlu0 %1772
      %1774 = vrot.lane.b32.xlu0 %v300, 24
      %v1775 = vpop.permute.xlu0 %1774
      %1776 = vrot.lane.b32.xlu0 %v302, 24
      %v1777 = vpop.permute.xlu0 %1776
      %1778 = vrot.lane.b32.xlu0 %v303, 24
      %v1779 = vpop.permute.xlu0 %1778
      %1780 = vrot.lane.b32.xlu0 %v304, 24
      %v1781 = vpop.permute.xlu0 %1780
      %1782 = vrot.lane.b32.xlu0 %v305, 24
      %v1783 = vpop.permute.xlu0 %1782
      %1784 = vrot.lane.b32.xlu0 %v307, 24
      %v1785 = vpop.permute.xlu0 %1784
      %1786 = vrot.lane.b32.xlu0 %v308, 24
      %v1787 = vpop.permute.xlu0 %1786
      %1788 = vrot.lane.b32.xlu0 %v309, 24
      %v1789 = vpop.permute.xlu0 %1788
      %1790 = vrot.lane.b32.xlu0 %v310, 24
      %v1791 = vpop.permute.xlu0 %1790
      %1792 = vrot.lane.b32.xlu0 %v312, 24
      %v1793 = vpop.permute.xlu0 %1792
      %1794 = vrot.lane.b32.xlu0 %v313, 24
      %v1795 = vpop.permute.xlu0 %1794
      %1796 = vrot.lane.b32.xlu0 %v314, 24
      %v1797 = vpop.permute.xlu0 %1796
      %1798 = vrot.lane.b32.xlu0 %v315, 24
      %v1799 = vpop.permute.xlu0 %1798
      %1800 = vrot.lane.b32.xlu0 %v317, 24
      %v1801 = vpop.permute.xlu0 %1800
      %1802 = vrot.lane.b32.xlu0 %v318, 24
      %v1803 = vpop.permute.xlu0 %1802
      %1804 = vrot.lane.b32.xlu0 %v319, 24
      %v1805 = vpop.permute.xlu0 %1804
      %1806 = vrot.lane.b32.xlu0 %v320, 24
      %v1807 = vpop.permute.xlu0 %1806
      %1808 = vrot.lane.b32.xlu0 %v322, 24
      %v1809 = vpop.permute.xlu0 %1808
      %1810 = vrot.lane.b32.xlu0 %v323, 24
      %v1811 = vpop.permute.xlu0 %1810
      %1812 = vrot.lane.b32.xlu0 %v324, 24
      %v1813 = vpop.permute.xlu0 %1812
      %1814 = vrot.lane.b32.xlu0 %v325, 24
      %v1815 = vpop.permute.xlu0 %1814
      %1816 = vrot.lane.b32.xlu0 %v327, 24
      %v1817 = vpop.permute.xlu0 %1816
      %1818 = vrot.lane.b32.xlu0 %v328, 24
      %v1819 = vpop.permute.xlu0 %1818
      %1820 = vrot.lane.b32.xlu0 %v329, 24
      %v1821 = vpop.permute.xlu0 %1820
      %1822 = vrot.lane.b32.xlu0 %v330, 24
      %v1823 = vpop.permute.xlu0 %1822
      %1824 = vrot.lane.b32.xlu0 %v332, 24
      %v1825 = vpop.permute.xlu0 %1824
      %1826 = vrot.lane.b32.xlu0 %v333, 24
      %v1827 = vpop.permute.xlu0 %1826
      %1828 = vrot.lane.b32.xlu0 %v334, 24
      %v1829 = vpop.permute.xlu0 %1828
      %1830 = vrot.lane.b32.xlu0 %v335, 24
      %v1831 = vpop.permute.xlu0 %1830
      %1832 = vrot.lane.b32.xlu0 %v337, 24
      %v1833 = vpop.permute.xlu0 %1832
      %1834 = vrot.lane.b32.xlu0 %v338, 24
      %v1835 = vpop.permute.xlu0 %1834
      %1836 = vrot.lane.b32.xlu0 %v339, 24
      %v1837 = vpop.permute.xlu0 %1836
      %1838 = vrot.lane.b32.xlu0 %v340, 24
      %v1839 = vpop.permute.xlu0 %1838
      %1840 = vrot.lane.b32.xlu0 %v342, 24
      %v1841 = vpop.permute.xlu0 %1840
      %1842 = vrot.lane.b32.xlu0 %v343, 24
      %v1843 = vpop.permute.xlu0 %1842
      %1844 = vrot.lane.b32.xlu0 %v344, 24
      %v1845 = vpop.permute.xlu0 %1844
      %1846 = vrot.lane.b32.xlu0 %v345, 24
      %v1847 = vpop.permute.xlu0 %1846
      %1848 = vrot.lane.b32.xlu0 %v347, 24
      %v1849 = vpop.permute.xlu0 %1848
      %1850 = vrot.lane.b32.xlu0 %v348, 24
      %v1851 = vpop.permute.xlu0 %1850
      %1852 = vrot.lane.b32.xlu0 %v349, 24
      %v1853 = vpop.permute.xlu0 %1852
      %1854 = vrot.lane.b32.xlu0 %v350, 24
      %v1855 = vpop.permute.xlu0 %1854
      %1920 = vrot.lane.b32.xlu0 %v453, 28
      %v1921 = vpop.permute.xlu0 %1920
      %1922 = vrot.lane.b32.xlu0 %v455, 28
      %v1923 = vpop.permute.xlu0 %1922
      %1924 = vrot.lane.b32.xlu0 %v457, 28
      %v1925 = vpop.permute.xlu0 %1924
      %1926 = vrot.lane.b32.xlu0 %v459, 28
      %v1927 = vpop.permute.xlu0 %1926
      %1928 = vrot.lane.b32.xlu0 %v462, 28
      %v1929 = vpop.permute.xlu0 %1928
      %1930 = vrot.lane.b32.xlu0 %v464, 28
      %v1931 = vpop.permute.xlu0 %1930
      %1932 = vrot.lane.b32.xlu0 %v466, 28
      %v1933 = vpop.permute.xlu0 %1932
      %1934 = vrot.lane.b32.xlu0 %v468, 28
      %v1935 = vpop.permute.xlu0 %1934
      %1936 = vrot.lane.b32.xlu0 %v471, 28
      %v1937 = vpop.permute.xlu0 %1936
      %1938 = vrot.lane.b32.xlu0 %v473, 28
      %v1939 = vpop.permute.xlu0 %1938
      %1940 = vrot.lane.b32.xlu0 %v475, 28
      %v1941 = vpop.permute.xlu0 %1940
      %1942 = vrot.lane.b32.xlu0 %v477, 28
      %v1943 = vpop.permute.xlu0 %1942
      %1944 = vrot.lane.b32.xlu0 %v480, 28
      %v1945 = vpop.permute.xlu0 %1944
      %1946 = vrot.lane.b32.xlu0 %v482, 28
      %v1947 = vpop.permute.xlu0 %1946
      %1948 = vrot.lane.b32.xlu0 %v484, 28
      %v1949 = vpop.permute.xlu0 %1948
      %1950 = vrot.lane.b32.xlu0 %v486, 28
      %v1951 = vpop.permute.xlu0 %1950
      %1952 = vrot.lane.b32.xlu0 %v489, 28
      %v1953 = vpop.permute.xlu0 %1952
      %1954 = vrot.lane.b32.xlu0 %v491, 28
      %v1955 = vpop.permute.xlu0 %1954
      %1956 = vrot.lane.b32.xlu0 %v493, 28
      %v1957 = vpop.permute.xlu0 %1956
      %1958 = vrot.lane.b32.xlu0 %v495, 28
      %v1959 = vpop.permute.xlu0 %1958
      %1960 = vrot.lane.b32.xlu0 %v498, 28
      %v1961 = vpop.permute.xlu0 %1960
      %1962 = vrot.lane.b32.xlu0 %v500, 28
      %v1963 = vpop.permute.xlu0 %1962
      %1964 = vrot.lane.b32.xlu0 %v502, 28
      %v1965 = vpop.permute.xlu0 %1964
      %1966 = vrot.lane.b32.xlu0 %v504, 28
      %v1967 = vpop.permute.xlu0 %1966
      %1968 = vrot.lane.b32.xlu0 %v507, 28
      %v1969 = vpop.permute.xlu0 %1968
      %1970 = vrot.lane.b32.xlu0 %v509, 28
      %v1971 = vpop.permute.xlu0 %1970
      %1972 = vrot.lane.b32.xlu0 %v511, 28
      %v1973 = vpop.permute.xlu0 %1972
      %1974 = vrot.lane.b32.xlu0 %v513, 28
      %v1975 = vpop.permute.xlu0 %1974
      %1976 = vrot.lane.b32.xlu0 %v516, 28
      %v1977 = vpop.permute.xlu0 %1976
      %1978 = vrot.lane.b32.xlu0 %v518, 28
      %v1979 = vpop.permute.xlu0 %1978
      %1980 = vrot.lane.b32.xlu0 %v520, 28
      %v1981 = vpop.permute.xlu0 %1980
      %1982 = vrot.lane.b32.xlu0 %v522, 28
      %v1983 = vpop.permute.xlu0 %1982
      %1984 = vrot.lane.b32.xlu0 %v525, 28
      %v1985 = vpop.permute.xlu0 %1984
      %1986 = vrot.lane.b32.xlu0 %v527, 28
      %v1987 = vpop.permute.xlu0 %1986
      %1988 = vrot.lane.b32.xlu0 %v529, 28
      %v1989 = vpop.permute.xlu0 %1988
      %1990 = vrot.lane.b32.xlu0 %v531, 28
      %v1991 = vpop.permute.xlu0 %1990
      %1992 = vrot.lane.b32.xlu0 %v534, 28
      %v1993 = vpop.permute.xlu0 %1992
      %1994 = vrot.lane.b32.xlu0 %v536, 28
      %v1995 = vpop.permute.xlu0 %1994
      %1996 = vrot.lane.b32.xlu0 %v538, 28
      %v1997 = vpop.permute.xlu0 %1996
      %1998 = vrot.lane.b32.xlu0 %v540, 28
      %v1999 = vpop.permute.xlu0 %1998
      %2000 = vrot.lane.b32.xlu0 %v543, 28
      %v2001 = vpop.permute.xlu0 %2000
      %2002 = vrot.lane.b32.xlu0 %v545, 28
      %v2003 = vpop.permute.xlu0 %2002
      %2004 = vrot.lane.b32.xlu0 %v547, 28
      %v2005 = vpop.permute.xlu0 %2004
      %2006 = vrot.lane.b32.xlu0 %v549, 28
      %v2007 = vpop.permute.xlu0 %2006
      %2008 = vrot.lane.b32.xlu0 %v552, 28
      %v2009 = vpop.permute.xlu0 %2008
      %2010 = vrot.lane.b32.xlu0 %v554, 28
      %v2011 = vpop.permute.xlu0 %2010
      %2012 = vrot.lane.b32.xlu0 %v556, 28
      %v2013 = vpop.permute.xlu0 %2012
      %2014 = vrot.lane.b32.xlu0 %v558, 28
      %v2015 = vpop.permute.xlu0 %2014
      %2016 = vrot.lane.b32.xlu0 %v561, 28
      %v2017 = vpop.permute.xlu0 %2016
      %2018 = vrot.lane.b32.xlu0 %v563, 28
      %v2019 = vpop.permute.xlu0 %2018
      %2020 = vrot.lane.b32.xlu0 %v565, 28
      %v2021 = vpop.permute.xlu0 %2020
      %2022 = vrot.lane.b32.xlu0 %v567, 28
      %v2023 = vpop.permute.xlu0 %2022
      %2024 = vrot.lane.b32.xlu0 %v570, 28
      %v2025 = vpop.permute.xlu0 %2024
      %2026 = vrot.lane.b32.xlu0 %v572, 28
      %v2027 = vpop.permute.xlu0 %2026
      %2028 = vrot.lane.b32.xlu0 %v574, 28
      %v2029 = vpop.permute.xlu0 %2028
      %2030 = vrot.lane.b32.xlu0 %v576, 28
      %v2031 = vpop.permute.xlu0 %2030
      %2032 = vrot.lane.b32.xlu0 %v729, 28
      %v2033 = vpop.permute.xlu0 %2032
      %2034 = vrot.lane.b32.xlu0 %v731, 28
      %v2035 = vpop.permute.xlu0 %2034
      %2036 = vrot.lane.b32.xlu0 %v733, 28
      %v2037 = vpop.permute.xlu0 %2036
      %2038 = vrot.lane.b32.xlu0 %v735, 28
      %v2039 = vpop.permute.xlu0 %2038
      %2040 = vrot.lane.b32.xlu0 %v752, 28
      %v2041 = vpop.permute.xlu0 %2040
      %2042 = vrot.lane.b32.xlu0 %v754, 28
      %v2043 = vpop.permute.xlu0 %2042
      %2044 = vrot.lane.b32.xlu0 %v756, 28
      %v2045 = vpop.permute.xlu0 %2044
      %2046 = vrot.lane.b32.xlu0 %v758, 28
      %v2047 = vpop.permute.xlu0 %2046
      %2112 = vrot.lane.b32.xlu0 %v598, 32
      %v2113 = vpop.permute.xlu0 %2112
      %2114 = vrot.lane.b32.xlu0 %v600, 32
      %v2115 = vpop.permute.xlu0 %2114
      %2116 = vrot.lane.b32.xlu0 %v602, 32
      %v2117 = vpop.permute.xlu0 %2116
      %2118 = vrot.lane.b32.xlu0 %v604, 32
      %v2119 = vpop.permute.xlu0 %2118
      %2120 = vrot.lane.b32.xlu0 %v607, 32
      %v2121 = vpop.permute.xlu0 %2120
      %2122 = vrot.lane.b32.xlu0 %v609, 32
      %v2123 = vpop.permute.xlu0 %2122
      %2124 = vrot.lane.b32.xlu0 %v611, 32
      %v2125 = vpop.permute.xlu0 %2124
      %2126 = vrot.lane.b32.xlu0 %v613, 32
      %v2127 = vpop.permute.xlu0 %2126
      %2128 = vrot.lane.b32.xlu0 %v616, 32
      %v2129 = vpop.permute.xlu0 %2128
      %2130 = vrot.lane.b32.xlu0 %v618, 32
      %v2131 = vpop.permute.xlu0 %2130
      %2132 = vrot.lane.b32.xlu0 %v620, 32
      %v2133 = vpop.permute.xlu0 %2132
      %2134 = vrot.lane.b32.xlu0 %v622, 32
      %v2135 = vpop.permute.xlu0 %2134
      %2136 = vrot.lane.b32.xlu0 %v625, 32
      %v2137 = vpop.permute.xlu0 %2136
      %2138 = vrot.lane.b32.xlu0 %v627, 32
      %v2139 = vpop.permute.xlu0 %2138
      %2140 = vrot.lane.b32.xlu0 %v629, 32
      %v2141 = vpop.permute.xlu0 %2140
      %2142 = vrot.lane.b32.xlu0 %v631, 32
      %v2143 = vpop.permute.xlu0 %2142
      %2144 = vrot.lane.b32.xlu0 %v634, 32
      %v2145 = vpop.permute.xlu0 %2144
      %2146 = vrot.lane.b32.xlu0 %v636, 32
      %v2147 = vpop.permute.xlu0 %2146
      %2148 = vrot.lane.b32.xlu0 %v638, 32
      %v2149 = vpop.permute.xlu0 %2148
      %2150 = vrot.lane.b32.xlu0 %v640, 32
      %v2151 = vpop.permute.xlu0 %2150
      %2152 = vrot.lane.b32.xlu0 %v643, 32
      %v2153 = vpop.permute.xlu0 %2152
      %2154 = vrot.lane.b32.xlu0 %v645, 32
      %v2155 = vpop.permute.xlu0 %2154
      %2156 = vrot.lane.b32.xlu0 %v647, 32
      %v2157 = vpop.permute.xlu0 %2156
      %2158 = vrot.lane.b32.xlu0 %v649, 32
      %v2159 = vpop.permute.xlu0 %2158
      %2160 = vrot.lane.b32.xlu0 %v652, 32
      %v2161 = vpop.permute.xlu0 %2160
      %2162 = vrot.lane.b32.xlu0 %v654, 32
      %v2163 = vpop.permute.xlu0 %2162
      %2164 = vrot.lane.b32.xlu0 %v656, 32
      %v2165 = vpop.permute.xlu0 %2164
      %2166 = vrot.lane.b32.xlu0 %v658, 32
      %v2167 = vpop.permute.xlu0 %2166
      %2168 = vrot.lane.b32.xlu0 %v661, 32
      %v2169 = vpop.permute.xlu0 %2168
      %2170 = vrot.lane.b32.xlu0 %v663, 32
      %v2171 = vpop.permute.xlu0 %2170
      %2172 = vrot.lane.b32.xlu0 %v665, 32
      %v2173 = vpop.permute.xlu0 %2172
      %2174 = vrot.lane.b32.xlu0 %v667, 32
      %v2175 = vpop.permute.xlu0 %2174
      %2176 = vrot.lane.b32.xlu0 %v670, 32
      %v2177 = vpop.permute.xlu0 %2176
      %2178 = vrot.lane.b32.xlu0 %v672, 32
      %v2179 = vpop.permute.xlu0 %2178
      %2180 = vrot.lane.b32.xlu0 %v674, 32
      %v2181 = vpop.permute.xlu0 %2180
      %2182 = vrot.lane.b32.xlu0 %v676, 32
      %v2183 = vpop.permute.xlu0 %2182
      %2184 = vrot.lane.b32.xlu0 %v679, 32
      %v2185 = vpop.permute.xlu0 %2184
      %2186 = vrot.lane.b32.xlu0 %v681, 32
      %v2187 = vpop.permute.xlu0 %2186
      %2188 = vrot.lane.b32.xlu0 %v683, 32
      %v2189 = vpop.permute.xlu0 %2188
      %2190 = vrot.lane.b32.xlu0 %v685, 32
      %v2191 = vpop.permute.xlu0 %2190
      %2192 = vrot.lane.b32.xlu0 %v688, 32
      %v2193 = vpop.permute.xlu0 %2192
      %2194 = vrot.lane.b32.xlu0 %v690, 32
      %v2195 = vpop.permute.xlu0 %2194
      %2196 = vrot.lane.b32.xlu0 %v692, 32
      %v2197 = vpop.permute.xlu0 %2196
      %2198 = vrot.lane.b32.xlu0 %v694, 32
      %v2199 = vpop.permute.xlu0 %2198
      %2200 = vrot.lane.b32.xlu0 %v697, 32
      %v2201 = vpop.permute.xlu0 %2200
      %2202 = vrot.lane.b32.xlu0 %v699, 32
      %v2203 = vpop.permute.xlu0 %2202
      %2204 = vrot.lane.b32.xlu0 %v701, 32
      %v2205 = vpop.permute.xlu0 %2204
      %2206 = vrot.lane.b32.xlu0 %v703, 32
      %v2207 = vpop.permute.xlu0 %2206
      %2208 = vrot.lane.b32.xlu0 %v706, 32
      %v2209 = vpop.permute.xlu0 %2208
      %2210 = vrot.lane.b32.xlu0 %v708, 32
      %v2211 = vpop.permute.xlu0 %2210
      %2212 = vrot.lane.b32.xlu0 %v710, 32
      %v2213 = vpop.permute.xlu0 %2212
      %2214 = vrot.lane.b32.xlu0 %v712, 32
      %v2215 = vpop.permute.xlu0 %2214
      %2216 = vrot.lane.b32.xlu0 %v715, 32
      %v2217 = vpop.permute.xlu0 %2216
      %2218 = vrot.lane.b32.xlu0 %v717, 32
      %v2219 = vpop.permute.xlu0 %2218
      %2220 = vrot.lane.b32.xlu0 %v719, 32
      %v2221 = vpop.permute.xlu0 %2220
      %2222 = vrot.lane.b32.xlu0 %v721, 32
      %v2223 = vpop.permute.xlu0 %2222
      %2224 = vrot.lane.b32.xlu0 %v738, 32
      %v2225 = vpop.permute.xlu0 %2224
      %2226 = vrot.lane.b32.xlu0 %v740, 32
      %v2227 = vpop.permute.xlu0 %2226
      %2228 = vrot.lane.b32.xlu0 %v742, 32
      %v2229 = vpop.permute.xlu0 %2228
      %2230 = vrot.lane.b32.xlu0 %v744, 32
      %v2231 = vpop.permute.xlu0 %2230
      %2232 = vrot.lane.b32.xlu0 %v761, 32
      %v2233 = vpop.permute.xlu0 %2232
      %2234 = vrot.lane.b32.xlu0 %v763, 32
      %v2235 = vpop.permute.xlu0 %2234
      %2236 = vrot.lane.b32.xlu0 %v765, 32
      %v2237 = vpop.permute.xlu0 %2236
      %2238 = vrot.lane.b32.xlu0 %v767, 32
      %v2239 = vpop.permute.xlu0 %2238
      %vm2304 = vcmask 31744
      %v2305 = vsel %vm2304, %v262, %v769
      %v2306 = vsel %vm2304, %v263, %v771
      %v2307 = vsel %vm2304, %v264, %v773
      %v2308 = vsel %vm2304, %v265, %v775
      %v2309 = vsel %vm2304, %v267, %v777
      %v2310 = vsel %vm2304, %v268, %v779
      %v2311 = vsel %vm2304, %v269, %v781
      %v2312 = vsel %vm2304, %v270, %v783
      %v2313 = vsel %vm2304, %v272, %v785
      %v2314 = vsel %vm2304, %v273, %v787
      %v2315 = vsel %vm2304, %v274, %v789
      %v2316 = vsel %vm2304, %v275, %v791
      %v2317 = vsel %vm2304, %v277, %v793
      %v2318 = vsel %vm2304, %v278, %v795
      %v2319 = vsel %vm2304, %v279, %v797
      %v2320 = vsel %vm2304, %v280, %v799
      %v2321 = vsel %vm2304, %v282, %v801
      %v2322 = vsel %vm2304, %v283, %v803
      %v2323 = vsel %vm2304, %v284, %v805
      %v2324 = vsel %vm2304, %v285, %v807
      %v2325 = vsel %vm2304, %v287, %v809
      %v2326 = vsel %vm2304, %v288, %v811
      %v2327 = vsel %vm2304, %v289, %v813
      %v2328 = vsel %vm2304, %v290, %v815
      %v2329 = vsel %vm2304, %v292, %v817
      %v2330 = vsel %vm2304, %v293, %v819
      %v2331 = vsel %vm2304, %v294, %v821
      %v2332 = vsel %vm2304, %v295, %v823
      %v2333 = vsel %vm2304, %v297, %v825
      %v2334 = vsel %vm2304, %v298, %v827
      %v2335 = vsel %vm2304, %v299, %v829
      %v2336 = vsel %vm2304, %v300, %v831
      %v2337 = vsel %vm2304, %v302, %v833
      %v2338 = vsel %vm2304, %v303, %v835
      %v2339 = vsel %vm2304, %v304, %v837
      %v2340 = vsel %vm2304, %v305, %v839
      %v2341 = vsel %vm2304, %v307, %v841
      %v2342 = vsel %vm2304, %v308, %v843
      %v2343 = vsel %vm2304, %v309, %v845
      %v2344 = vsel %vm2304, %v310, %v847
      %v2345 = vsel %vm2304, %v312, %v849
      %v2346 = vsel %vm2304, %v313, %v851
      %v2347 = vsel %vm2304, %v314, %v853
      %v2348 = vsel %vm2304, %v315, %v855
      %v2349 = vsel %vm2304, %v317, %v857
      %v2350 = vsel %vm2304, %v318, %v859
      %v2351 = vsel %vm2304, %v319, %v861
      %v2352 = vsel %vm2304, %v320, %v863
      %v2353 = vsel %vm2304, %v322, %v865
      %v2354 = vsel %vm2304, %v323, %v867
      %v2355 = vsel %vm2304, %v324, %v869
      %v2356 = vsel %vm2304, %v325, %v871
      %v2357 = vsel %vm2304, %v327, %v873
      %v2358 = vsel %vm2304, %v328, %v875
      %v2359 = vsel %vm2304, %v329, %v877
      %v2360 = vsel %vm2304, %v330, %v879
      %v2361 = vsel %vm2304, %v332, %v881
      %v2362 = vsel %vm2304, %v333, %v883
      %v2363 = vsel %vm2304, %v334, %v885
      %v2364 = vsel %vm2304, %v335, %v887
      %v2365 = vsel %vm2304, %v337, %v889
      %v2366 = vsel %vm2304, %v338, %v891
      %v2367 = vsel %vm2304, %v339, %v893
      %v2368 = vsel %vm2304, %v340, %v895
      %vm2369 = vcmask 64512
      %v2370 = vsel %vm2369, %v2305, %v961
      %v2371 = vsel %vm2369, %v2306, %v963
      %v2372 = vsel %vm2369, %v2307, %v965
      %v2373 = vsel %vm2369, %v2308, %v967
      %v2374 = vsel %vm2369, %v2309, %v969
      %v2375 = vsel %vm2369, %v2310, %v971
      %v2376 = vsel %vm2369, %v2311, %v973
      %v2377 = vsel %vm2369, %v2312, %v975
      %v2378 = vsel %vm2369, %v2313, %v977
      %v2379 = vsel %vm2369, %v2314, %v979
      %v2380 = vsel %vm2369, %v2315, %v981
      %v2381 = vsel %vm2369, %v2316, %v983
      %v2382 = vsel %vm2369, %v2317, %v985
      %v2383 = vsel %vm2369, %v2318, %v987
      %v2384 = vsel %vm2369, %v2319, %v989
      %v2385 = vsel %vm2369, %v2320, %v991
      %v2386 = vsel %vm2369, %v2321, %v993
      %v2387 = vsel %vm2369, %v2322, %v995
      %v2388 = vsel %vm2369, %v2323, %v997
      %v2389 = vsel %vm2369, %v2324, %v999
      %v2390 = vsel %vm2369, %v2325, %v1001
      %v2391 = vsel %vm2369, %v2326, %v1003
      %v2392 = vsel %vm2369, %v2327, %v1005
      %v2393 = vsel %vm2369, %v2328, %v1007
      %v2394 = vsel %vm2369, %v2329, %v1009
      %v2395 = vsel %vm2369, %v2330, %v1011
      %v2396 = vsel %vm2369, %v2331, %v1013
      %v2397 = vsel %vm2369, %v2332, %v1015
      %v2398 = vsel %vm2369, %v2333, %v1017
      %v2399 = vsel %vm2369, %v2334, %v1019
      %v2400 = vsel %vm2369, %v2335, %v1021
      %v2401 = vsel %vm2369, %v2336, %v1023
      %v2402 = vsel %vm2369, %v2337, %v1025
      %v2403 = vsel %vm2369, %v2338, %v1027
      %v2404 = vsel %vm2369, %v2339, %v1029
      %v2405 = vsel %vm2369, %v2340, %v1031
      %v2406 = vsel %vm2369, %v2341, %v1033
      %v2407 = vsel %vm2369, %v2342, %v1035
      %v2408 = vsel %vm2369, %v2343, %v1037
      %v2409 = vsel %vm2369, %v2344, %v1039
      %v2410 = vsel %vm2369, %v2345, %v1041
      %v2411 = vsel %vm2369, %v2346, %v1043
      %v2412 = vsel %vm2369, %v2347, %v1045
      %v2413 = vsel %vm2369, %v2348, %v1047
      %v2414 = vsel %vm2369, %v2349, %v1049
      %v2415 = vsel %vm2369, %v2350, %v1051
      %v2416 = vsel %vm2369, %v2351, %v1053
      %v2417 = vsel %vm2369, %v2352, %v1055
      %v2418 = vsel %vm2369, %v2353, %v1057
      %v2419 = vsel %vm2369, %v2354, %v1059
      %v2420 = vsel %vm2369, %v2355, %v1061
      %v2421 = vsel %vm2369, %v2356, %v1063
      %v2422 = vsel %vm2369, %v2357, %v1065
      %v2423 = vsel %vm2369, %v2358, %v1067
      %v2424 = vsel %vm2369, %v2359, %v1069
      %v2425 = vsel %vm2369, %v2360, %v1071
      %v2426 = vsel %vm2369, %v2361, %v1073
      %v2427 = vsel %vm2369, %v2362, %v1075
      %v2428 = vsel %vm2369, %v2363, %v1077
      %v2429 = vsel %vm2369, %v2364, %v1079
      %v2430 = vsel %vm2369, %v2365, %v1081
      %v2431 = vsel %vm2369, %v2366, %v1083
      %v2432 = vsel %vm2369, %v2367, %v1085
      %v2433 = vsel %vm2369, %v2368, %v1087
      %vm2434 = vcmask 97280
      %v2435 = vsel %vm2434, %v2370, %v1153
      %v2436 = vsel %vm2434, %v2371, %v1155
      %v2437 = vsel %vm2434, %v2372, %v1157
      %v2438 = vsel %vm2434, %v2373, %v1159
      %v2439 = vsel %vm2434, %v2374, %v1161
      %v2440 = vsel %vm2434, %v2375, %v1163
      %v2441 = vsel %vm2434, %v2376, %v1165
      %v2442 = vsel %vm2434, %v2377, %v1167
      %v2443 = vsel %vm2434, %v2378, %v1169
      %v2444 = vsel %vm2434, %v2379, %v1171
      %v2445 = vsel %vm2434, %v2380, %v1173
      %v2446 = vsel %vm2434, %v2381, %v1175
      %v2447 = vsel %vm2434, %v2382, %v1177
      %v2448 = vsel %vm2434, %v2383, %v1179
      %v2449 = vsel %vm2434, %v2384, %v1181
      %v2450 = vsel %vm2434, %v2385, %v1183
      %v2451 = vsel %vm2434, %v2386, %v1185
      %v2452 = vsel %vm2434, %v2387, %v1187
      %v2453 = vsel %vm2434, %v2388, %v1189
      %v2454 = vsel %vm2434, %v2389, %v1191
      %v2455 = vsel %vm2434, %v2390, %v1193
      %v2456 = vsel %vm2434, %v2391, %v1195
      %v2457 = vsel %vm2434, %v2392, %v1197
      %v2458 = vsel %vm2434, %v2393, %v1199
      %v2459 = vsel %vm2434, %v2394, %v1201
      %v2460 = vsel %vm2434, %v2395, %v1203
      %v2461 = vsel %vm2434, %v2396, %v1205
      %v2462 = vsel %vm2434, %v2397, %v1207
      %v2463 = vsel %vm2434, %v2398, %v1209
      %v2464 = vsel %vm2434, %v2399, %v1211
      %v2465 = vsel %vm2434, %v2400, %v1213
      %v2466 = vsel %vm2434, %v2401, %v1215
      %v2467 = vsel %vm2434, %v2402, %v1217
      %v2468 = vsel %vm2434, %v2403, %v1219
      %v2469 = vsel %vm2434, %v2404, %v1221
      %v2470 = vsel %vm2434, %v2405, %v1223
      %v2471 = vsel %vm2434, %v2406, %v1225
      %v2472 = vsel %vm2434, %v2407, %v1227
      %v2473 = vsel %vm2434, %v2408, %v1229
      %v2474 = vsel %vm2434, %v2409, %v1231
      %v2475 = vsel %vm2434, %v2410, %v1233
      %v2476 = vsel %vm2434, %v2411, %v1235
      %v2477 = vsel %vm2434, %v2412, %v1237
      %v2478 = vsel %vm2434, %v2413, %v1239
      %v2479 = vsel %vm2434, %v2414, %v1241
      %v2480 = vsel %vm2434, %v2415, %v1243
      %v2481 = vsel %vm2434, %v2416, %v1245
      %v2482 = vsel %vm2434, %v2417, %v1247
      %v2483 = vsel %vm2434, %v2418, %v1249
      %v2484 = vsel %vm2434, %v2419, %v1251
      %v2485 = vsel %vm2434, %v2420, %v1253
      %v2486 = vsel %vm2434, %v2421, %v1255
      %v2487 = vsel %vm2434, %v2422, %v1257
      %v2488 = vsel %vm2434, %v2423, %v1259
      %v2489 = vsel %vm2434, %v2424, %v1261
      %v2490 = vsel %vm2434, %v2425, %v1263
      %v2491 = vsel %vm2434, %v2426, %v1265
      %v2492 = vsel %vm2434, %v2427, %v1267
      %v2493 = vsel %vm2434, %v2428, %v1269
      %v2494 = vsel %vm2434, %v2429, %v1271
      %v2495 = vsel %vm2434, %v2430, %v1273
      %v2496 = vsel %vm2434, %v2431, %v1275
      %v2497 = vsel %vm2434, %v2432, %v1277
      %v2498 = vsel %vm2434, %v2433, %v1279
      %vm2499 = vcmask 130048
      %v2500 = vsel %vm2499, %v2435, %v1345
      %v2501 = vsel %vm2499, %v2436, %v1347
      %v2502 = vsel %vm2499, %v2437, %v1349
      %v2503 = vsel %vm2499, %v2438, %v1351
      %v2504 = vsel %vm2499, %v2439, %v1353
      %v2505 = vsel %vm2499, %v2440, %v1355
      %v2506 = vsel %vm2499, %v2441, %v1357
      %v2507 = vsel %vm2499, %v2442, %v1359
      %v2508 = vsel %vm2499, %v2443, %v1361
      %v2509 = vsel %vm2499, %v2444, %v1363
      %v2510 = vsel %vm2499, %v2445, %v1365
      %v2511 = vsel %vm2499, %v2446, %v1367
      %v2512 = vsel %vm2499, %v2447, %v1369
      %v2513 = vsel %vm2499, %v2448, %v1371
      %v2514 = vsel %vm2499, %v2449, %v1373
      %v2515 = vsel %vm2499, %v2450, %v1375
      %v2516 = vsel %vm2499, %v2451, %v1377
      %v2517 = vsel %vm2499, %v2452, %v1379
      %v2518 = vsel %vm2499, %v2453, %v1381
      %v2519 = vsel %vm2499, %v2454, %v1383
      %v2520 = vsel %vm2499, %v2455, %v1385
      %v2521 = vsel %vm2499, %v2456, %v1387
      %v2522 = vsel %vm2499, %v2457, %v1389
      %v2523 = vsel %vm2499, %v2458, %v1391
      %v2524 = vsel %vm2499, %v2459, %v1393
      %v2525 = vsel %vm2499, %v2460, %v1395
      %v2526 = vsel %vm2499, %v2461, %v1397
      %v2527 = vsel %vm2499, %v2462, %v1399
      %v2528 = vsel %vm2499, %v2463, %v1401
      %v2529 = vsel %vm2499, %v2464, %v1403
      %v2530 = vsel %vm2499, %v2465, %v1405
      %v2531 = vsel %vm2499, %v2466, %v1407
      %v2532 = vsel %vm2499, %v2467, %v1409
      %v2533 = vsel %vm2499, %v2468, %v1411
      %v2534 = vsel %vm2499, %v2469, %v1413
      %v2535 = vsel %vm2499, %v2470, %v1415
      %v2536 = vsel %vm2499, %v2471, %v1417
      %v2537 = vsel %vm2499, %v2472, %v1419
      %v2538 = vsel %vm2499, %v2473, %v1421
      %v2539 = vsel %vm2499, %v2474, %v1423
      %v2540 = vsel %vm2499, %v2475, %v1425
      %v2541 = vsel %vm2499, %v2476, %v1427
      %v2542 = vsel %vm2499, %v2477, %v1429
      %v2543 = vsel %vm2499, %v2478, %v1431
      %v2544 = vsel %vm2499, %v2479, %v1433
      %v2545 = vsel %vm2499, %v2480, %v1435
      %v2546 = vsel %vm2499, %v2481, %v1437
      %v2547 = vsel %vm2499, %v2482, %v1439
      %v2548 = vsel %vm2499, %v2483, %v1441
      %v2549 = vsel %vm2499, %v2484, %v1443
      %v2550 = vsel %vm2499, %v2485, %v1445
      %v2551 = vsel %vm2499, %v2486, %v1447
      %v2552 = vsel %vm2499, %v2487, %v1449
      %v2553 = vsel %vm2499, %v2488, %v1451
      %v2554 = vsel %vm2499, %v2489, %v1453
      %v2555 = vsel %vm2499, %v2490, %v1455
      %v2556 = vsel %vm2499, %v2491, %v1457
      %v2557 = vsel %vm2499, %v2492, %v1459
      %v2558 = vsel %vm2499, %v2493, %v1461
      %v2559 = vsel %vm2499, %v2494, %v1463
      %v2560 = vsel %vm2499, %v2495, %v1465
      %v2561 = vsel %vm2499, %v2496, %v1467
      %v2562 = vsel %vm2499, %v2497, %v1469
      %v2563 = vsel %vm2499, %v2498, %v1471
      %vm2564 = vcmask 162816
      %v2565 = vsel %vm2564, %v2500, %v1537
      %v2566 = vsel %vm2564, %v2501, %v1539
      %v2567 = vsel %vm2564, %v2502, %v1541
      %v2568 = vsel %vm2564, %v2503, %v1543
      %v2569 = vsel %vm2564, %v2504, %v1545
      %v2570 = vsel %vm2564, %v2505, %v1547
      %v2571 = vsel %vm2564, %v2506, %v1549
      %v2572 = vsel %vm2564, %v2507, %v1551
      %v2573 = vsel %vm2564, %v2508, %v1553
      %v2574 = vsel %vm2564, %v2509, %v1555
      %v2575 = vsel %vm2564, %v2510, %v1557
      %v2576 = vsel %vm2564, %v2511, %v1559
      %v2577 = vsel %vm2564, %v2512, %v1561
      %v2578 = vsel %vm2564, %v2513, %v1563
      %v2579 = vsel %vm2564, %v2514, %v1565
      %v2580 = vsel %vm2564, %v2515, %v1567
      %v2581 = vsel %vm2564, %v2516, %v1569
      %v2582 = vsel %vm2564, %v2517, %v1571
      %v2583 = vsel %vm2564, %v2518, %v1573
      %v2584 = vsel %vm2564, %v2519, %v1575
      %v2585 = vsel %vm2564, %v2520, %v1577
      %v2586 = vsel %vm2564, %v2521, %v1579
      %v2587 = vsel %vm2564, %v2522, %v1581
      %v2588 = vsel %vm2564, %v2523, %v1583
      %v2589 = vsel %vm2564, %v2524, %v1585
      %v2590 = vsel %vm2564, %v2525, %v1587
      %v2591 = vsel %vm2564, %v2526, %v1589
      %v2592 = vsel %vm2564, %v2527, %v1591
      %v2593 = vsel %vm2564, %v2528, %v1593
      %v2594 = vsel %vm2564, %v2529, %v1595
      %v2595 = vsel %vm2564, %v2530, %v1597
      %v2596 = vsel %vm2564, %v2531, %v1599
      %v2597 = vsel %vm2564, %v2532, %v1601
      %v2598 = vsel %vm2564, %v2533, %v1603
      %v2599 = vsel %vm2564, %v2534, %v1605
      %v2600 = vsel %vm2564, %v2535, %v1607
      %v2601 = vsel %vm2564, %v2536, %v1609
      %v2602 = vsel %vm2564, %v2537, %v1611
      %v2603 = vsel %vm2564, %v2538, %v1613
      %v2604 = vsel %vm2564, %v2539, %v1615
      %v2605 = vsel %vm2564, %v2540, %v1617
      %v2606 = vsel %vm2564, %v2541, %v1619
      %v2607 = vsel %vm2564, %v2542, %v1621
      %v2608 = vsel %vm2564, %v2543, %v1623
      %v2609 = vsel %vm2564, %v2544, %v1625
      %v2610 = vsel %vm2564, %v2545, %v1627
      %v2611 = vsel %vm2564, %v2546, %v1629
      %v2612 = vsel %vm2564, %v2547, %v1631
      %v2613 = vsel %vm2564, %v2548, %v1633
      %v2614 = vsel %vm2564, %v2549, %v1635
      %v2615 = vsel %vm2564, %v2550, %v1637
      %v2616 = vsel %vm2564, %v2551, %v1639
      %v2617 = vsel %vm2564, %v2552, %v1641
      %v2618 = vsel %vm2564, %v2553, %v1643
      %v2619 = vsel %vm2564, %v2554, %v1645
      %v2620 = vsel %vm2564, %v2555, %v1647
      %v2621 = vsel %vm2564, %v2556, %v1649
      %v2622 = vsel %vm2564, %v2557, %v1651
      %v2623 = vsel %vm2564, %v2558, %v1653
      %v2624 = vsel %vm2564, %v2559, %v1655
      %v2625 = vsel %vm2564, %v2560, %v1657
      %v2626 = vsel %vm2564, %v2561, %v1659
      %v2627 = vsel %vm2564, %v2562, %v1661
      %v2628 = vsel %vm2564, %v2563, %v1663
      %vm2629 = vcmask 195584
      %v2630 = vsel %vm2629, %v2565, %v1729
      %v2631 = vsel %vm2629, %v2566, %v1731
      %v2632 = vsel %vm2629, %v2567, %v1733
      %v2633 = vsel %vm2629, %v2568, %v1735
      %v2634 = vsel %vm2629, %v2569, %v1737
      %v2635 = vsel %vm2629, %v2570, %v1739
      %v2636 = vsel %vm2629, %v2571, %v1741
      %v2637 = vsel %vm2629, %v2572, %v1743
      %v2638 = vsel %vm2629, %v2573, %v1745
      %v2639 = vsel %vm2629, %v2574, %v1747
      %v2640 = vsel %vm2629, %v2575, %v1749
      %v2641 = vsel %vm2629, %v2576, %v1751
      %v2642 = vsel %vm2629, %v2577, %v1753
      %v2643 = vsel %vm2629, %v2578, %v1755
      %v2644 = vsel %vm2629, %v2579, %v1757
      %v2645 = vsel %vm2629, %v2580, %v1759
      %v2646 = vsel %vm2629, %v2581, %v1761
      %v2647 = vsel %vm2629, %v2582, %v1763
      %v2648 = vsel %vm2629, %v2583, %v1765
      %v2649 = vsel %vm2629, %v2584, %v1767
      %v2650 = vsel %vm2629, %v2585, %v1769
      %v2651 = vsel %vm2629, %v2586, %v1771
      %v2652 = vsel %vm2629, %v2587, %v1773
      %v2653 = vsel %vm2629, %v2588, %v1775
      %v2654 = vsel %vm2629, %v2589, %v1777
      %v2655 = vsel %vm2629, %v2590, %v1779
      %v2656 = vsel %vm2629, %v2591, %v1781
      %v2657 = vsel %vm2629, %v2592, %v1783
      %v2658 = vsel %vm2629, %v2593, %v1785
      %v2659 = vsel %vm2629, %v2594, %v1787
      %v2660 = vsel %vm2629, %v2595, %v1789
      %v2661 = vsel %vm2629, %v2596, %v1791
      %v2662 = vsel %vm2629, %v2597, %v1793
      %v2663 = vsel %vm2629, %v2598, %v1795
      %v2664 = vsel %vm2629, %v2599, %v1797
      %v2665 = vsel %vm2629, %v2600, %v1799
      %v2666 = vsel %vm2629, %v2601, %v1801
      %v2667 = vsel %vm2629, %v2602, %v1803
      %v2668 = vsel %vm2629, %v2603, %v1805
      %v2669 = vsel %vm2629, %v2604, %v1807
      %v2670 = vsel %vm2629, %v2605, %v1809
      %v2671 = vsel %vm2629, %v2606, %v1811
      %v2672 = vsel %vm2629, %v2607, %v1813
      %v2673 = vsel %vm2629, %v2608, %v1815
      %v2674 = vsel %vm2629, %v2609, %v1817
      %v2675 = vsel %vm2629, %v2610, %v1819
      %v2676 = vsel %vm2629, %v2611, %v1821
      %v2677 = vsel %vm2629, %v2612, %v1823
      %v2678 = vsel %vm2629, %v2613, %v1825
      %v2679 = vsel %vm2629, %v2614, %v1827
      %v2680 = vsel %vm2629, %v2615, %v1829
      %v2681 = vsel %vm2629, %v2616, %v1831
      %v2682 = vsel %vm2629, %v2617, %v1833
      %v2683 = vsel %vm2629, %v2618, %v1835
      %v2684 = vsel %vm2629, %v2619, %v1837
      %v2685 = vsel %vm2629, %v2620, %v1839
      %v2686 = vsel %vm2629, %v2621, %v1841
      %v2687 = vsel %vm2629, %v2622, %v1843
      %v2688 = vsel %vm2629, %v2623, %v1845
      %v2689 = vsel %vm2629, %v2624, %v1847
      %v2690 = vsel %vm2629, %v2625, %v1849
      %v2691 = vsel %vm2629, %v2626, %v1851
      %v2692 = vsel %vm2629, %v2627, %v1853
      %v2693 = vsel %vm2629, %v2628, %v1855
      %vm2694 = vcmask 228352
      %v2695 = vsel %vm2694, %v2630, %v1921
      %v2696 = vsel %vm2694, %v2631, %v1923
      %v2697 = vsel %vm2694, %v2632, %v1925
      %v2698 = vsel %vm2694, %v2633, %v1927
      %v2699 = vsel %vm2694, %v2634, %v1929
      %v2700 = vsel %vm2694, %v2635, %v1931
      %v2701 = vsel %vm2694, %v2636, %v1933
      %v2702 = vsel %vm2694, %v2637, %v1935
      %v2703 = vsel %vm2694, %v2638, %v1937
      %v2704 = vsel %vm2694, %v2639, %v1939
      %v2705 = vsel %vm2694, %v2640, %v1941
      %v2706 = vsel %vm2694, %v2641, %v1943
      %v2707 = vsel %vm2694, %v2642, %v1945
      %v2708 = vsel %vm2694, %v2643, %v1947
      %v2709 = vsel %vm2694, %v2644, %v1949
      %v2710 = vsel %vm2694, %v2645, %v1951
      %v2711 = vsel %vm2694, %v2646, %v1953
      %v2712 = vsel %vm2694, %v2647, %v1955
      %v2713 = vsel %vm2694, %v2648, %v1957
      %v2714 = vsel %vm2694, %v2649, %v1959
      %v2715 = vsel %vm2694, %v2650, %v1961
      %v2716 = vsel %vm2694, %v2651, %v1963
      %v2717 = vsel %vm2694, %v2652, %v1965
      %v2718 = vsel %vm2694, %v2653, %v1967
      %v2719 = vsel %vm2694, %v2654, %v1969
      %v2720 = vsel %vm2694, %v2655, %v1971
      %v2721 = vsel %vm2694, %v2656, %v1973
      %v2722 = vsel %vm2694, %v2657, %v1975
      %v2723 = vsel %vm2694, %v2658, %v1977
      %v2724 = vsel %vm2694, %v2659, %v1979
      %v2725 = vsel %vm2694, %v2660, %v1981
      %v2726 = vsel %vm2694, %v2661, %v1983
      %v2727 = vsel %vm2694, %v2662, %v1985
      %v2728 = vsel %vm2694, %v2663, %v1987
      %v2729 = vsel %vm2694, %v2664, %v1989
      %v2730 = vsel %vm2694, %v2665, %v1991
      %v2731 = vsel %vm2694, %v2666, %v1993
      %v2732 = vsel %vm2694, %v2667, %v1995
      %v2733 = vsel %vm2694, %v2668, %v1997
      %v2734 = vsel %vm2694, %v2669, %v1999
      %v2735 = vsel %vm2694, %v2670, %v2001
      %v2736 = vsel %vm2694, %v2671, %v2003
      %v2737 = vsel %vm2694, %v2672, %v2005
      %v2738 = vsel %vm2694, %v2673, %v2007
      %v2739 = vsel %vm2694, %v2674, %v2009
      %v2740 = vsel %vm2694, %v2675, %v2011
      %v2741 = vsel %vm2694, %v2676, %v2013
      %v2742 = vsel %vm2694, %v2677, %v2015
      %v2743 = vsel %vm2694, %v2678, %v2017
      %v2744 = vsel %vm2694, %v2679, %v2019
      %v2745 = vsel %vm2694, %v2680, %v2021
      %v2746 = vsel %vm2694, %v2681, %v2023
      %v2747 = vsel %vm2694, %v2682, %v2025
      %v2748 = vsel %vm2694, %v2683, %v2027
      %v2749 = vsel %vm2694, %v2684, %v2029
      %v2750 = vsel %vm2694, %v2685, %v2031
      %v2751 = vsel %vm2694, %v2686, %v2033
      %v2752 = vsel %vm2694, %v2687, %v2035
      %v2753 = vsel %vm2694, %v2688, %v2037
      %v2754 = vsel %vm2694, %v2689, %v2039
      %v2755 = vsel %vm2694, %v2690, %v2041
      %v2756 = vsel %vm2694, %v2691, %v2043
      %v2757 = vsel %vm2694, %v2692, %v2045
      %v2758 = vsel %vm2694, %v2693, %v2047
      %vm2759 = vcmask 261120
      %v2760 = vsel %vm2759, %v2695, %v2113
      %v2761 = vsel %vm2759, %v2696, %v2115
      %v2762 = vsel %vm2759, %v2697, %v2117
      %v2763 = vsel %vm2759, %v2698, %v2119
      %v2764 = vsel %vm2759, %v2699, %v2121
      %v2765 = vsel %vm2759, %v2700, %v2123
      %v2766 = vsel %vm2759, %v2701, %v2125
      %v2767 = vsel %vm2759, %v2702, %v2127
      %v2768 = vsel %vm2759, %v2703, %v2129
      %v2769 = vsel %vm2759, %v2704, %v2131
      %v2770 = vsel %vm2759, %v2705, %v2133
      %v2771 = vsel %vm2759, %v2706, %v2135
      %v2772 = vsel %vm2759, %v2707, %v2137
      %v2773 = vsel %vm2759, %v2708, %v2139
      %v2774 = vsel %vm2759, %v2709, %v2141
      %v2775 = vsel %vm2759, %v2710, %v2143
      %v2776 = vsel %vm2759, %v2711, %v2145
      %v2777 = vsel %vm2759, %v2712, %v2147
      %v2778 = vsel %vm2759, %v2713, %v2149
      %v2779 = vsel %vm2759, %v2714, %v2151
      %v2780 = vsel %vm2759, %v2715, %v2153
      %v2781 = vsel %vm2759, %v2716, %v2155
      %v2782 = vsel %vm2759, %v2717, %v2157
      %v2783 = vsel %vm2759, %v2718, %v2159
      %v2784 = vsel %vm2759, %v2719, %v2161
      %v2785 = vsel %vm2759, %v2720, %v2163
      %v2786 = vsel %vm2759, %v2721, %v2165
      %v2787 = vsel %vm2759, %v2722, %v2167
      %v2788 = vsel %vm2759, %v2723, %v2169
      %v2789 = vsel %vm2759, %v2724, %v2171
      %v2790 = vsel %vm2759, %v2725, %v2173
      %v2791 = vsel %vm2759, %v2726, %v2175
      %v2792 = vsel %vm2759, %v2727, %v2177
      %v2793 = vsel %vm2759, %v2728, %v2179
      %v2794 = vsel %vm2759, %v2729, %v2181
      %v2795 = vsel %vm2759, %v2730, %v2183
      %v2796 = vsel %vm2759, %v2731, %v2185
      %v2797 = vsel %vm2759, %v2732, %v2187
      %v2798 = vsel %vm2759, %v2733, %v2189
      %v2799 = vsel %vm2759, %v2734, %v2191
      %v2800 = vsel %vm2759, %v2735, %v2193
      %v2801 = vsel %vm2759, %v2736, %v2195
      %v2802 = vsel %vm2759, %v2737, %v2197
      %v2803 = vsel %vm2759, %v2738, %v2199
      %v2804 = vsel %vm2759, %v2739, %v2201
      %v2805 = vsel %vm2759, %v2740, %v2203
      %v2806 = vsel %vm2759, %v2741, %v2205
      %v2807 = vsel %vm2759, %v2742, %v2207
      %v2808 = vsel %vm2759, %v2743, %v2209
      %v2809 = vsel %vm2759, %v2744, %v2211
      %v2810 = vsel %vm2759, %v2745, %v2213
      %v2811 = vsel %vm2759, %v2746, %v2215
      %v2812 = vsel %vm2759, %v2747, %v2217
      %v2813 = vsel %vm2759, %v2748, %v2219
      %v2814 = vsel %vm2759, %v2749, %v2221
      %v2815 = vsel %vm2759, %v2750, %v2223
      %v2816 = vsel %vm2759, %v2751, %v2225
      %v2817 = vsel %vm2759, %v2752, %v2227
      %v2818 = vsel %vm2759, %v2753, %v2229
      %v2819 = vsel %vm2759, %v2754, %v2231
      %v2820 = vsel %vm2759, %v2755, %v2233
      %v2821 = vsel %vm2759, %v2756, %v2235
      %v2822 = vsel %vm2759, %v2757, %v2237
      %v2823 = vsel %vm2759, %v2758, %v2239
      %v2824 = vpack.c.bf16 %v2761, %v2760
      %v2825 = vpack.c.bf16 %v2763, %v2762
      %v2826 = vpack.c.bf16 %v2765, %v2764
      %v2827 = vpack.c.bf16 %v2767, %v2766
      %v2828 = vpack.c.bf16 %v2769, %v2768
      %v2829 = vpack.c.bf16 %v2771, %v2770
      %v2830 = vpack.c.bf16 %v2773, %v2772
      %v2831 = vpack.c.bf16 %v2775, %v2774
      %v2832 = vpack.c.bf16 %v2777, %v2776
      %v2833 = vpack.c.bf16 %v2779, %v2778
      %v2834 = vpack.c.bf16 %v2781, %v2780
      %v2835 = vpack.c.bf16 %v2783, %v2782
      %v2836 = vpack.c.bf16 %v2785, %v2784
      %v2837 = vpack.c.bf16 %v2787, %v2786
      %v2838 = vpack.c.bf16 %v2789, %v2788
      %v2839 = vpack.c.bf16 %v2791, %v2790
      %v2840 = vpack.c.bf16 %v2793, %v2792
      %v2841 = vpack.c.bf16 %v2795, %v2794
      %v2842 = vpack.c.bf16 %v2797, %v2796
      %v2843 = vpack.c.bf16 %v2799, %v2798
      %v2844 = vpack.c.bf16 %v2801, %v2800
      %v2845 = vpack.c.bf16 %v2803, %v2802
      %v2846 = vpack.c.bf16 %v2805, %v2804
      %v2847 = vpack.c.bf16 %v2807, %v2806
      %v2848 = vpack.c.bf16 %v2809, %v2808
      %v2849 = vpack.c.bf16 %v2811, %v2810
      %v2850 = vpack.c.bf16 %v2813, %v2812
      %v2851 = vpack.c.bf16 %v2815, %v2814
      %v2852 = vpack.c.bf16 %v2817, %v2816
      %v2853 = vpack.c.bf16 %v2819, %v2818
      %v2854 = vpack.c.bf16 %v2821, %v2820
      %v2855 = vpack.c.bf16 %v2823, %v2822
      %v2856 = vld [vmem:[%s1] sm:$0xf]
      %v2857 = vld [vmem:[%s1 + $0x4] sm:$0xf]
      %v2858 = vld [vmem:[%s1 + $0x8] sm:$0xf]
      %v2859 = vld [vmem:[%s1 + $0xc] sm:$0xf]
      %v2860 = vld [vmem:[%s1 + $0x10] sm:$0x3]
      %v2866 = vunpack.c.l.b16 %v2856
      %v2867 = vunpack.c.l.b16 %v2857
      %v2868 = vunpack.c.l.b16 %v2858
      %v2869 = vunpack.c.l.b16 %v2859
      %v2870 = vunpack.c.l.b16 %v2860
      %v2871 = vpack.c.b16 %v2867, %v2866
      %v2872 = vpack.c.b16 %v2869, %v2868
      %v2873 = vpack.c.b16 %v2870, %v2870
      %vm2876 = vcmask 293888
      %v2878 = vsel %vm2876, %v2824, 0
      %v2881 = vsel %vm2876, %v2825, 0
      %v2884 = vsel %vm2876, %v2826, 0
      %v2887 = vsel %vm2876, %v2827, 0
      %v2890 = vsel %vm2876, %v2828, 0
      %v2893 = vsel %vm2876, %v2829, 0
      %v2896 = vsel %vm2876, %v2830, 0
      %v2899 = vsel %vm2876, %v2831, 0
      %v2902 = vsel %vm2876, %v2832, 0
      %v2905 = vsel %vm2876, %v2833, 0
      %v2908 = vsel %vm2876, %v2834, 0
      %v2911 = vsel %vm2876, %v2835, 0
      %v2914 = vsel %vm2876, %v2836, 0
      %v2917 = vsel %vm2876, %v2837, 0
      %v2920 = vsel %vm2876, %v2838, 0
      %v2923 = vsel %vm2876, %v2839, 0
      %v2926 = vsel %vm2876, %v2840, 0
      %v2929 = vsel %vm2876, %v2841, 0
      %v2932 = vsel %vm2876, %v2842, 0
      %v2935 = vsel %vm2876, %v2843, 0
      %v2938 = vsel %vm2876, %v2844, 0
      %v2941 = vsel %vm2876, %v2845, 0
      %v2944 = vsel %vm2876, %v2846, 0
      %v2947 = vsel %vm2876, %v2847, 0
      %v2950 = vsel %vm2876, %v2848, 0
      %v2953 = vsel %vm2876, %v2849, 0
      %v2956 = vsel %vm2876, %v2850, 0
      %v2959 = vsel %vm2876, %v2851, 0
      %v2962 = vsel %vm2876, %v2852, 0
      %v2965 = vsel %vm2876, %v2853, 0
      %v2968 = vsel %vm2876, %v2854, 0
      %v2971 = vsel %vm2876, %v2855, 0
      %vm2973 = vcmask 1041408
      %v2975 = vsel %vm2973, %v2873, 0
      %2977 = vmatprep.subr.bf16.mxu0 0
      %2978 = vmatpush1.bf16.msra.mxu0 %v2871
      %2979 = vmatprep.subr.bf16.mxu0 0
      %2980 = vmatpush1.bf16.msra.mxu0 %v2872
      %2981 = vmatprep.subr.bf16.mxu0 0
      %2982 = vmatpush1.bf16.msra.mxu0 %v2975
      %2983 = vmatprep.subr.bf16.mxu0 0
      %2984 = vmatpush1.bf16.msra.mxu0 0
      %2985 = vmatprep.subr.bf16.mxu0 0
      %2986 = vmatpush1.bf16.msra.mxu0 0
      %2987 = vmatprep.subr.bf16.mxu0 0
      %2988 = vmatpush1.bf16.msra.mxu0 0
      %2989 = vmatprep.subr.bf16.mxu0 0
      %2990 = vmatpush1.bf16.msra.mxu0 0
      %2991 = vmatprep.subr.bf16.mxu0 0
      %2992 = vmatpush1.bf16.msra.mxu0 0
      %2993 = vmatprep.subr.bf16.mxu0 0
      %2994 = vmatpush1.bf16.msra.mxu0 0
      %2995 = vmatprep.subr.bf16.mxu0 0
      %2996 = vmatpush1.bf16.msra.mxu0 0
      %2997 = vmatprep.subr.bf16.mxu0 0
      %2998 = vmatpush1.bf16.msra.mxu0 0
      %2999 = vmatprep.subr.bf16.mxu0 0
      %3000 = vmatpush1.bf16.msra.mxu0 0
      %3001 = vmatprep.subr.bf16.mxu0 0
      %3002 = vmatpush1.bf16.msra.mxu0 0
      %3003 = vmatprep.subr.bf16.mxu0 0
      %3004 = vmatpush1.bf16.msra.mxu0 0
      %3005 = vmatprep.subr.bf16.mxu0 0
      %3006 = vmatpush1.bf16.msra.mxu0 0
      %3007 = vmatprep.subr.bf16.mxu0 0
      %3008 = vmatpush1.bf16.msra.mxu0 0
      %3009 = vmatprep.mubr.bf16.mxu0 0
      %3010 = vmatmul.mubr.bf16.gmra.mrb[0].mxu0 %v2878
      %v3011 = vpop.f32.mrb[0].mxu0
      %v3012 = vadd.f32 0.0, %v3011
      %v3013 = vpop.f32.mrb[0].mxu0
      %v3014 = vpop.f32.mrb[0].mxu0
      %v3015 = vadd.f32 0.0, %v3014
      %v3016 = vpop.f32.mrb[0].mxu0
      %3017 = vmatprep.mubr.bf16.mxu0 0
      %3018 = vmatmul.mubr.bf16.gmra.mrb[0].mxu0 %v2881
      %v3019 = vpop.f32.mrb[0].mxu0
      %v3020 = vadd.f32 0.0, %v3019
      %v3021 = vpop.f32.mrb[0].mxu0
      %v3022 = vpop.f32.mrb[0].mxu0
      %v3023 = vadd.f32 0.0, %v3022
      %v3024 = vpop.f32.mrb[0].mxu0
      %3025 = vmatprep.mubr.bf16.mxu0 0
      %3026 = vmatmul.mubr.bf16.gmra.mrb[0].mxu0 %v2884
      %v3027 = vpop.f32.mrb[0].mxu0
      %v3028 = vadd.f32 0.0, %v3027
      %v3029 = vpop.f32.mrb[0].mxu0
      %v3030 = vpop.f32.mrb[0].mxu0
      %v3031 = vadd.f32 0.0, %v3030
      %v3032 = vpop.f32.mrb[0].mxu0
      %3033 = vmatprep.mubr.bf16.mxu0 0
      %3034 = vmatmul.mubr.bf16.gmra.mrb[0].mxu0 %v2887
      %v3035 = vpop.f32.mrb[0].mxu0
      %v3036 = vadd.f32 0.0, %v3035
      %v3037 = vpop.f32.mrb[0].mxu0
      %v3038 = vpop.f32.mrb[0].mxu0
      %v3039 = vadd.f32 0.0, %v3038
      %v3040 = vpop.f32.mrb[0].mxu0
      %3041 = vmatprep.mubr.bf16.mxu0 0
      %3042 = vmatmul.mubr.bf16.gmra.mrb[0].mxu0 %v2890
      %v3043 = vpop.f32.mrb[0].mxu0
      %v3044 = vadd.f32 0.0, %v3043
      %v3045 = vpop.f32.mrb[0].mxu0
      %v3046 = vpop.f32.mrb[0].mxu0
      %v3047 = vadd.f32 0.0, %v3046
      %v3048 = vpop.f32.mrb[0].mxu0
      %3049 = vmatprep.mubr.bf16.mxu0 0
      %3050 = vmatmul.mubr.bf16.gmra.mrb[0].mxu0 %v2893
      %v3051 = vpop.f32.mrb[0].mxu0
      %v3052 = vadd.f32 0.0, %v3051
      %v3053 = vpop.f32.mrb[0].mxu0
      %v3054 = vpop.f32.mrb[0].mxu0
      %v3055 = vadd.f32 0.0, %v3054
      %v3056 = vpop.f32.mrb[0].mxu0
      %3057 = vmatprep.mubr.bf16.mxu0 0
      %3058 = vmatmul.mubr.bf16.gmra.mrb[0].mxu0 %v2896
      %v3059 = vpop.f32.mrb[0].mxu0
      %v3060 = vadd.f32 0.0, %v3059
      %v3061 = vpop.f32.mrb[0].mxu0
      %v3062 = vpop.f32.mrb[0].mxu0
      %v3063 = vadd.f32 0.0, %v3062
      %v3064 = vpop.f32.mrb[0].mxu0
      %3065 = vmatprep.mubr.bf16.mxu0 0
      %3066 = vmatmul.mubr.bf16.gmra.mrb[0].mxu0 %v2899
      %v3067 = vpop.f32.mrb[0].mxu0
      %v3068 = vadd.f32 0.0, %v3067
      %v3069 = vpop.f32.mrb[0].mxu0
      %v3070 = vpop.f32.mrb[0].mxu0
      %v3071 = vadd.f32 0.0, %v3070
      %v3072 = vpop.f32.mrb[0].mxu0
      %3073 = vmatprep.mubr.bf16.mxu0 0
      %3074 = vmatmul.mubr.bf16.gmra.mrb[0].mxu0 %v2902
      %v3075 = vpop.f32.mrb[0].mxu0
      %v3076 = vadd.f32 0.0, %v3075
      %v3077 = vpop.f32.mrb[0].mxu0
      %v3078 = vpop.f32.mrb[0].mxu0
      %v3079 = vadd.f32 0.0, %v3078
      %v3080 = vpop.f32.mrb[0].mxu0
      %3081 = vmatprep.mubr.bf16.mxu0 0
      %3082 = vmatmul.mubr.bf16.gmra.mrb[0].mxu0 %v2905
      %v3083 = vpop.f32.mrb[0].mxu0
      %v3084 = vadd.f32 0.0, %v3083
      %v3085 = vpop.f32.mrb[0].mxu0
      %v3086 = vpop.f32.mrb[0].mxu0
      %v3087 = vadd.f32 0.0, %v3086
      %v3088 = vpop.f32.mrb[0].mxu0
      %3089 = vmatprep.mubr.bf16.mxu0 0
      %3090 = vmatmul.mubr.bf16.gmra.mrb[0].mxu0 %v2908
      %v3091 = vpop.f32.mrb[0].mxu0
      %v3092 = vadd.f32 0.0, %v3091
      %v3093 = vpop.f32.mrb[0].mxu0
      %v3094 = vpop.f32.mrb[0].mxu0
      %v3095 = vadd.f32 0.0, %v3094
      %v3096 = vpop.f32.mrb[0].mxu0
      %3097 = vmatprep.mubr.bf16.mxu0 0
      %3098 = vmatmul.mubr.bf16.gmra.mrb[0].mxu0 %v2911
      %v3099 = vpop.f32.mrb[0].mxu0
      %v3100 = vadd.f32 0.0, %v3099
      %v3101 = vpop.f32.mrb[0].mxu0
      %v3102 = vpop.f32.mrb[0].mxu0
      %v3103 = vadd.f32 0.0, %v3102
      %v3104 = vpop.f32.mrb[0].mxu0
      %3105 = vmatprep.mubr.bf16.mxu0 0
      %3106 = vmatmul.mubr.bf16.gmra.mrb[0].mxu0 %v2914
      %v3107 = vpop.f32.mrb[0].mxu0
      %v3108 = vadd.f32 0.0, %v3107
      %v3109 = vpop.f32.mrb[0].mxu0
      %v3110 = vpop.f32.mrb[0].mxu0
      %v3111 = vadd.f32 0.0, %v3110
      %v3112 = vpop.f32.mrb[0].mxu0
      %3113 = vmatprep.mubr.bf16.mxu0 0
      %3114 = vmatmul.mubr.bf16.gmra.mrb[0].mxu0 %v2917
      %v3115 = vpop.f32.mrb[0].mxu0
      %v3116 = vadd.f32 0.0, %v3115
      %v3117 = vpop.f32.mrb[0].mxu0
      %v3118 = vpop.f32.mrb[0].mxu0
      %v3119 = vadd.f32 0.0, %v3118
      %v3120 = vpop.f32.mrb[0].mxu0
      %3121 = vmatprep.mubr.bf16.mxu0 0
      %3122 = vmatmul.mubr.bf16.gmra.mrb[0].mxu0 %v2920
      %v3123 = vpop.f32.mrb[0].mxu0
      %v3124 = vadd.f32 0.0, %v3123
      %v3125 = vpop.f32.mrb[0].mxu0
      %v3126 = vpop.f32.mrb[0].mxu0
      %v3127 = vadd.f32 0.0, %v3126
      %v3128 = vpop.f32.mrb[0].mxu0
      %3129 = vmatprep.mubr.bf16.mxu0 0
      %3130 = vmatmul.mubr.bf16.gmra.mrb[0].mxu0 %v2923
      %v3131 = vpop.f32.mrb[0].mxu0
      %v3132 = vadd.f32 0.0, %v3131
      %v3133 = vpop.f32.mrb[0].mxu0
      %v3134 = vpop.f32.mrb[0].mxu0
      %v3135 = vadd.f32 0.0, %v3134
      %v3136 = vpop.f32.mrb[0].mxu0
      %3137 = vmatprep.mubr.bf16.mxu0 0
      %3138 = vmatmul.mubr.bf16.gmra.mrb[0].mxu0 %v2926
      %v3139 = vpop.f32.mrb[0].mxu0
      %v3140 = vadd.f32 0.0, %v3139
      %v3141 = vpop.f32.mrb[0].mxu0
      %v3142 = vpop.f32.mrb[0].mxu0
      %v3143 = vadd.f32 0.0, %v3142
      %v3144 = vpop.f32.mrb[0].mxu0
      %3145 = vmatprep.mubr.bf16.mxu0 0
      %3146 = vmatmul.mubr.bf16.gmra.mrb[0].mxu0 %v2929
      %v3147 = vpop.f32.mrb[0].mxu0
      %v3148 = vadd.f32 0.0, %v3147
      %v3149 = vpop.f32.mrb[0].mxu0
      %v3150 = vpop.f32.mrb[0].mxu0
      %v3151 = vadd.f32 0.0, %v3150
      %v3152 = vpop.f32.mrb[0].mxu0
      %3153 = vmatprep.mubr.bf16.mxu0 0
      %3154 = vmatmul.mubr.bf16.gmra.mrb[0].mxu0 %v2932
      %v3155 = vpop.f32.mrb[0].mxu0
      %v3156 = vadd.f32 0.0, %v3155
      %v3157 = vpop.f32.mrb[0].mxu0
      %v3158 = vpop.f32.mrb[0].mxu0
      %v3159 = vadd.f32 0.0, %v3158
      %v3160 = vpop.f32.mrb[0].mxu0
      %3161 = vmatprep.mubr.bf16.mxu0 0
      %3162 = vmatmul.mubr.bf16.gmra.mrb[0].mxu0 %v2935
      %v3163 = vpop.f32.mrb[0].mxu0
      %v3164 = vadd.f32 0.0, %v3163
      %v3165 = vpop.f32.mrb[0].mxu0
      %v3166 = vpop.f32.mrb[0].mxu0
      %v3167 = vadd.f32 0.0, %v3166
      %v3168 = vpop.f32.mrb[0].mxu0
      %3169 = vmatprep.mubr.bf16.mxu0 0
      %3170 = vmatmul.mubr.bf16.gmra.mrb[0].mxu0 %v2938
      %v3171 = vpop.f32.mrb[0].mxu0
      %v3172 = vadd.f32 0.0, %v3171
      %v3173 = vpop.f32.mrb[0].mxu0
      %v3174 = vpop.f32.mrb[0].mxu0
      %v3175 = vadd.f32 0.0, %v3174
      %v3176 = vpop.f32.mrb[0].mxu0
      %3177 = vmatprep.mubr.bf16.mxu0 0
      %3178 = vmatmul.mubr.bf16.gmra.mrb[0].mxu0 %v2941
      %v3179 = vpop.f32.mrb[0].mxu0
      %v3180 = vadd.f32 0.0, %v3179
      %v3181 = vpop.f32.mrb[0].mxu0
      %v3182 = vpop.f32.mrb[0].mxu0
      %v3183 = vadd.f32 0.0, %v3182
      %v3184 = vpop.f32.mrb[0].mxu0
      %3185 = vmatprep.mubr.bf16.mxu0 0
      %3186 = vmatmul.mubr.bf16.gmra.mrb[0].mxu0 %v2944
      %v3187 = vpop.f32.mrb[0].mxu0
      %v3188 = vadd.f32 0.0, %v3187
      %v3189 = vpop.f32.mrb[0].mxu0
      %v3190 = vpop.f32.mrb[0].mxu0
      %v3191 = vadd.f32 0.0, %v3190
      %v3192 = vpop.f32.mrb[0].mxu0
      %3193 = vmatprep.mubr.bf16.mxu0 0
      %3194 = vmatmul.mubr.bf16.gmra.mrb[0].mxu0 %v2947
      %v3195 = vpop.f32.mrb[0].mxu0
      %v3196 = vadd.f32 0.0, %v3195
      %v3197 = vpop.f32.mrb[0].mxu0
      %v3198 = vpop.f32.mrb[0].mxu0
      %v3199 = vadd.f32 0.0, %v3198
      %v3200 = vpop.f32.mrb[0].mxu0
      %3201 = vmatprep.mubr.bf16.mxu0 0
      %3202 = vmatmul.mubr.bf16.gmra.mrb[0].mxu0 %v2950
      %v3203 = vpop.f32.mrb[0].mxu0
      %v3204 = vadd.f32 0.0, %v3203
      %v3205 = vpop.f32.mrb[0].mxu0
      %v3206 = vpop.f32.mrb[0].mxu0
      %v3207 = vadd.f32 0.0, %v3206
      %v3208 = vpop.f32.mrb[0].mxu0
      %3209 = vmatprep.mubr.bf16.mxu0 0
      %3210 = vmatmul.mubr.bf16.gmra.mrb[0].mxu0 %v2953
      %v3211 = vpop.f32.mrb[0].mxu0
      %v3212 = vadd.f32 0.0, %v3211
      %v3213 = vpop.f32.mrb[0].mxu0
      %v3214 = vpop.f32.mrb[0].mxu0
      %v3215 = vadd.f32 0.0, %v3214
      %v3216 = vpop.f32.mrb[0].mxu0
      %3217 = vmatprep.mubr.bf16.mxu0 0
      %3218 = vmatmul.mubr.bf16.gmra.mrb[0].mxu0 %v2956
      %v3219 = vpop.f32.mrb[0].mxu0
      %v3220 = vadd.f32 0.0, %v3219
      %v3221 = vpop.f32.mrb[0].mxu0
      %v3222 = vpop.f32.mrb[0].mxu0
      %v3223 = vadd.f32 0.0, %v3222
      %v3224 = vpop.f32.mrb[0].mxu0
      %3225 = vmatprep.mubr.bf16.mxu0 0
      %3226 = vmatmul.mubr.bf16.gmra.mrb[0].mxu0 %v2959
      %v3227 = vpop.f32.mrb[0].mxu0
      %v3228 = vadd.f32 0.0, %v3227
      %v3229 = vpop.f32.mrb[0].mxu0
      %v3230 = vpop.f32.mrb[0].mxu0
      %v3231 = vadd.f32 0.0, %v3230
      %v3232 = vpop.f32.mrb[0].mxu0
      %3233 = vmatprep.mubr.bf16.mxu0 0
      %3234 = vmatmul.mubr.bf16.gmra.mrb[0].mxu0 %v2962
      %v3235 = vpop.f32.mrb[0].mxu0
      %v3236 = vadd.f32 0.0, %v3235
      %v3237 = vpop.f32.mrb[0].mxu0
      %v3238 = vpop.f32.mrb[0].mxu0
      %v3239 = vadd.f32 0.0, %v3238
      %v3240 = vpop.f32.mrb[0].mxu0
      %3241 = vmatprep.mubr.bf16.mxu0 0
      %3242 = vmatmul.mubr.bf16.gmra.mrb[0].mxu0 %v2965
      %v3243 = vpop.f32.mrb[0].mxu0
      %v3244 = vadd.f32 0.0, %v3243
      %v3245 = vpop.f32.mrb[0].mxu0
      %v3246 = vpop.f32.mrb[0].mxu0
      %v3247 = vadd.f32 0.0, %v3246
      %v3248 = vpop.f32.mrb[0].mxu0
      %3249 = vmatprep.mubr.bf16.mxu0 0
      %3250 = vmatmul.mubr.bf16.gmra.mrb[0].mxu0 %v2968
      %v3251 = vpop.f32.mrb[0].mxu0
      %v3252 = vadd.f32 0.0, %v3251
      %v3253 = vpop.f32.mrb[0].mxu0
      %v3254 = vpop.f32.mrb[0].mxu0
      %v3255 = vadd.f32 0.0, %v3254
      %v3256 = vpop.f32.mrb[0].mxu0
      %3257 = vmatprep.mubr.bf16.mxu0 0
      %3258 = vmatmul.mubr.bf16.gmra.mrb[0].mxu0 %v2971
      %v3259 = vpop.f32.mrb[0].mxu0
      %v3260 = vadd.f32 0.0, %v3259
      %v3261 = vpop.f32.mrb[0].mxu0
      %v3262 = vpop.f32.mrb[0].mxu0
      %v3263 = vadd.f32 0.0, %v3262
      %v3264 = vpop.f32.mrb[0].mxu0
      %3265 = vdwg.mxu0
      %3266 = vst [vmem:[%s242] sm:$0xff] %v3012
      %3267 = vst [vmem:[%s242 + $0x8] sm:$0xff] %v3015
      %3268 = vst [vmem:[%s242 + $0x10] sm:$0xff] %v3020
      %3269 = vst [vmem:[%s242 + $0x18] sm:$0xff] %v3023
      %3270 = vst [vmem:[%s242 + $0x20] sm:$0xff] %v3028
      %3271 = vst [vmem:[%s242 + $0x28] sm:$0xff] %v3031
      %3272 = vst [vmem:[%s242 + $0x30] sm:$0xff] %v3036
      %3273 = vst [vmem:[%s242 + $0x38] sm:$0xff] %v3039
      %3274 = vst [vmem:[%s242 + $0x40] sm:$0xff] %v3044
      %3275 = vst [vmem:[%s242 + $0x48] sm:$0xff] %v3047
      %3276 = vst [vmem:[%s242 + $0x50] sm:$0xff] %v3052
      %3277 = vst [vmem:[%s242 + $0x58] sm:$0xff] %v3055
      %3278 = vst [vmem:[%s242 + $0x60] sm:$0xff] %v3060
      %3279 = vst [vmem:[%s242 + $0x68] sm:$0xff] %v3063
      %3280 = vst [vmem:[%s242 + $0x70] sm:$0xff] %v3068
      %3281 = vst [vmem:[%s242 + $0x78] sm:$0xff] %v3071
      %3282 = vst [vmem:[%s242 + $0x80] sm:$0xff] %v3076
      %3283 = vst [vmem:[%s242 + $0x88] sm:$0xff] %v3079
      %3284 = vst [vmem:[%s242 + $0x90] sm:$0xff] %v3084
      %3285 = vst [vmem:[%s242 + $0x98] sm:$0xff] %v3087
      %3286 = vst [vmem:[%s242 + $0xa0] sm:$0xff] %v3092
      %3287 = vst [vmem:[%s242 + $0xa8] sm:$0xff] %v3095
      %3288 = vst [vmem:[%s242 + $0xb0] sm:$0xff] %v3100
      %3289 = vst [vmem:[%s242 + $0xb8] sm:$0xff] %v3103
      %3290 = vst [vmem:[%s242 + $0xc0] sm:$0xff] %v3108
      %3291 = vst [vmem:[%s242 + $0xc8] sm:$0xff] %v3111
      %3292 = vst [vmem:[%s242 + $0xd0] sm:$0xff] %v3116
      %3293 = vst [vmem:[%s242 + $0xd8] sm:$0xff] %v3119
      %3294 = vst [vmem:[%s242 + $0xe0] sm:$0xff] %v3124
      %3295 = vst [vmem:[%s242 + $0xe8] sm:$0xff] %v3127
      %3296 = vst [vmem:[%s242 + $0xf0] sm:$0xff] %v3132
      %3297 = vst [vmem:[%s242 + $0xf8] sm:$0xff] %v3135
      %3298 = vst [vmem:[%s242 + $0x100] sm:$0xff] %v3140
      %3299 = vst [vmem:[%s242 + $0x108] sm:$0xff] %v3143
      %3300 = vst [vmem:[%s242 + $0x110] sm:$0xff] %v3148
      %3301 = vst [vmem:[%s242 + $0x118] sm:$0xff] %v3151
      %3302 = vst [vmem:[%s242 + $0x120] sm:$0xff] %v3156
      %3303 = vst [vmem:[%s242 + $0x128] sm:$0xff] %v3159
      %3304 = vst [vmem:[%s242 + $0x130] sm:$0xff] %v3164
      %3305 = vst [vmem:[%s242 + $0x138] sm:$0xff] %v3167
      %3306 = vst [vmem:[%s242 + $0x140] sm:$0xff] %v3172
      %3307 = vst [vmem:[%s242 + $0x148] sm:$0xff] %v3175
      %3308 = vst [vmem:[%s242 + $0x150] sm:$0xff] %v3180
      %3309 = vst [vmem:[%s242 + $0x158] sm:$0xff] %v3183
      %3310 = vst [vmem:[%s242 + $0x160] sm:$0xff] %v3188
      %3311 = vst [vmem:[%s242 + $0x168] sm:$0xff] %v3191
      %3312 = vst [vmem:[%s242 + $0x170] sm:$0xff] %v3196
      %3313 = vst [vmem:[%s242 + $0x178] sm:$0xff] %v3199
      %3314 = vst [vmem:[%s242 + $0x180] sm:$0xff] %v3204
      %3315 = vst [vmem:[%s242 + $0x188] sm:$0xff] %v3207
      %3316 = vst [vmem:[%s242 + $0x190] sm:$0xff] %v3212
      %3317 = vst [vmem:[%s242 + $0x198] sm:$0xff] %v3215
      %3318 = vst [vmem:[%s242 + $0x1a0] sm:$0xff] %v3220
      %3319 = vst [vmem:[%s242 + $0x1a8] sm:$0xff] %v3223
      %3320 = vst [vmem:[%s242 + $0x1b0] sm:$0xff] %v3228
      %3321 = vst [vmem:[%s242 + $0x1b8] sm:$0xff] %v3231
      %3322 = vst [vmem:[%s242 + $0x1c0] sm:$0xff] %v3236
      %3323 = vst [vmem:[%s242 + $0x1c8] sm:$0xff] %v3239
      %3324 = vst [vmem:[%s242 + $0x1d0] sm:$0xff] %v3244
      %3325 = vst [vmem:[%s242 + $0x1d8] sm:$0xff] %v3247
      %3326 = vst [vmem:[%s242 + $0x1e0] sm:$0xff] %v3252
      %3327 = vst [vmem:[%s242 + $0x1e8] sm:$0xff] %v3255
      %3328 = vst [vmem:[%s242 + $0x1f0] sm:$0xff] %v3260
      %3329 = vst [vmem:[%s242 + $0x1f8] sm:$0xff] %v3263
      %v3330 = vadd.f32 %v3012, %v3015
      %v3331 = vadd.f32 %v3330, %v3020
      %v3332 = vadd.f32 %v3331, %v3023
      %v3333 = vadd.f32 %v3332, %v3028
      %v3334 = vadd.f32 %v3333, %v3031
      %v3335 = vadd.f32 %v3334, %v3036
      %v3336 = vadd.f32 %v3335, %v3039
      %v3337 = vadd.f32 %v3336, %v3044
      %v3338 = vadd.f32 %v3337, %v3047
      %v3339 = vadd.f32 %v3338, %v3052
      %v3340 = vadd.f32 %v3339, %v3055
      %v3341 = vadd.f32 %v3340, %v3060
      %v3342 = vadd.f32 %v3341, %v3063
      %v3343 = vadd.f32 %v3342, %v3068
      %v3344 = vadd.f32 %v3343, %v3071
      %v3345 = vadd.f32 %v3344, %v3076
      %v3346 = vadd.f32 %v3345, %v3079
      %v3347 = vadd.f32 %v3346, %v3084
      %v3348 = vadd.f32 %v3347, %v3087
      %v3349 = vadd.f32 %v3348, %v3092
      %v3350 = vadd.f32 %v3349, %v3095
      %v3351 = vadd.f32 %v3350, %v3100
      %v3352 = vadd.f32 %v3351, %v3103
      %v3353 = vadd.f32 %v3352, %v3108
      %v3354 = vadd.f32 %v3353, %v3111
      %v3355 = vadd.f32 %v3354, %v3116
      %v3356 = vadd.f32 %v3355, %v3119
      %v3357 = vadd.f32 %v3356, %v3124
      %v3358 = vadd.f32 %v3357, %v3127
      %v3359 = vadd.f32 %v3358, %v3132
      %v3360 = vadd.f32 %v3359, %v3135
      %v3361 = vadd.f32 %v3360, %v3140
      %v3362 = vadd.f32 %v3361, %v3143
      %v3363 = vadd.f32 %v3362, %v3148
      %v3364 = vadd.f32 %v3363, %v3151
      %v3365 = vadd.f32 %v3364, %v3156
      %v3366 = vadd.f32 %v3365, %v3159
      %v3367 = vadd.f32 %v3366, %v3164
      %v3368 = vadd.f32 %v3367, %v3167
      %v3369 = vadd.f32 %v3368, %v3172
      %v3370 = vadd.f32 %v3369, %v3175
      %v3371 = vadd.f32 %v3370, %v3180
      %v3372 = vadd.f32 %v3371, %v3183
      %v3373 = vadd.f32 %v3372, %v3188
      %v3374 = vadd.f32 %v3373, %v3191
      %v3375 = vadd.f32 %v3374, %v3196
      %v3376 = vadd.f32 %v3375, %v3199
      %v3377 = vadd.f32 %v3376, %v3204
      %v3378 = vadd.f32 %v3377, %v3207
      %v3379 = vadd.f32 %v3378, %v3212
      %v3380 = vadd.f32 %v3379, %v3215
      %v3381 = vadd.f32 %v3380, %v3220
      %v3382 = vadd.f32 %v3381, %v3223
      %v3383 = vadd.f32 %v3382, %v3228
      %v3384 = vadd.f32 %v3383, %v3231
      %v3385 = vadd.f32 %v3384, %v3236
      %v3386 = vadd.f32 %v3385, %v3239
      %v3387 = vadd.f32 %v3386, %v3244
      %v3388 = vadd.f32 %v3387, %v3247
      %v3389 = vadd.f32 %v3388, %v3252
      %v3390 = vadd.f32 %v3389, %v3255
      %v3391 = vadd.f32 %v3390, %v3260
      %v3392 = vadd.f32 %v3391, %v3263
      %v3393 = vrot.slane %v3392, 4
      %v3394 = vadd.f32 %v3392, %v3393
      %v3395 = vrot.slane %v3394, 2
      %v3396 = vadd.f32 %v3394, %v3395
      %v3397 = vrot.slane %v3396, 1
      %v3398 = vadd.f32 %v3396, %v3397
      %3399 = vst [vmem:[%s250] sm:$0x1] %v3398
      %v3400 = vmul.f32 %v3012, %v3012
      %v3401 = vmul.f32 %v3015, %v3015
      %v3402 = vmul.f32 %v3020, %v3020
      %v3403 = vmul.f32 %v3023, %v3023
      %v3404 = vmul.f32 %v3028, %v3028
      %v3405 = vmul.f32 %v3031, %v3031
      %v3406 = vmul.f32 %v3036, %v3036
      %v3407 = vmul.f32 %v3039, %v3039
      %v3408 = vmul.f32 %v3044, %v3044
      %v3409 = vmul.f32 %v3047, %v3047
      %v3410 = vmul.f32 %v3052, %v3052
      %v3411 = vmul.f32 %v3055, %v3055
      %v3412 = vmul.f32 %v3060, %v3060
      %v3413 = vmul.f32 %v3063, %v3063
      %v3414 = vmul.f32 %v3068, %v3068
      %v3415 = vmul.f32 %v3071, %v3071
      %v3416 = vmul.f32 %v3076, %v3076
      %v3417 = vmul.f32 %v3079, %v3079
      %v3418 = vmul.f32 %v3084, %v3084
      %v3419 = vmul.f32 %v3087, %v3087
      %v3420 = vmul.f32 %v3092, %v3092
      %v3421 = vmul.f32 %v3095, %v3095
      %v3422 = vmul.f32 %v3100, %v3100
      %v3423 = vmul.f32 %v3103, %v3103
      %v3424 = vmul.f32 %v3108, %v3108
      %v3425 = vmul.f32 %v3111, %v3111
      %v3426 = vmul.f32 %v3116, %v3116
      %v3427 = vmul.f32 %v3119, %v3119
      %v3428 = vmul.f32 %v3124, %v3124
      %v3429 = vmul.f32 %v3127, %v3127
      %v3430 = vmul.f32 %v3132, %v3132
      %v3431 = vmul.f32 %v3135, %v3135
      %v3432 = vmul.f32 %v3140, %v3140
      %v3433 = vmul.f32 %v3143, %v3143
      %v3434 = vmul.f32 %v3148, %v3148
      %v3435 = vmul.f32 %v3151, %v3151
      %v3436 = vmul.f32 %v3156, %v3156
      %v3437 = vmul.f32 %v3159, %v3159
      %v3438 = vmul.f32 %v3164, %v3164
      %v3439 = vmul.f32 %v3167, %v3167
      %v3440 = vmul.f32 %v3172, %v3172
      %v3441 = vmul.f32 %v3175, %v3175
      %v3442 = vmul.f32 %v3180, %v3180
      %v3443 = vmul.f32 %v3183, %v3183
      %v3444 = vmul.f32 %v3188, %v3188
      %v3445 = vmul.f32 %v3191, %v3191
      %v3446 = vmul.f32 %v3196, %v3196
      %v3447 = vmul.f32 %v3199, %v3199
      %v3448 = vmul.f32 %v3204, %v3204
      %v3449 = vmul.f32 %v3207, %v3207
      %v3450 = vmul.f32 %v3212, %v3212
      %v3451 = vmul.f32 %v3215, %v3215
      %v3452 = vmul.f32 %v3220, %v3220
      %v3453 = vmul.f32 %v3223, %v3223
      %v3454 = vmul.f32 %v3228, %v3228
      %v3455 = vmul.f32 %v3231, %v3231
      %v3456 = vmul.f32 %v3236, %v3236
      %v3457 = vmul.f32 %v3239, %v3239
      %v3458 = vmul.f32 %v3244, %v3244
      %v3459 = vmul.f32 %v3247, %v3247
      %v3460 = vmul.f32 %v3252, %v3252
      %v3461 = vmul.f32 %v3255, %v3255
      %v3462 = vmul.f32 %v3260, %v3260
      %v3463 = vmul.f32 %v3263, %v3263
      %v3464 = vadd.f32 %v3400, %v3401
      %v3465 = vadd.f32 %v3464, %v3402
      %v3466 = vadd.f32 %v3465, %v3403
      %v3467 = vadd.f32 %v3466, %v3404
      %v3468 = vadd.f32 %v3467, %v3405
      %v3469 = vadd.f32 %v3468, %v3406
      %v3470 = vadd.f32 %v3469, %v3407
      %v3471 = vadd.f32 %v3470, %v3408
      %v3472 = vadd.f32 %v3471, %v3409
      %v3473 = vadd.f32 %v3472, %v3410
      %v3474 = vadd.f32 %v3473, %v3411
      %v3475 = vadd.f32 %v3474, %v3412
      %v3476 = vadd.f32 %v3475, %v3413
      %v3477 = vadd.f32 %v3476, %v3414
      %v3478 = vadd.f32 %v3477, %v3415
      %v3479 = vadd.f32 %v3478, %v3416
      %v3480 = vadd.f32 %v3479, %v3417
      %v3481 = vadd.f32 %v3480, %v3418
      %v3482 = vadd.f32 %v3481, %v3419
      %v3483 = vadd.f32 %v3482, %v3420
      %v3484 = vadd.f32 %v3483, %v3421
      %v3485 = vadd.f32 %v3484, %v3422
      %v3486 = vadd.f32 %v3485, %v3423
      %v3487 = vadd.f32 %v3486, %v3424
      %v3488 = vadd.f32 %v3487, %v3425
      %v3489 = vadd.f32 %v3488, %v3426
      %v3490 = vadd.f32 %v3489, %v3427
      %v3491 = vadd.f32 %v3490, %v3428
      %v3492 = vadd.f32 %v3491, %v3429
      %v3493 = vadd.f32 %v3492, %v3430
      %v3494 = vadd.f32 %v3493, %v3431
      %v3495 = vadd.f32 %v3494, %v3432
      %v3496 = vadd.f32 %v3495, %v3433
      %v3497 = vadd.f32 %v3496, %v3434
      %v3498 = vadd.f32 %v3497, %v3435
      %v3499 = vadd.f32 %v3498, %v3436
      %v3500 = vadd.f32 %v3499, %v3437
      %v3501 = vadd.f32 %v3500, %v3438
      %v3502 = vadd.f32 %v3501, %v3439
      %v3503 = vadd.f32 %v3502, %v3440
      %v3504 = vadd.f32 %v3503, %v3441
      %v3505 = vadd.f32 %v3504, %v3442
      %v3506 = vadd.f32 %v3505, %v3443
      %v3507 = vadd.f32 %v3506, %v3444
      %v3508 = vadd.f32 %v3507, %v3445
      %v3509 = vadd.f32 %v3508, %v3446
      %v3510 = vadd.f32 %v3509, %v3447
      %v3511 = vadd.f32 %v3510, %v3448
      %v3512 = vadd.f32 %v3511, %v3449
      %v3513 = vadd.f32 %v3512, %v3450
      %v3514 = vadd.f32 %v3513, %v3451
      %v3515 = vadd.f32 %v3514, %v3452
      %v3516 = vadd.f32 %v3515, %v3453
      %v3517 = vadd.f32 %v3516, %v3454
      %v3518 = vadd.f32 %v3517, %v3455
      %v3519 = vadd.f32 %v3518, %v3456
      %v3520 = vadd.f32 %v3519, %v3457
      %v3521 = vadd.f32 %v3520, %v3458
      %v3522 = vadd.f32 %v3521, %v3459
      %v3523 = vadd.f32 %v3522, %v3460
      %v3524 = vadd.f32 %v3523, %v3461
      %v3525 = vadd.f32 %v3524, %v3462
      %v3526 = vadd.f32 %v3525, %v3463
      %v3527 = vrot.slane %v3526, 4
      %v3528 = vadd.f32 %v3526, %v3527
      %v3529 = vrot.slane %v3528, 2
      %v3530 = vadd.f32 %v3528, %v3529
      %v3531 = vrot.slane %v3530, 1
      %v3532 = vadd.f32 %v3530, %v3531
      %3533 = vst [vmem:[%s257] sm:$0x1] %v3532
      %s3534 = smul.u32 64, %s21
      %p3535 = scmp.lt.s32.totalorder %s20, 1
      %s3536 = scalar_select %p3535, %s20, 1
      %p3537 = scmp.lt.s32.totalorder %s3534, 127
      %s3538 = scalar_select %p3537, %s3534, 127
      %s3539 = smul.addr %s3536, 128
      %s3540 = sadd.s32 %s3538, %s3539
      %s3541 = smul.addr %s3540, 8
      %s3542 = scalar_lea.vmem %s2, %s3541
      %p3543 = scmp.lt.s32.totalorder %s20, 1
      %s3544 = scalar_select %p3543, %s20, 1
      %p3545 = scmp.lt.s32.totalorder %s21, 1
      %s3546 = scalar_select %p3545, %s21, 1
      %s3547 = smul.addr %s3544, 2
      %s3548 = sadd.s32 %s3546, %s3547
      %s3549 = scalar_lea.vmem %s3, %s3548
      %p3550 = scmp.lt.s32.totalorder %s20, 1
      %s3551 = scalar_select %p3550, %s20, 1
      %p3552 = scmp.lt.s32.totalorder %s21, 1
      %s3553 = scalar_select %p3552, %s21, 1
      %s3554 = smul.addr %s3551, 2
      %s3555 = sadd.s32 %s3553, %s3554
      %s3556 = scalar_lea.vmem %s4, %s3555
      // Predicated region
      $region29: #{conv_bn_relu.2} parent=27 // pred_check
        %p3557 = pneg %p95
      $region30: #{conv_bn_relu.2} parent=27 // pred_check_branch
        %3559 = sbr.rel (%p3557) target = $region32
      $region31: #{conv_bn_relu.2} parent=27 // pred_region
        %s3560 = smul.u32 64, %s21
      $region32: #{conv_bn_relu.2} parent=27 // pred_fallthru
        _
      // Predicated region
      $region33: #{conv_bn_relu.2} parent=27 // pred_check
        %p3561 = pneg %p123
      $region34: #{conv_bn_relu.2} parent=27 // pred_check_branch
        %3563 = sbr.rel (%p3561) target = $region36
      $region35: #{conv_bn_relu.2} parent=27 // pred_region
        _
      $region36: #{conv_bn_relu.2} parent=27 // pred_fallthru
        _
      // Predicated region
      $region37: #{conv_bn_relu.2} parent=27 // pred_check
        %p3564 = pneg %p151
      $region38: #{conv_bn_relu.2} parent=27 // pred_check_branch
        %3566 = sbr.rel (%p3564) target = $region40
      $region39: #{conv_bn_relu.2} parent=27 // pred_region
        _
      $region40: #{conv_bn_relu.2} parent=27 // pred_fallthru
        _
    $region28: #{conv_bn_relu.2} parent=5 // pred_fallthru
      _
    %p3567 = scmp.le.s32.totalorder 2, %s11
    // Predicated region
    $region41: #{conv_bn_relu.2} parent=5 // pred_check
      %p3568 = pneg %p3567
    $region42: #{conv_bn_relu.2} parent=5 // pred_check_branch
      %3570 = sbr.rel (%p3568) target = $region44
    $region43: #{conv_bn_relu.2} parent=5 // pred_region
      %s3571 = ssub.s32 %s11, 2
      // Predicated region
      $region45: #{conv_bn_relu.2} parent=43 // pred_check
        %p3572 = pneg %p101
      $region46: #{conv_bn_relu.2} parent=43 // pred_check_branch
        %3574 = sbr.rel (%p3572) target = $region48
      $region47: #{conv_bn_relu.2} parent=43 // pred_region
        %s3575 = smul.u32 64, %s23
        %p3576 = scmp.lt.s32.totalorder %s22, 1
        %s3577 = scalar_select %p3576, %s22, 1
        %p3578 = scmp.lt.s32.totalorder %s3575, 127
        %s3579 = scalar_select %p3578, %s3575, 127
        %s3580 = smul.addr %s3577, 128
        %s3581 = sadd.s32 %s3579, %s3580
        %s3582 = smul.addr %s3581, 8
        %s3583 = scalar_lea.vmem %s2, %s3582
      $region48: #{conv_bn_relu.2} parent=43 // pred_fallthru
        _
      // Predicated region
      $region49: #{conv_bn_relu.2} parent=43 // pred_check
        %p3584 = pneg %p129
      $region50: #{conv_bn_relu.2} parent=43 // pred_check_branch
        %3586 = sbr.rel (%p3584) target = $region52
      $region51: #{conv_bn_relu.2} parent=43 // pred_region
        %p3587 = scmp.lt.s32.totalorder %s22, 1
        %s3588 = scalar_select %p3587, %s22, 1
        %p3589 = scmp.lt.s32.totalorder %s23, 1
        %s3590 = scalar_select %p3589, %s23, 1
        %s3591 = smul.addr %s3588, 2
        %s3592 = sadd.s32 %s3590, %s3591
        %s3593 = scalar_lea.vmem %s3, %s3592
      $region52: #{conv_bn_relu.2} parent=43 // pred_fallthru
        _
      // Predicated region
      $region53: #{conv_bn_relu.2} parent=43 // pred_check
        %p3594 = pneg %p157
      $region54: #{conv_bn_relu.2} parent=43 // pred_check_branch
        %3596 = sbr.rel (%p3594) target = $region56
      $region55: #{conv_bn_relu.2} parent=43 // pred_region
        %p3597 = scmp.lt.s32.totalorder %s22, 1
        %s3598 = scalar_select %p3597, %s22, 1
        %p3599 = scmp.lt.s32.totalorder %s23, 1
        %s3600 = scalar_select %p3599, %s23, 1
        %s3601 = smul.addr %s3598, 2
        %s3602 = sadd.s32 %s3600, %s3601
        %s3603 = scalar_lea.vmem %s4, %s3602
      $region56: #{conv_bn_relu.2} parent=43 // pred_fallthru
        _
    $region44: #{conv_bn_relu.2} parent=5 // pred_fallthru
      _
  $region6: #{conv_bn_relu.2} parent=0 // loop_footer
    %s15 = sadd.s32 1, %s11
  $region7: #{conv_bn_relu.2} parent=0 // loop_footer_branch
    %10 = sbr.rel target = $region3
  $region8: #{conv_bn_relu.2} parent=0 // loop_exit
    _

</llo_original>
